<compile_context>
chip_gen: v7x
topology: tpu7x:2x2x1
jax: 0.10.0
libtpu: 0.0.40
codegen_flags: <defaults>
</compile_context>

<pallas_src>
import jax
import jax.numpy as jnp
from jax.experimental import pallas as pl
from jax.experimental.pallas import tpu as pltpu

H1, H2 = 512, 256          # hidden widths from the PyTorch module


def _round_up(n, m):
    return ((n + m - 1) // m) * m


def _cdiv(a, b):
    return (a + b - 1) // b


def _leaky_relu(x, slope=0.1):
    return jnp.where(x > 0, x, slope * x)


def discriminator_kernel(x_ref, w1_ref, b1_ref, w2_ref, b2_ref, w3_ref,
                         b3_ref, o_ref):
    # x_ref: (TB, D) f32 tile; the bf16 cast is fused here (no separate
    # wrapper-side HBM pass over x).
    x = x_ref[...].astype(jnp.bfloat16)

    # Layer 1: bf16 MXU matmul with f32 accumulation; bias + LeakyReLU on VPU.
    h1 = jnp.dot(x, w1_ref[...], preferred_element_type=jnp.float32)
    h1 = _leaky_relu(h1 + b1_ref[...])

    # Layer 2.
    h2 = jnp.dot(h1.astype(jnp.bfloat16), w2_ref[...],
                 preferred_element_type=jnp.float32)
    h2 = _leaky_relu(h2 + b2_ref[...])

    # Layer 3 (out_features = 1): VPU multiply + XLU lane reduction instead
    # of an N=1 MXU matmul.
    h3 = jnp.sum(h2 * w3_ref[...], axis=-1, keepdims=True) + b3_ref[0, 0]

    # Numerically stable sigmoid: exp(-|x|) never overflows (EUP exp);
    # exact divide (one per batch row, negligible) + clamp guarantees <= 1.0.
    z = jnp.exp(-jnp.abs(h3))
    num = jnp.where(h3 >= 0, 1.0, z)
    sig = jnp.minimum(num / (1.0 + z), 1.0)

    # (TB, 1) column store: 4 B/row of HBM write traffic.
    o_ref[...] = sig


def prepare_params(params):
    """One-time parameter prep (hoisted out of the per-call hot path):
    bf16 MXU weights, f32 biases as (1, N) rows, w3 as a (1, 256) row,
    b3 as a (1, 1) SMEM scalar."""
    w1, b1, w2, b2, w3, b3 = params
    return (w1.astype(jnp.bfloat16),
            jnp.asarray(b1, jnp.float32).reshape(1, H1),
            w2.astype(jnp.bfloat16),
            jnp.asarray(b2, jnp.float32).reshape(1, H2),
            jnp.asarray(w3, jnp.float32).reshape(1, H2),
            jnp.asarray(b3, jnp.float32).reshape(1, 1))


def _vmem_limit_bytes(tb, D, weight_buffers):
    # Size the scoped-VMEM limit from the actual buffers instead of a fixed
    # 32 MiB: resident weights (bf16) + biases/w3 (f32), double-buffered f32
    # x tile, output column, plus headroom for h1/h2 intermediates / spills.
    weights = weight_buffers * (D * H1 * 2 + H1 * H2 * 2 +
                                (H1 + H2 + H2 + 1) * 4)
    x_tiles = 2 * tb * D * 4
    out_tiles = 2 * tb * 128 * 4            # (tb, 1) padded to the lane width
    inter = 2 * tb * (H1 + H2) * 4
    need = int(1.5 * (weights + x_tiles + out_tiles + inter)) + (8 << 20)

    cap = 100 << 20                          # large-D headroom on v5e/v6e
    try:
        info = pltpu.get_tpu_info()
        phys = int(getattr(info, "vmem_capacity_bytes", 128 << 20))
        cap = min(cap, int(phys * 0.8))      # v7x: 64 MiB/TC -> ~51 MiB cap
    except Exception:
        pass
    return max(32 << 20, min(need, cap))


def _build_call(tb, b_pad, D, single_buffer_weights):
    const = lambda i: (0, 0)
    if single_buffer_weights:
        # Weights/biases never change block index -> one VMEM buffer suffices
        # (halves resident weight VMEM vs default double buffering).
        wspec = lambda shape: pl.BlockSpec(shape, const,
                                           pipeline_mode=pl.Buffered(1))
        wbuf = 1
    else:
        wspec = lambda shape: pl.BlockSpec(shape, const)
        wbuf = 2

    return pl.pallas_call(
        discriminator_kernel,
        out_shape=jax.ShapeDtypeStruct((b_pad, 1), jnp.float32),
        grid=(b_pad // tb,),
        in_specs=[
            pl.BlockSpec((tb, D), lambda i: (i, 0)),   # x tile streams (f32)
            wspec((D, H1)),                            # W1 (bf16), resident
            wspec((1, H1)),                            # b1 (f32)
            wspec((H1, H2)),                           # W2 (bf16)
            wspec((1, H2)),                            # b2 (f32)
            wspec((1, H2)),                            # w3 row (f32)
            pl.BlockSpec(memory_space=pltpu.SMEM),     # b3 scalar
        ],
        out_specs=pl.BlockSpec((tb, 1), lambda i: (i, 0)),
        compiler_params=pltpu.CompilerParams(
            dimension_semantics=("parallel",),         # 2 TCs on v7x
            vmem_limit_bytes=_vmem_limit_bytes(tb, D, wbuf),
        ),
    )


def discriminator_forward(x_nchw, prepared_params, *, block_b=256):
    """x_nchw: (B, C, H, W) float32. prepared_params: from prepare_params().
    Returns (B, 1) float32 in (0, 1]."""
    w1b, b1, w2b, b2, w3r, b3 = prepared_params
    B = x_nchw.shape[0]
    D = int(x_nchw.size // B)
    x_flat = x_nchw.reshape(B, -1)                 # == torch .view(B, -1)

    # Batch tiling: multiple of 16 (bf16 sublane packing of the in-kernel
    # cast).  For B > 16, force >= 2 grid steps so the "parallel" batch axis
    # can split across both TensorCores on v7x; on single-TC v5e/v6e the
    # extra step costs only ~0.35 us.
    b16 = _round_up(B, 16)
    if b16 <= 16:
        tb = b16
    else:
        tb = min(block_b, _round_up(_cdiv(b16, 2), 16))
    b_pad = _round_up(b16, tb)
    if b_pad != B:
        x_flat = jnp.pad(x_flat, ((0, b_pad - B), (0, 0)))

    args = (x_flat, w1b, b1, w2b, b2, w3r, b3)
    try:
        out = _build_call(tb, b_pad, D, True)(*args)
    except Exception:
        # Fallback for Pallas builds that reject single-buffer pipeline_mode.
        out = _build_call(tb, b_pad, D, False)(*args)

    return out[:B]


def discriminator_reference(x_nchw, params):
    """Pure-JAX reference with the same bf16-weight / f32-accum arithmetic."""
    w1, b1, w2, b2, w3, b3 = params
    B = x_nchw.shape[0]
    x = x_nchw.reshape(B, -1).astype(jnp.bfloat16)
    h1 = jnp.dot(x, w1.astype(jnp.bfloat16),
                 preferred_element_type=jnp.float32) + b1
    h1 = jnp.where(h1 > 0, h1, 0.1 * h1)
    h2 = jnp.dot(h1.astype(jnp.bfloat16), w2.astype(jnp.bfloat16),
                 preferred_element_type=jnp.float32) + b2
    h2 = jnp.where(h2 > 0, h2, 0.1 * h2)
    h3 = jnp.dot(h2, w3.reshape(H2, 1)) + b3.reshape(1, 1)
    return jax.nn.sigmoid(h3)


def init_params(key, in_dim):
    """Mimics torch.nn.Linear default init (uniform +/- 1/sqrt(fan_in)).
    Weights stored as (in, out) so the kernel computes x @ W + b."""
    dims = [(in_dim, H1), (H1, H2), (H2, 1)]
    params = []
    for (din, dout) in dims:
        key, kw, kb = jax.random.split(key, 3)
        bound = 1.0 / jnp.sqrt(din)
        w = jax.random.uniform(kw, (din, dout), jnp.float32, -bound, bound)
        b = jax.random.uniform(kb, (1, dout), jnp.float32, -bound, bound)
        params += [w, b]
    return tuple(params)


if __name__ == "__main__":
    key = jax.random.PRNGKey(0)
    k_x, k_p = jax.random.split(key)

    # img_size = (4, 16, 16) -> flattened input dim D = 1024
    B, C, H, W = 2, 4, 16, 16
    x = jax.random.normal(k_x, (B, C, H, W), jnp.float32)
    params = init_params(k_p, C * H * W)
    prepared = prepare_params(params)     # one-time, outside the hot path

    out = jax.block_until_ready(discriminator_forward(x, prepared))
    ref = jax.block_until_ready(discriminator_reference(x, params))

    assert out.shape == (B, 1)
    assert out.dtype == jnp.float32
    assert bool(jnp.all(jnp.isfinite(out)))
    assert bool(jnp.all((out >= 0.0) & (out <= 1.0)))
    assert bool(jnp.allclose(out, ref, atol=5e-3, rtol=5e-2)), (out, ref)
    print("KERNEL_OK")
</pallas_src>

<mosaic_0001>
module attributes {stable_mosaic.version = 11 : i64} {
  func.func @discriminator_kernel(%arg0: i32, %arg1: memref<16x1024xf32, #tpu.memory_space<vmem>>, %arg2: memref<1024x512xbf16, #tpu.memory_space<vmem>>, %arg3: memref<1x512xf32, #tpu.memory_space<vmem>>, %arg4: memref<512x256xbf16, #tpu.memory_space<vmem>>, %arg5: memref<1x256xf32, #tpu.memory_space<vmem>>, %arg6: memref<1x256xf32, #tpu.memory_space<vmem>>, %arg7: memref<1x1xf32, #tpu.memory_space<smem>>, %arg8: memref<16x1xf32, #tpu.memory_space<vmem>>) attributes {dimension_semantics = [#tpu.dimension_semantics<parallel>], iteration_bounds = array<i64: 1>, scalar_prefetch = 0 : i64, scratch_operands = 0 : i64, tpu.core_type = #tpu.core_type<tc>, window_params = [{transform_indices = @transform_0, window_bounds = array<i64: 16, 1024>}, {pipeline_mode = #tpu.pipeline_mode<synchronous>, transform_indices = @transform_1, window_bounds = array<i64: 1024, 512>}, {pipeline_mode = #tpu.pipeline_mode<synchronous>, transform_indices = @transform_2, window_bounds = array<i64: 1, 512>}, {pipeline_mode = #tpu.pipeline_mode<synchronous>, transform_indices = @transform_3, window_bounds = array<i64: 512, 256>}, {pipeline_mode = #tpu.pipeline_mode<synchronous>, transform_indices = @transform_4, window_bounds = array<i64: 1, 256>}, {pipeline_mode = #tpu.pipeline_mode<synchronous>, transform_indices = @transform_5, window_bounds = array<i64: 1, 256>}, {transform_indices = @transform_6, window_bounds = array<i64: 1, 1>}, {transform_indices = @transform_7, window_bounds = array<i64: 16, 1>}]} {
    %c0 = arith.constant 0 : index
    %c0_0 = arith.constant 0 : index
    %0 = vector.load %arg1[%c0, %c0_0] : memref<16x1024xf32, #tpu.memory_space<vmem>>, vector<16x1024xf32>
    %1 = arith.truncf %0 : vector<16x1024xf32> to vector<16x1024xbf16>
    %c0_1 = arith.constant 0 : index
    %c0_2 = arith.constant 0 : index
    %2 = vector.load %arg2[%c0_1, %c0_2] : memref<1024x512xbf16, #tpu.memory_space<vmem>>, vector<1024x512xbf16>
    %cst = arith.constant dense<0.000000e+00> : vector<16x512xf32>
    %3 = tpu.matmul %1, %2, %cst {dimension_numbers = #tpu.dot_dimension_numbers<[1], [0], [0], [1], [0, 0, 1, 1], [], []>} : vector<16x1024xbf16>, vector<1024x512xbf16>, vector<16x512xf32> -> vector<16x512xf32>
    %c0_3 = arith.constant 0 : index
    %c0_4 = arith.constant 0 : index
    %4 = vector.load %arg3[%c0_3, %c0_4] : memref<1x512xf32, #tpu.memory_space<vmem>>, vector<1x512xf32>
    %5 = vector.broadcast %4 : vector<1x512xf32> to vector<16x512xf32>
    %6 = arith.addf %3, %5 : vector<16x512xf32>
    %cst_5 = arith.constant 0.000000e+00 : f32
    %7 = vector.broadcast %cst_5 : f32 to vector<16x512xf32>
    %8 = arith.cmpf ogt, %6, %7 : vector<16x512xf32>
    %cst_6 = arith.constant 1.000000e-01 : f32
    %9 = vector.broadcast %cst_6 : f32 to vector<16x512xf32>
    %10 = arith.mulf %9, %6 : vector<16x512xf32>
    %11 = arith.select %8, %6, %10 : vector<16x512xi1>, vector<16x512xf32>
    %12 = arith.truncf %11 : vector<16x512xf32> to vector<16x512xbf16>
    %c0_7 = arith.constant 0 : index
    %c0_8 = arith.constant 0 : index
    %13 = vector.load %arg4[%c0_7, %c0_8] : memref<512x256xbf16, #tpu.memory_space<vmem>>, vector<512x256xbf16>
    %cst_9 = arith.constant dense<0.000000e+00> : vector<16x256xf32>
    %14 = tpu.matmul %12, %13, %cst_9 {dimension_numbers = #tpu.dot_dimension_numbers<[1], [0], [0], [1], [0, 0, 1, 1], [], []>} : vector<16x512xbf16>, vector<512x256xbf16>, vector<16x256xf32> -> vector<16x256xf32>
    %c0_10 = arith.constant 0 : index
    %c0_11 = arith.constant 0 : index
    %15 = vector.load %arg5[%c0_10, %c0_11] : memref<1x256xf32, #tpu.memory_space<vmem>>, vector<1x256xf32>
    %16 = vector.broadcast %15 : vector<1x256xf32> to vector<16x256xf32>
    %17 = arith.addf %14, %16 : vector<16x256xf32>
    %cst_12 = arith.constant 0.000000e+00 : f32
    %18 = vector.broadcast %cst_12 : f32 to vector<16x256xf32>
    %19 = arith.cmpf ogt, %17, %18 : vector<16x256xf32>
    %cst_13 = arith.constant 1.000000e-01 : f32
    %20 = vector.broadcast %cst_13 : f32 to vector<16x256xf32>
    %21 = arith.mulf %20, %17 : vector<16x256xf32>
    %22 = arith.select %19, %17, %21 : vector<16x256xi1>, vector<16x256xf32>
    %c0_14 = arith.constant 0 : index
    %c0_15 = arith.constant 0 : index
    %23 = vector.load %arg6[%c0_14, %c0_15] : memref<1x256xf32, #tpu.memory_space<vmem>>, vector<1x256xf32>
    %24 = vector.broadcast %23 : vector<1x256xf32> to vector<16x256xf32>
    %25 = arith.mulf %22, %24 : vector<16x256xf32>
    %cst_16 = arith.constant dense<0.000000e+00> : vector<16xf32>
    %26 = vector.multi_reduction <add>, %25, %cst_16 [1] : vector<16x256xf32> to vector<16xf32>
    %27 = vector.shape_cast %26 : vector<16xf32> to vector<16x1xf32>
    %c0_17 = arith.constant 0 : index
    %c0_18 = arith.constant 0 : index
    %28 = memref.load %arg7[%c0_17, %c0_18] : memref<1x1xf32, #tpu.memory_space<smem>>
    %29 = vector.broadcast %28 : f32 to vector<16x1xf32>
    %30 = arith.addf %27, %29 : vector<16x1xf32>
    %31 = math.absf %30 : vector<16x1xf32>
    %cst_19 = arith.constant 0.000000e+00 : f32
    %32 = vector.broadcast %cst_19 : f32 to vector<16x1xf32>
    %33 = arith.subf %32, %31 : vector<16x1xf32>
    %34 = math.exp %33 : vector<16x1xf32>
    %cst_20 = arith.constant 0.000000e+00 : f32
    %35 = vector.broadcast %cst_20 : f32 to vector<16x1xf32>
    %36 = arith.cmpf oge, %30, %35 : vector<16x1xf32>
    %cst_21 = arith.constant 1.000000e+00 : f32
    %37 = vector.broadcast %cst_21 : f32 to vector<16x1xf32>
    %38 = arith.select %36, %37, %34 : vector<16x1xi1>, vector<16x1xf32>
    %cst_22 = arith.constant 1.000000e+00 : f32
    %39 = vector.broadcast %cst_22 : f32 to vector<16x1xf32>
    %40 = arith.addf %39, %34 : vector<16x1xf32>
    %41 = arith.divf %38, %40 : vector<16x1xf32>
    %cst_23 = arith.constant 1.000000e+00 : f32
    %42 = vector.broadcast %cst_23 : f32 to vector<16x1xf32>
    %43 = arith.minimumf %41, %42 : vector<16x1xf32>
    %c0_24 = arith.constant 0 : index
    %c0_25 = arith.constant 0 : index
    %44 = vector.load %arg8[%c0_24, %c0_25] : memref<16x1xf32, #tpu.memory_space<vmem>>, vector<16x1xf32>
    tpu.vector_store %arg8[%c0_24, %c0_25], %43 {strides = array<i32>} : memref<16x1xf32, #tpu.memory_space<vmem>>, vector<16x1xf32>,
    return
  }
  func.func @transform_0(%arg0: i32) -> (i32, i32) {
    %c0_i32 = arith.constant 0 : i32
    %c0_i32_0 = arith.constant 0 : i32
    return %arg0, %c0_i32 : i32, i32
  }
  func.func @transform_1(%arg0: i32) -> (i32, i32) {
    %c0_i32 = arith.constant 0 : i32
    %c0_i32_0 = arith.constant 0 : i32
    %c0_i32_1 = arith.constant 0 : i32
    return %c0_i32, %c0_i32_0 : i32, i32
  }
  func.func @transform_2(%arg0: i32) -> (i32, i32) {
    %c0_i32 = arith.constant 0 : i32
    %c0_i32_0 = arith.constant 0 : i32
    %c0_i32_1 = arith.constant 0 : i32
    return %c0_i32, %c0_i32_0 : i32, i32
  }
  func.func @transform_3(%arg0: i32) -> (i32, i32) {
    %c0_i32 = arith.constant 0 : i32
    %c0_i32_0 = arith.constant 0 : i32
    %c0_i32_1 = arith.constant 0 : i32
    return %c0_i32, %c0_i32_0 : i32, i32
  }
  func.func @transform_4(%arg0: i32) -> (i32, i32) {
    %c0_i32 = arith.constant 0 : i32
    %c0_i32_0 = arith.constant 0 : i32
    %c0_i32_1 = arith.constant 0 : i32
    return %c0_i32, %c0_i32_0 : i32, i32
  }
  func.func @transform_5(%arg0: i32) -> (i32, i32) {
    %c0_i32 = arith.constant 0 : i32
    %c0_i32_0 = arith.constant 0 : i32
    %c0_i32_1 = arith.constant 0 : i32
    return %c0_i32, %c0_i32_0 : i32, i32
  }
  func.func @transform_6(%arg0: i32) -> (i32, i32) {
    %c0_i32 = arith.constant 0 : i32
    %c0_i32_0 = arith.constant 0 : i32
    %c0_i32_1 = arith.constant 0 : i32
    return %c0_i32, %c0_i32_0 : i32, i32
  }
  func.func @transform_7(%arg0: i32) -> (i32, i32) {
    %c0_i32 = arith.constant 0 : i32
    %c0_i32_0 = arith.constant 0 : i32
    return %arg0, %c0_i32 : i32, i32
  }
}

module attributes {stable_mosaic.version = 11 : i64} {
  func.func @discriminator_kernel(%arg0: i32, %arg1: memref<16x1024xf32, #tpu.memory_space<vmem>>, %arg2: memref<1024x512xbf16, #tpu.memory_space<vmem>>, %arg3: memref<1x512xf32, #tpu.memory_space<vmem>>, %arg4: memref<512x256xbf16, #tpu.memory_space<vmem>>, %arg5: memref<1x256xf32, #tpu.memory_space<vmem>>, %arg6: memref<1x256xf32, #tpu.memory_space<vmem>>, %arg7: memref<1x1xf32, #tpu.memory_space<smem>>, %arg8: memref<16x1xf32, #tpu.memory_space<vmem>>) attributes {dimension_semantics = [#tpu.dimension_semantics<parallel>], iteration_bounds = array<i64: 1>, scalar_prefetch = 0 : i64, scratch_operands = 0 : i64, tpu.core_type = #tpu.core_type<tc>, window_params = [{transform_indices = @transform_0, window_bounds = array<i64: 16, 1024>}, {pipeline_mode = #tpu.pipeline_mode<synchronous>, transform_indices = @transform_1, window_bounds = array<i64: 1024, 512>}, {pipeline_mode = #tpu.pipeline_mode<synchronous>, transform_indices = @transform_2, window_bounds = array<i64: 1, 512>}, {pipeline_mode = #tpu.pipeline_mode<synchronous>, transform_indices = @transform_3, window_bounds = array<i64: 512, 256>}, {pipeline_mode = #tpu.pipeline_mode<synchronous>, transform_indices = @transform_4, window_bounds = array<i64: 1, 256>}, {pipeline_mode = #tpu.pipeline_mode<synchronous>, transform_indices = @transform_5, window_bounds = array<i64: 1, 256>}, {transform_indices = @transform_6, window_bounds = array<i64: 1, 1>}, {transform_indices = @transform_7, window_bounds = array<i64: 16, 1>}]} {
    %c0 = arith.constant 0 : index
    %c0_0 = arith.constant 0 : index
    %0 = vector.load %arg1[%c0, %c0_0] : memref<16x1024xf32, #tpu.memory_space<vmem>>, vector<16x1024xf32>
    %1 = arith.truncf %0 : vector<16x1024xf32> to vector<16x1024xbf16>
    %c0_1 = arith.constant 0 : index
    %c0_2 = arith.constant 0 : index
    %2 = vector.load %arg2[%c0_1, %c0_2] : memref<1024x512xbf16, #tpu.memory_space<vmem>>, vector<1024x512xbf16>
    %cst = arith.constant dense<0.000000e+00> : vector<16x512xf32>
    %3 = tpu.matmul %1, %2, %cst {dimension_numbers = #tpu.dot_dimension_numbers<[1], [0], [0], [1], [0, 0, 1, 1], [], []>} : vector<16x1024xbf16>, vector<1024x512xbf16>, vector<16x512xf32> -> vector<16x512xf32>
    %c0_3 = arith.constant 0 : index
    %c0_4 = arith.constant 0 : index
    %4 = vector.load %arg3[%c0_3, %c0_4] : memref<1x512xf32, #tpu.memory_space<vmem>>, vector<1x512xf32>
    %5 = vector.broadcast %4 : vector<1x512xf32> to vector<16x512xf32>
    %6 = arith.addf %3, %5 : vector<16x512xf32>
    %cst_5 = arith.constant 0.000000e+00 : f32
    %7 = vector.broadcast %cst_5 : f32 to vector<16x512xf32>
    %8 = arith.cmpf ogt, %6, %7 : vector<16x512xf32>
    %cst_6 = arith.constant 1.000000e-01 : f32
    %9 = vector.broadcast %cst_6 : f32 to vector<16x512xf32>
    %10 = arith.mulf %9, %6 : vector<16x512xf32>
    %11 = arith.select %8, %6, %10 : vector<16x512xi1>, vector<16x512xf32>
    %12 = arith.truncf %11 : vector<16x512xf32> to vector<16x512xbf16>
    %c0_7 = arith.constant 0 : index
    %c0_8 = arith.constant 0 : index
    %13 = vector.load %arg4[%c0_7, %c0_8] : memref<512x256xbf16, #tpu.memory_space<vmem>>, vector<512x256xbf16>
    %cst_9 = arith.constant dense<0.000000e+00> : vector<16x256xf32>
    %14 = tpu.matmul %12, %13, %cst_9 {dimension_numbers = #tpu.dot_dimension_numbers<[1], [0], [0], [1], [0, 0, 1, 1], [], []>} : vector<16x512xbf16>, vector<512x256xbf16>, vector<16x256xf32> -> vector<16x256xf32>
    %c0_10 = arith.constant 0 : index
    %c0_11 = arith.constant 0 : index
    %15 = vector.load %arg5[%c0_10, %c0_11] : memref<1x256xf32, #tpu.memory_space<vmem>>, vector<1x256xf32>
    %16 = vector.broadcast %15 : vector<1x256xf32> to vector<16x256xf32>
    %17 = arith.addf %14, %16 : vector<16x256xf32>
    %cst_12 = arith.constant 0.000000e+00 : f32
    %18 = vector.broadcast %cst_12 : f32 to vector<16x256xf32>
    %19 = arith.cmpf ogt, %17, %18 : vector<16x256xf32>
    %cst_13 = arith.constant 1.000000e-01 : f32
    %20 = vector.broadcast %cst_13 : f32 to vector<16x256xf32>
    %21 = arith.mulf %20, %17 : vector<16x256xf32>
    %22 = arith.select %19, %17, %21 : vector<16x256xi1>, vector<16x256xf32>
    %c0_14 = arith.constant 0 : index
    %c0_15 = arith.constant 0 : index
    %23 = vector.load %arg6[%c0_14, %c0_15] : memref<1x256xf32, #tpu.memory_space<vmem>>, vector<1x256xf32>
    %24 = vector.broadcast %23 : vector<1x256xf32> to vector<16x256xf32>
    %25 = arith.mulf %22, %24 : vector<16x256xf32>
    %cst_16 = arith.constant dense<0.000000e+00> : vector<16xf32>
    %26 = vector.multi_reduction <add>, %25, %cst_16 [1] : vector<16x256xf32> to vector<16xf32>
    %27 = vector.shape_cast %26 : vector<16xf32> to vector<16x1xf32>
    %c0_17 = arith.constant 0 : index
    %c0_18 = arith.constant 0 : index
    %28 = memref.load %arg7[%c0_17, %c0_18] : memref<1x1xf32, #tpu.memory_space<smem>>
    %29 = vector.broadcast %28 : f32 to vector<16x1xf32>
    %30 = arith.addf %27, %29 : vector<16x1xf32>
    %31 = math.absf %30 : vector<16x1xf32>
    %cst_19 = arith.constant 0.000000e+00 : f32
    %32 = vector.broadcast %cst_19 : f32 to vector<16x1xf32>
    %33 = arith.subf %32, %31 : vector<16x1xf32>
    %34 = math.exp %33 : vector<16x1xf32>
    %cst_20 = arith.constant 0.000000e+00 : f32
    %35 = vector.broadcast %cst_20 : f32 to vector<16x1xf32>
    %36 = arith.cmpf oge, %30, %35 : vector<16x1xf32>
    %cst_21 = arith.constant 1.000000e+00 : f32
    %37 = vector.broadcast %cst_21 : f32 to vector<16x1xf32>
    %38 = arith.select %36, %37, %34 : vector<16x1xi1>, vector<16x1xf32>
    %cst_22 = arith.constant 1.000000e+00 : f32
    %39 = vector.broadcast %cst_22 : f32 to vector<16x1xf32>
    %40 = arith.addf %39, %34 : vector<16x1xf32>
    %41 = arith.divf %38, %40 : vector<16x1xf32>
    %cst_23 = arith.constant 1.000000e+00 : f32
    %42 = vector.broadcast %cst_23 : f32 to vector<16x1xf32>
    %43 = arith.minimumf %41, %42 : vector<16x1xf32>
    %c0_24 = arith.constant 0 : index
    %c0_25 = arith.constant 0 : index
    %44 = vector.load %arg8[%c0_24, %c0_25] : memref<16x1xf32, #tpu.memory_space<vmem>>, vector<16x1xf32>
    tpu.vector_store %arg8[%c0_24, %c0_25], %43 {strides = array<i32>} : memref<16x1xf32, #tpu.memory_space<vmem>>, vector<16x1xf32>,
    return
  }
  func.func @transform_0(%arg0: i32) -> (i32, i32) {
    %c0_i32 = arith.constant 0 : i32
    %c0_i32_0 = arith.constant 0 : i32
    return %arg0, %c0_i32 : i32, i32
  }
  func.func @transform_1(%arg0: i32) -> (i32, i32) {
    %c0_i32 = arith.constant 0 : i32
    %c0_i32_0 = arith.constant 0 : i32
    %c0_i32_1 = arith.constant 0 : i32
    return %c0_i32, %c0_i32_0 : i32, i32
  }
  func.func @transform_2(%arg0: i32) -> (i32, i32) {
    %c0_i32 = arith.constant 0 : i32
    %c0_i32_0 = arith.constant 0 : i32
    %c0_i32_1 = arith.constant 0 : i32
    return %c0_i32, %c0_i32_0 : i32, i32
  }
  func.func @transform_3(%arg0: i32) -> (i32, i32) {
    %c0_i32 = arith.constant 0 : i32
    %c0_i32_0 = arith.constant 0 : i32
    %c0_i32_1 = arith.constant 0 : i32
    return %c0_i32, %c0_i32_0 : i32, i32
  }
  func.func @transform_4(%arg0: i32) -> (i32, i32) {
    %c0_i32 = arith.constant 0 : i32
    %c0_i32_0 = arith.constant 0 : i32
    %c0_i32_1 = arith.constant 0 : i32
    return %c0_i32, %c0_i32_0 : i32, i32
  }
  func.func @transform_5(%arg0: i32) -> (i32, i32) {
    %c0_i32 = arith.constant 0 : i32
    %c0_i32_0 = arith.constant 0 : i32
    %c0_i32_1 = arith.constant 0 : i32
    return %c0_i32, %c0_i32_0 : i32, i32
  }
  func.func @transform_6(%arg0: i32) -> (i32, i32) {
    %c0_i32 = arith.constant 0 : i32
    %c0_i32_0 = arith.constant 0 : i32
    %c0_i32_1 = arith.constant 0 : i32
    return %c0_i32, %c0_i32_0 : i32, i32
  }
  func.func @transform_7(%arg0: i32) -> (i32, i32) {
    %c0_i32 = arith.constant 0 : i32
    %c0_i32_0 = arith.constant 0 : i32
    return %arg0, %c0_i32 : i32, i32
  }
}

</mosaic_0001>

<llo_original>
// kernel: tpu_custom_call.1
$region0: #{tpu_custom_call.1}
  #allocation0 [shape = 'u32[]', space=smem, size = 0x4, offset = 0x4, fixed_abs, tag = 'smem constant byte address 0x4 - core index']
  #allocation1 [shape = 'u32[144,128]{1,0:T(1,128)}', space=vmem, size = 0x12000, scoped, tag = 'internal scratch']
  #allocation2 [shape = 'f32[1,1]{1,0:T(1,128)S(6)}', space=smem, size = 0x200, scoped, tag = 'scoped memory for tpu_custom_call.1']
  %s0 = inlined_call_operand.hbm [shape: f32[16,1024], index: 0, kind: input, shape index: {}]
  %s1 = inlined_call_operand.hbm [shape: bf16[1024,512], index: 1, kind: input, shape index: {}]
  %s2 = inlined_call_operand.vmem [shape: f32[1,512], index: 2, kind: input, shape index: {}]
  %s3 = inlined_call_operand.hbm [shape: bf16[512,256], index: 3, kind: input, shape index: {}]
  %s4 = inlined_call_operand.vmem [shape: f32[1,256], index: 4, kind: input, shape index: {}]
  %s5 = inlined_call_operand.vmem [shape: f32[1,256], index: 5, kind: input, shape index: {}]
  %s6 = inlined_call_operand.<no memory space> [shape: f32[1,1], index: 6, kind: input, shape index: {}]
  %s7 = inlined_call_operand.vmem [shape: f32[16,1], index: 7, kind: output, shape index: {}]
  %s8 = sld [smem:[#allocation0]]
  $region50: #{tpu_custom_call.1} parent=0
    _
  %s10 = ssub.s32 1, %s8
  %s11 = scalar_select 0, %s10, %s8
  %12 = sst [smem:[#allocation2]] %s6
  $region1: #{tpu_custom_call.1} parent=0
    #allocation3 [shape = 'u8[65536]{0}', space=vmem, size = 0x10000, scoped, tag = 'input window, operand 0, single buffered']
    #allocation4 [shape = 's32[1]{0}', space=sflag, size = 0x4, scoped, tag = 'scoped memory for tpu_custom_call.1']
    #allocation5 [shape = 'u8[1048576]{0}', space=vmem, size = 0x100000, scoped, tag = 'input window, operand 1, single buffered']
    #allocation6 [shape = 's32[1]{0}', space=sflag, size = 0x4, scoped, tag = 'scoped memory for tpu_custom_call.1']
    #allocation7 [shape = 'u8[262144]{0}', space=vmem, size = 0x40000, scoped, tag = 'input window, operand 3, single buffered']
    %13 = vsyncpa [#allocation4], 0
    %14 = vsyncpa [#allocation6], 0
    // Predicated region
    $region2: #{tpu_custom_call.1} parent=1 // pred_check
      _
    $region3: #{tpu_custom_call.1} parent=1 // pred_check_branch
      %16 = sbr.rel (0) target = $region5
    $region4: #{tpu_custom_call.1} parent=1 // pred_region
      %s18 = ssub.s32 2048, 2048
      %19 = vsyncadd [#allocation4], %s18
      %s20 = sshll.u32 [#allocation3], 4
      %s21 = int_to_ptr.vmem [resolvable:$true] %s20
      %26 = dma.hbm_to_vmem [thread:$0]  %s0, 2048, %s21, [#allocation4], 1024, 1024, 64
    $region5: #{tpu_custom_call.1} parent=1 // pred_fallthru
      _
    // Predicated region
    $region6: #{tpu_custom_call.1} parent=1 // pred_check
      _
    $region7: #{tpu_custom_call.1} parent=1 // pred_check_branch
      %28 = sbr.rel (0) target = $region9
    $region8: #{tpu_custom_call.1} parent=1 // pred_region
      %s30 = ssub.s32 32768, 32768
      %31 = vsyncadd [#allocation6], %s30
      %s32 = sshll.u32 [#allocation5], 4
      %s33 = int_to_ptr.vmem [resolvable:$true] %s32
      %38 = dma.hbm_to_vmem [thread:$0]  %s1, 32768, %s33, [#allocation6], 256, 256, 16
    $region9: #{tpu_custom_call.1} parent=1 // pred_fallthru
      _
    // Predicated region
    $region10: #{tpu_custom_call.1} parent=1 // pred_check
      _
    $region11: #{tpu_custom_call.1} parent=1 // pred_check_branch
      %40 = sbr.rel (0) target = $region13
    $region12: #{tpu_custom_call.1} parent=1 // pred_region
      _
    $region13: #{tpu_custom_call.1} parent=1 // pred_fallthru
      _
    // Predicated region
    $region14: #{tpu_custom_call.1} parent=1 // pred_check
      _
    $region15: #{tpu_custom_call.1} parent=1 // pred_check_branch
      %42 = sbr.rel (0) target = $region17
    $region16: #{tpu_custom_call.1} parent=1 // pred_region
      %s44 = ssub.s32 8192, 8192
      %45 = vsyncadd [#allocation6], %s44
      %s46 = sshll.u32 [#allocation7], 4
      %s47 = int_to_ptr.vmem [resolvable:$true] %s46
      %52 = dma.hbm_to_vmem [thread:$0]  %s3, 8192, %s47, [#allocation6], 128, 128, 8
    $region17: #{tpu_custom_call.1} parent=1 // pred_fallthru
      _
    // Predicated region
    $region18: #{tpu_custom_call.1} parent=1 // pred_check
      _
    $region19: #{tpu_custom_call.1} parent=1 // pred_check_branch
      %54 = sbr.rel (0) target = $region21
    $region20: #{tpu_custom_call.1} parent=1 // pred_region
      _
    $region21: #{tpu_custom_call.1} parent=1 // pred_fallthru
      _
    // Predicated region
    $region22: #{tpu_custom_call.1} parent=1 // pred_check
      _
    $region23: #{tpu_custom_call.1} parent=1 // pred_check_branch
      %56 = sbr.rel (0) target = $region25
    $region24: #{tpu_custom_call.1} parent=1 // pred_region
      _
    $region25: #{tpu_custom_call.1} parent=1 // pred_fallthru
      _
    // Predicated region
    $region26: #{tpu_custom_call.1} parent=1 // pred_check
      _
    $region27: #{tpu_custom_call.1} parent=1 // pred_check_branch
      %58 = sbr.rel (0) target = $region29
    $region28: #{tpu_custom_call.1} parent=1 // pred_region
      _
    $region29: #{tpu_custom_call.1} parent=1 // pred_fallthru
      _
    // Predicated region
    $region30: #{tpu_custom_call.1} parent=1 // pred_check
      _
    $region31: #{tpu_custom_call.1} parent=1 // pred_check_branch
      %60 = sbr.rel (0) target = $region33
    $region32: #{tpu_custom_call.1} parent=1 // pred_region
      %61 = dma.done [#allocation4], 2048
    $region33: #{tpu_custom_call.1} parent=1 // pred_fallthru
      _
    // Predicated region
    $region34: #{tpu_custom_call.1} parent=1 // pred_check
      _
    $region35: #{tpu_custom_call.1} parent=1 // pred_check_branch
      %63 = sbr.rel (0) target = $region37
    $region36: #{tpu_custom_call.1} parent=1 // pred_region
      %64 = dma.done [#allocation6], 32768
    $region37: #{tpu_custom_call.1} parent=1 // pred_fallthru
      _
    // Predicated region
    $region38: #{tpu_custom_call.1} parent=1 // pred_check
      _
    $region39: #{tpu_custom_call.1} parent=1 // pred_check_branch
      %66 = sbr.rel (0) target = $region41
    $region40: #{tpu_custom_call.1} parent=1 // pred_region
      %67 = dma.done [#allocation6], 8192
    $region41: #{tpu_custom_call.1} parent=1 // pred_fallthru
      _
    %v68 = vld [vmem:[#allocation3] sm:$0xff]
    %v69 = vld [vmem:[#allocation3 + $0x8] sm:$0xff]
    %v70 = vld [vmem:[#allocation3 + $0x10] sm:$0xff]
    %v71 = vld [vmem:[#allocation3 + $0x18] sm:$0xff]
    %v72 = vld [vmem:[#allocation3 + $0x20] sm:$0xff]
    %v73 = vld [vmem:[#allocation3 + $0x28] sm:$0xff]
    %v74 = vld [vmem:[#allocation3 + $0x30] sm:$0xff]
    %v75 = vld [vmem:[#allocation3 + $0x38] sm:$0xff]
    %v76 = vld [vmem:[#allocation3 + $0x40] sm:$0xff]
    %v77 = vld [vmem:[#allocation3 + $0x48] sm:$0xff]
    %v78 = vld [vmem:[#allocation3 + $0x50] sm:$0xff]
    %v79 = vld [vmem:[#allocation3 + $0x58] sm:$0xff]
    %v80 = vld [vmem:[#allocation3 + $0x60] sm:$0xff]
    %v81 = vld [vmem:[#allocation3 + $0x68] sm:$0xff]
    %v82 = vld [vmem:[#allocation3 + $0x70] sm:$0xff]
    %v83 = vld [vmem:[#allocation3 + $0x78] sm:$0xff]
    %v84 = vpack.c.bf16 %v76, %v68
    %v85 = vpack.c.bf16 %v77, %v69
    %v86 = vpack.c.bf16 %v78, %v70
    %v87 = vpack.c.bf16 %v79, %v71
    %v88 = vpack.c.bf16 %v80, %v72
    %v89 = vpack.c.bf16 %v81, %v73
    %v90 = vpack.c.bf16 %v82, %v74
    %v91 = vpack.c.bf16 %v83, %v75
    %v92 = vld [vmem:[#allocation5] sm:$0xff]
    %v93 = vld [vmem:[#allocation5 + $0x8] sm:$0xff]
    %v94 = vld [vmem:[#allocation5 + $0x10] sm:$0xff]
    %v95 = vld [vmem:[#allocation5 + $0x18] sm:$0xff]
    %v96 = vld [vmem:[#allocation5 + $0x20] sm:$0xff]
    %v97 = vld [vmem:[#allocation5 + $0x28] sm:$0xff]
    %v98 = vld [vmem:[#allocation5 + $0x30] sm:$0xff]
    %v99 = vld [vmem:[#allocation5 + $0x38] sm:$0xff]
    %v100 = vld [vmem:[#allocation5 + $0x40] sm:$0xff]
    %v101 = vld [vmem:[#allocation5 + $0x48] sm:$0xff]
    %v102 = vld [vmem:[#allocation5 + $0x50] sm:$0xff]
    %v103 = vld [vmem:[#allocation5 + $0x58] sm:$0xff]
    %v104 = vld [vmem:[#allocation5 + $0x60] sm:$0xff]
    %v105 = vld [vmem:[#allocation5 + $0x68] sm:$0xff]
    %v106 = vld [vmem:[#allocation5 + $0x70] sm:$0xff]
    %v107 = vld [vmem:[#allocation5 + $0x78] sm:$0xff]
    %v108 = vld [vmem:[#allocation5 + $0x80] sm:$0xff]
    %v109 = vld [vmem:[#allocation5 + $0x88] sm:$0xff]
    %v110 = vld [vmem:[#allocation5 + $0x90] sm:$0xff]
    %v111 = vld [vmem:[#allocation5 + $0x98] sm:$0xff]
    %v112 = vld [vmem:[#allocation5 + $0xa0] sm:$0xff]
    %v113 = vld [vmem:[#allocation5 + $0xa8] sm:$0xff]
    %v114 = vld [vmem:[#allocation5 + $0xb0] sm:$0xff]
    %v115 = vld [vmem:[#allocation5 + $0xb8] sm:$0xff]
    %v116 = vld [vmem:[#allocation5 + $0xc0] sm:$0xff]
    %v117 = vld [vmem:[#allocation5 + $0xc8] sm:$0xff]
    %v118 = vld [vmem:[#allocation5 + $0xd0] sm:$0xff]
    %v119 = vld [vmem:[#allocation5 + $0xd8] sm:$0xff]
    %v120 = vld [vmem:[#allocation5 + $0xe0] sm:$0xff]
    %v121 = vld [vmem:[#allocation5 + $0xe8] sm:$0xff]
    %v122 = vld [vmem:[#allocation5 + $0xf0] sm:$0xff]
    %v123 = vld [vmem:[#allocation5 + $0xf8] sm:$0xff]
    %v124 = vld [vmem:[#allocation5 + $0x100] sm:$0xff]
    %v125 = vld [vmem:[#allocation5 + $0x108] sm:$0xff]
    %v126 = vld [vmem:[#allocation5 + $0x110] sm:$0xff]
    %v127 = vld [vmem:[#allocation5 + $0x118] sm:$0xff]
    %v128 = vld [vmem:[#allocation5 + $0x120] sm:$0xff]
    %v129 = vld [vmem:[#allocation5 + $0x128] sm:$0xff]
    %v130 = vld [vmem:[#allocation5 + $0x130] sm:$0xff]
    %v131 = vld [vmem:[#allocation5 + $0x138] sm:$0xff]
    %v132 = vld [vmem:[#allocation5 + $0x140] sm:$0xff]
    %v133 = vld [vmem:[#allocation5 + $0x148] sm:$0xff]
    %v134 = vld [vmem:[#allocation5 + $0x150] sm:$0xff]
    %v135 = vld [vmem:[#allocation5 + $0x158] sm:$0xff]
    %v136 = vld [vmem:[#allocation5 + $0x160] sm:$0xff]
    %v137 = vld [vmem:[#allocation5 + $0x168] sm:$0xff]
    %v138 = vld [vmem:[#allocation5 + $0x170] sm:$0xff]
    %v139 = vld [vmem:[#allocation5 + $0x178] sm:$0xff]
    %v140 = vld [vmem:[#allocation5 + $0x180] sm:$0xff]
    %v141 = vld [vmem:[#allocation5 + $0x188] sm:$0xff]
    %v142 = vld [vmem:[#allocation5 + $0x190] sm:$0xff]
    %v143 = vld [vmem:[#allocation5 + $0x198] sm:$0xff]
    %v144 = vld [vmem:[#allocation5 + $0x1a0] sm:$0xff]
    %v145 = vld [vmem:[#allocation5 + $0x1a8] sm:$0xff]
    %v146 = vld [vmem:[#allocation5 + $0x1b0] sm:$0xff]
    %v147 = vld [vmem:[#allocation5 + $0x1b8] sm:$0xff]
    %v148 = vld [vmem:[#allocation5 + $0x1c0] sm:$0xff]
    %v149 = vld [vmem:[#allocation5 + $0x1c8] sm:$0xff]
    %v150 = vld [vmem:[#allocation5 + $0x1d0] sm:$0xff]
    %v151 = vld [vmem:[#allocation5 + $0x1d8] sm:$0xff]
    %v152 = vld [vmem:[#allocation5 + $0x1e0] sm:$0xff]
    %v153 = vld [vmem:[#allocation5 + $0x1e8] sm:$0xff]
    %v154 = vld [vmem:[#allocation5 + $0x1f0] sm:$0xff]
    %v155 = vld [vmem:[#allocation5 + $0x1f8] sm:$0xff]
    %v156 = vld [vmem:[#allocation5 + $0x200] sm:$0xff]
    %v157 = vld [vmem:[#allocation5 + $0x208] sm:$0xff]
    %v158 = vld [vmem:[#allocation5 + $0x210] sm:$0xff]
    %v159 = vld [vmem:[#allocation5 + $0x218] sm:$0xff]
    %v160 = vld [vmem:[#allocation5 + $0x220] sm:$0xff]
    %v161 = vld [vmem:[#allocation5 + $0x228] sm:$0xff]
    %v162 = vld [vmem:[#allocation5 + $0x230] sm:$0xff]
    %v163 = vld [vmem:[#allocation5 + $0x238] sm:$0xff]
    %v164 = vld [vmem:[#allocation5 + $0x240] sm:$0xff]
    %v165 = vld [vmem:[#allocation5 + $0x248] sm:$0xff]
    %v166 = vld [vmem:[#allocation5 + $0x250] sm:$0xff]
    %v167 = vld [vmem:[#allocation5 + $0x258] sm:$0xff]
    %v168 = vld [vmem:[#allocation5 + $0x260] sm:$0xff]
    %v169 = vld [vmem:[#allocation5 + $0x268] sm:$0xff]
    %v170 = vld [vmem:[#allocation5 + $0x270] sm:$0xff]
    %v171 = vld [vmem:[#allocation5 + $0x278] sm:$0xff]
    %v172 = vld [vmem:[#allocation5 + $0x280] sm:$0xff]
    %v173 = vld [vmem:[#allocation5 + $0x288] sm:$0xff]
    %v174 = vld [vmem:[#allocation5 + $0x290] sm:$0xff]
    %v175 = vld [vmem:[#allocation5 + $0x298] sm:$0xff]
    %v176 = vld [vmem:[#allocation5 + $0x2a0] sm:$0xff]
    %v177 = vld [vmem:[#allocation5 + $0x2a8] sm:$0xff]
    %v178 = vld [vmem:[#allocation5 + $0x2b0] sm:$0xff]
    %v179 = vld [vmem:[#allocation5 + $0x2b8] sm:$0xff]
    %v180 = vld [vmem:[#allocation5 + $0x2c0] sm:$0xff]
    %v181 = vld [vmem:[#allocation5 + $0x2c8] sm:$0xff]
    %v182 = vld [vmem:[#allocation5 + $0x2d0] sm:$0xff]
    %v183 = vld [vmem:[#allocation5 + $0x2d8] sm:$0xff]
    %v184 = vld [vmem:[#allocation5 + $0x2e0] sm:$0xff]
    %v185 = vld [vmem:[#allocation5 + $0x2e8] sm:$0xff]
    %v186 = vld [vmem:[#allocation5 + $0x2f0] sm:$0xff]
    %v187 = vld [vmem:[#allocation5 + $0x2f8] sm:$0xff]
    %v188 = vld [vmem:[#allocation5 + $0x300] sm:$0xff]
    %v189 = vld [vmem:[#allocation5 + $0x308] sm:$0xff]
    %v190 = vld [vmem:[#allocation5 + $0x310] sm:$0xff]
    %v191 = vld [vmem:[#allocation5 + $0x318] sm:$0xff]
    %v192 = vld [vmem:[#allocation5 + $0x320] sm:$0xff]
    %v193 = vld [vmem:[#allocation5 + $0x328] sm:$0xff]
    %v194 = vld [vmem:[#allocation5 + $0x330] sm:$0xff]
    %v195 = vld [vmem:[#allocation5 + $0x338] sm:$0xff]
    %v196 = vld [vmem:[#allocation5 + $0x340] sm:$0xff]
    %v197 = vld [vmem:[#allocation5 + $0x348] sm:$0xff]
    %v198 = vld [vmem:[#allocation5 + $0x350] sm:$0xff]
    %v199 = vld [vmem:[#allocation5 + $0x358] sm:$0xff]
    %v200 = vld [vmem:[#allocation5 + $0x360] sm:$0xff]
    %v201 = vld [vmem:[#allocation5 + $0x368] sm:$0xff]
    %v202 = vld [vmem:[#allocation5 + $0x370] sm:$0xff]
    %v203 = vld [vmem:[#allocation5 + $0x378] sm:$0xff]
    %v204 = vld [vmem:[#allocation5 + $0x380] sm:$0xff]
    %v205 = vld [vmem:[#allocation5 + $0x388] sm:$0xff]
    %v206 = vld [vmem:[#allocation5 + $0x390] sm:$0xff]
    %v207 = vld [vmem:[#allocation5 + $0x398] sm:$0xff]
    %v208 = vld [vmem:[#allocation5 + $0x3a0] sm:$0xff]
    %v209 = vld [vmem:[#allocation5 + $0x3a8] sm:$0xff]
    %v210 = vld [vmem:[#allocation5 + $0x3b0] sm:$0xff]
    %v211 = vld [vmem:[#allocation5 + $0x3b8] sm:$0xff]
    %v212 = vld [vmem:[#allocation5 + $0x3c0] sm:$0xff]
    %v213 = vld [vmem:[#allocation5 + $0x3c8] sm:$0xff]
    %v214 = vld [vmem:[#allocation5 + $0x3d0] sm:$0xff]
    %v215 = vld [vmem:[#allocation5 + $0x3d8] sm:$0xff]
    %v216 = vld [vmem:[#allocation5 + $0x3e0] sm:$0xff]
    %v217 = vld [vmem:[#allocation5 + $0x3e8] sm:$0xff]
    %v218 = vld [vmem:[#allocation5 + $0x3f0] sm:$0xff]
    %v219 = vld [vmem:[#allocation5 + $0x3f8] sm:$0xff]
    %v220 = vld [vmem:[#allocation5 + $0x400] sm:$0xff]
    %v221 = vld [vmem:[#allocation5 + $0x408] sm:$0xff]
    %v222 = vld [vmem:[#allocation5 + $0x410] sm:$0xff]
    %v223 = vld [vmem:[#allocation5 + $0x418] sm:$0xff]
    %v224 = vld [vmem:[#allocation5 + $0x420] sm:$0xff]
    %v225 = vld [vmem:[#allocation5 + $0x428] sm:$0xff]
    %v226 = vld [vmem:[#allocation5 + $0x430] sm:$0xff]
    %v227 = vld [vmem:[#allocation5 + $0x438] sm:$0xff]
    %v228 = vld [vmem:[#allocation5 + $0x440] sm:$0xff]
    %v229 = vld [vmem:[#allocation5 + $0x448] sm:$0xff]
    %v230 = vld [vmem:[#allocation5 + $0x450] sm:$0xff]
    %v231 = vld [vmem:[#allocation5 + $0x458] sm:$0xff]
    %v232 = vld [vmem:[#allocation5 + $0x460] sm:$0xff]
    %v233 = vld [vmem:[#allocation5 + $0x468] sm:$0xff]
    %v234 = vld [vmem:[#allocation5 + $0x470] sm:$0xff]
    %v235 = vld [vmem:[#allocation5 + $0x478] sm:$0xff]
    %v236 = vld [vmem:[#allocation5 + $0x480] sm:$0xff]
    %v237 = vld [vmem:[#allocation5 + $0x488] sm:$0xff]
    %v238 = vld [vmem:[#allocation5 + $0x490] sm:$0xff]
    %v239 = vld [vmem:[#allocation5 + $0x498] sm:$0xff]
    %v240 = vld [vmem:[#allocation5 + $0x4a0] sm:$0xff]
    %v241 = vld [vmem:[#allocation5 + $0x4a8] sm:$0xff]
    %v242 = vld [vmem:[#allocation5 + $0x4b0] sm:$0xff]
    %v243 = vld [vmem:[#allocation5 + $0x4b8] sm:$0xff]
    %v244 = vld [vmem:[#allocation5 + $0x4c0] sm:$0xff]
    %v245 = vld [vmem:[#allocation5 + $0x4c8] sm:$0xff]
    %v246 = vld [vmem:[#allocation5 + $0x4d0] sm:$0xff]
    %v247 = vld [vmem:[#allocation5 + $0x4d8] sm:$0xff]
    %v248 = vld [vmem:[#allocation5 + $0x4e0] sm:$0xff]
    %v249 = vld [vmem:[#allocation5 + $0x4e8] sm:$0xff]
    %v250 = vld [vmem:[#allocation5 + $0x4f0] sm:$0xff]
    %v251 = vld [vmem:[#allocation5 + $0x4f8] sm:$0xff]
    %v252 = vld [vmem:[#allocation5 + $0x500] sm:$0xff]
    %v253 = vld [vmem:[#allocation5 + $0x508] sm:$0xff]
    %v254 = vld [vmem:[#allocation5 + $0x510] sm:$0xff]
    %v255 = vld [vmem:[#allocation5 + $0x518] sm:$0xff]
    %v256 = vld [vmem:[#allocation5 + $0x520] sm:$0xff]
    %v257 = vld [vmem:[#allocation5 + $0x528] sm:$0xff]
    %v258 = vld [vmem:[#allocation5 + $0x530] sm:$0xff]
    %v259 = vld [vmem:[#allocation5 + $0x538] sm:$0xff]
    %v260 = vld [vmem:[#allocation5 + $0x540] sm:$0xff]
    %v261 = vld [vmem:[#allocation5 + $0x548] sm:$0xff]
    %v262 = vld [vmem:[#allocation5 + $0x550] sm:$0xff]
    %v263 = vld [vmem:[#allocation5 + $0x558] sm:$0xff]
    %v264 = vld [vmem:[#allocation5 + $0x560] sm:$0xff]
    %v265 = vld [vmem:[#allocation5 + $0x568] sm:$0xff]
    %v266 = vld [vmem:[#allocation5 + $0x570] sm:$0xff]
    %v267 = vld [vmem:[#allocation5 + $0x578] sm:$0xff]
    %v268 = vld [vmem:[#allocation5 + $0x580] sm:$0xff]
    %v269 = vld [vmem:[#allocation5 + $0x588] sm:$0xff]
    %v270 = vld [vmem:[#allocation5 + $0x590] sm:$0xff]
    %v271 = vld [vmem:[#allocation5 + $0x598] sm:$0xff]
    %v272 = vld [vmem:[#allocation5 + $0x5a0] sm:$0xff]
    %v273 = vld [vmem:[#allocation5 + $0x5a8] sm:$0xff]
    %v274 = vld [vmem:[#allocation5 + $0x5b0] sm:$0xff]
    %v275 = vld [vmem:[#allocation5 + $0x5b8] sm:$0xff]
    %v276 = vld [vmem:[#allocation5 + $0x5c0] sm:$0xff]
    %v277 = vld [vmem:[#allocation5 + $0x5c8] sm:$0xff]
    %v278 = vld [vmem:[#allocation5 + $0x5d0] sm:$0xff]
    %v279 = vld [vmem:[#allocation5 + $0x5d8] sm:$0xff]
    %v280 = vld [vmem:[#allocation5 + $0x5e0] sm:$0xff]
    %v281 = vld [vmem:[#allocation5 + $0x5e8] sm:$0xff]
    %v282 = vld [vmem:[#allocation5 + $0x5f0] sm:$0xff]
    %v283 = vld [vmem:[#allocation5 + $0x5f8] sm:$0xff]
    %v284 = vld [vmem:[#allocation5 + $0x600] sm:$0xff]
    %v285 = vld [vmem:[#allocation5 + $0x608] sm:$0xff]
    %v286 = vld [vmem:[#allocation5 + $0x610] sm:$0xff]
    %v287 = vld [vmem:[#allocation5 + $0x618] sm:$0xff]
    %v288 = vld [vmem:[#allocation5 + $0x620] sm:$0xff]
    %v289 = vld [vmem:[#allocation5 + $0x628] sm:$0xff]
    %v290 = vld [vmem:[#allocation5 + $0x630] sm:$0xff]
    %v291 = vld [vmem:[#allocation5 + $0x638] sm:$0xff]
    %v292 = vld [vmem:[#allocation5 + $0x640] sm:$0xff]
    %v293 = vld [vmem:[#allocation5 + $0x648] sm:$0xff]
    %v294 = vld [vmem:[#allocation5 + $0x650] sm:$0xff]
    %v295 = vld [vmem:[#allocation5 + $0x658] sm:$0xff]
    %v296 = vld [vmem:[#allocation5 + $0x660] sm:$0xff]
    %v297 = vld [vmem:[#allocation5 + $0x668] sm:$0xff]
    %v298 = vld [vmem:[#allocation5 + $0x670] sm:$0xff]
    %v299 = vld [vmem:[#allocation5 + $0x678] sm:$0xff]
    %v300 = vld [vmem:[#allocation5 + $0x680] sm:$0xff]
    %v301 = vld [vmem:[#allocation5 + $0x688] sm:$0xff]
    %v302 = vld [vmem:[#allocation5 + $0x690] sm:$0xff]
    %v303 = vld [vmem:[#allocation5 + $0x698] sm:$0xff]
    %v304 = vld [vmem:[#allocation5 + $0x6a0] sm:$0xff]
    %v305 = vld [vmem:[#allocation5 + $0x6a8] sm:$0xff]
    %v306 = vld [vmem:[#allocation5 + $0x6b0] sm:$0xff]
    %v307 = vld [vmem:[#allocation5 + $0x6b8] sm:$0xff]
    %v308 = vld [vmem:[#allocation5 + $0x6c0] sm:$0xff]
    %v309 = vld [vmem:[#allocation5 + $0x6c8] sm:$0xff]
    %v310 = vld [vmem:[#allocation5 + $0x6d0] sm:$0xff]
    %v311 = vld [vmem:[#allocation5 + $0x6d8] sm:$0xff]
    %v312 = vld [vmem:[#allocation5 + $0x6e0] sm:$0xff]
    %v313 = vld [vmem:[#allocation5 + $0x6e8] sm:$0xff]
    %v314 = vld [vmem:[#allocation5 + $0x6f0] sm:$0xff]
    %v315 = vld [vmem:[#allocation5 + $0x6f8] sm:$0xff]
    %v316 = vld [vmem:[#allocation5 + $0x700] sm:$0xff]
    %v317 = vld [vmem:[#allocation5 + $0x708] sm:$0xff]
    %v318 = vld [vmem:[#allocation5 + $0x710] sm:$0xff]
    %v319 = vld [vmem:[#allocation5 + $0x718] sm:$0xff]
    %v320 = vld [vmem:[#allocation5 + $0x720] sm:$0xff]
    %v321 = vld [vmem:[#allocation5 + $0x728] sm:$0xff]
    %v322 = vld [vmem:[#allocation5 + $0x730] sm:$0xff]
    %v323 = vld [vmem:[#allocation5 + $0x738] sm:$0xff]
    %v324 = vld [vmem:[#allocation5 + $0x740] sm:$0xff]
    %v325 = vld [vmem:[#allocation5 + $0x748] sm:$0xff]
    %v326 = vld [vmem:[#allocation5 + $0x750] sm:$0xff]
    %v327 = vld [vmem:[#allocation5 + $0x758] sm:$0xff]
    %v328 = vld [vmem:[#allocation5 + $0x760] sm:$0xff]
    %v329 = vld [vmem:[#allocation5 + $0x768] sm:$0xff]
    %v330 = vld [vmem:[#allocation5 + $0x770] sm:$0xff]
    %v331 = vld [vmem:[#allocation5 + $0x778] sm:$0xff]
    %v332 = vld [vmem:[#allocation5 + $0x780] sm:$0xff]
    %v333 = vld [vmem:[#allocation5 + $0x788] sm:$0xff]
    %v334 = vld [vmem:[#allocation5 + $0x790] sm:$0xff]
    %v335 = vld [vmem:[#allocation5 + $0x798] sm:$0xff]
    %v336 = vld [vmem:[#allocation5 + $0x7a0] sm:$0xff]
    %v337 = vld [vmem:[#allocation5 + $0x7a8] sm:$0xff]
    %v338 = vld [vmem:[#allocation5 + $0x7b0] sm:$0xff]
    %v339 = vld [vmem:[#allocation5 + $0x7b8] sm:$0xff]
    %v340 = vld [vmem:[#allocation5 + $0x7c0] sm:$0xff]
    %v341 = vld [vmem:[#allocation5 + $0x7c8] sm:$0xff]
    %v342 = vld [vmem:[#allocation5 + $0x7d0] sm:$0xff]
    %v343 = vld [vmem:[#allocation5 + $0x7d8] sm:$0xff]
    %v344 = vld [vmem:[#allocation5 + $0x7e0] sm:$0xff]
    %v345 = vld [vmem:[#allocation5 + $0x7e8] sm:$0xff]
    %v346 = vld [vmem:[#allocation5 + $0x7f0] sm:$0xff]
    %v347 = vld [vmem:[#allocation5 + $0x7f8] sm:$0xff]
    %v348 = vld [vmem:[%s2] sm:$0xf]
    %v350 = vlaneseq
    %v351 = vshrl.u32 %v350, 7
    %v352 = vsub.s32 0, %v351
    %v353 = vrot.slane %v348, %v352
    %v354 = vlaneseq
    %v355 = vshrl.u32 %v354, 7
    %v356 = vsub.s32 1, %v355
    %v357 = vrot.slane %v348, %v356
    %v358 = vlaneseq
    %v359 = vshrl.u32 %v358, 7
    %v360 = vsub.s32 2, %v359
    %v361 = vrot.slane %v348, %v360
    %v362 = vlaneseq
    %v363 = vshrl.u32 %v362, 7
    %v364 = vsub.s32 3, %v363
    %v365 = vrot.slane %v348, %v364
    %v626 = vunpack.c.l.b16 %v92
    %v627 = vunpack.c.h.b16 %v92
    %v628 = vunpack.c.l.b16 %v93
    %v629 = vunpack.c.h.b16 %v93
    %v630 = vunpack.c.l.b16 %v94
    %v631 = vunpack.c.h.b16 %v94
    %v632 = vunpack.c.l.b16 %v95
    %v633 = vunpack.c.h.b16 %v95
    %v634 = vunpack.c.l.b16 %v96
    %v635 = vunpack.c.h.b16 %v96
    %v636 = vunpack.c.l.b16 %v97
    %v637 = vunpack.c.h.b16 %v97
    %v638 = vunpack.c.l.b16 %v98
    %v639 = vunpack.c.h.b16 %v98
    %v640 = vunpack.c.l.b16 %v99
    %v641 = vunpack.c.h.b16 %v99
    %v642 = vunpack.c.l.b16 %v100
    %v643 = vunpack.c.h.b16 %v100
    %v644 = vunpack.c.l.b16 %v101
    %v645 = vunpack.c.h.b16 %v101
    %v646 = vunpack.c.l.b16 %v102
    %v647 = vunpack.c.h.b16 %v102
    %v648 = vunpack.c.l.b16 %v103
    %v649 = vunpack.c.h.b16 %v103
    %v650 = vunpack.c.l.b16 %v104
    %v651 = vunpack.c.h.b16 %v104
    %v652 = vunpack.c.l.b16 %v105
    %v653 = vunpack.c.h.b16 %v105
    %v654 = vunpack.c.l.b16 %v106
    %v655 = vunpack.c.h.b16 %v106
    %v656 = vunpack.c.l.b16 %v107
    %v657 = vunpack.c.h.b16 %v107
    %v658 = vunpack.c.l.b16 %v108
    %v659 = vunpack.c.h.b16 %v108
    %v660 = vunpack.c.l.b16 %v109
    %v661 = vunpack.c.h.b16 %v109
    %v662 = vunpack.c.l.b16 %v110
    %v663 = vunpack.c.h.b16 %v110
    %v664 = vunpack.c.l.b16 %v111
    %v665 = vunpack.c.h.b16 %v111
    %v666 = vunpack.c.l.b16 %v112
    %v667 = vunpack.c.h.b16 %v112
    %v668 = vunpack.c.l.b16 %v113
    %v669 = vunpack.c.h.b16 %v113
    %v670 = vunpack.c.l.b16 %v114
    %v671 = vunpack.c.h.b16 %v114
    %v672 = vunpack.c.l.b16 %v115
    %v673 = vunpack.c.h.b16 %v115
    %v674 = vunpack.c.l.b16 %v116
    %v675 = vunpack.c.h.b16 %v116
    %v676 = vunpack.c.l.b16 %v117
    %v677 = vunpack.c.h.b16 %v117
    %v678 = vunpack.c.l.b16 %v118
    %v679 = vunpack.c.h.b16 %v118
    %v680 = vunpack.c.l.b16 %v119
    %v681 = vunpack.c.h.b16 %v119
    %v682 = vunpack.c.l.b16 %v120
    %v683 = vunpack.c.h.b16 %v120
    %v684 = vunpack.c.l.b16 %v121
    %v685 = vunpack.c.h.b16 %v121
    %v686 = vunpack.c.l.b16 %v122
    %v687 = vunpack.c.h.b16 %v122
    %v688 = vunpack.c.l.b16 %v123
    %v689 = vunpack.c.h.b16 %v123
    %v690 = vunpack.c.l.b16 %v124
    %v691 = vunpack.c.h.b16 %v124
    %v692 = vunpack.c.l.b16 %v125
    %v693 = vunpack.c.h.b16 %v125
    %v694 = vunpack.c.l.b16 %v126
    %v695 = vunpack.c.h.b16 %v126
    %v696 = vunpack.c.l.b16 %v127
    %v697 = vunpack.c.h.b16 %v127
    %v698 = vunpack.c.l.b16 %v128
    %v699 = vunpack.c.h.b16 %v128
    %v700 = vunpack.c.l.b16 %v129
    %v701 = vunpack.c.h.b16 %v129
    %v702 = vunpack.c.l.b16 %v130
    %v703 = vunpack.c.h.b16 %v130
    %v704 = vunpack.c.l.b16 %v131
    %v705 = vunpack.c.h.b16 %v131
    %v706 = vunpack.c.l.b16 %v132
    %v707 = vunpack.c.h.b16 %v132
    %v708 = vunpack.c.l.b16 %v133
    %v709 = vunpack.c.h.b16 %v133
    %v710 = vunpack.c.l.b16 %v134
    %v711 = vunpack.c.h.b16 %v134
    %v712 = vunpack.c.l.b16 %v135
    %v713 = vunpack.c.h.b16 %v135
    %v714 = vunpack.c.l.b16 %v136
    %v715 = vunpack.c.h.b16 %v136
    %v716 = vunpack.c.l.b16 %v137
    %v717 = vunpack.c.h.b16 %v137
    %v718 = vunpack.c.l.b16 %v138
    %v719 = vunpack.c.h.b16 %v138
    %v720 = vunpack.c.l.b16 %v139
    %v721 = vunpack.c.h.b16 %v139
    %v722 = vunpack.c.l.b16 %v140
    %v723 = vunpack.c.h.b16 %v140
    %v724 = vunpack.c.l.b16 %v141
    %v725 = vunpack.c.h.b16 %v141
    %v726 = vunpack.c.l.b16 %v142
    %v727 = vunpack.c.h.b16 %v142
    %v728 = vunpack.c.l.b16 %v143
    %v729 = vunpack.c.h.b16 %v143
    %v730 = vunpack.c.l.b16 %v144
    %v731 = vunpack.c.h.b16 %v144
    %v732 = vunpack.c.l.b16 %v145
    %v733 = vunpack.c.h.b16 %v145
    %v734 = vunpack.c.l.b16 %v146
    %v735 = vunpack.c.h.b16 %v146
    %v736 = vunpack.c.l.b16 %v147
    %v737 = vunpack.c.h.b16 %v147
    %v738 = vunpack.c.l.b16 %v148
    %v739 = vunpack.c.h.b16 %v148
    %v740 = vunpack.c.l.b16 %v149
    %v741 = vunpack.c.h.b16 %v149
    %v742 = vunpack.c.l.b16 %v150
    %v743 = vunpack.c.h.b16 %v150
    %v744 = vunpack.c.l.b16 %v151
    %v745 = vunpack.c.h.b16 %v151
    %v746 = vunpack.c.l.b16 %v152
    %v747 = vunpack.c.h.b16 %v152
    %v748 = vunpack.c.l.b16 %v153
    %v749 = vunpack.c.h.b16 %v153
    %v750 = vunpack.c.l.b16 %v154
    %v751 = vunpack.c.h.b16 %v154
    %v752 = vunpack.c.l.b16 %v155
    %v753 = vunpack.c.h.b16 %v155
    %v754 = vunpack.c.l.b16 %v156
    %v755 = vunpack.c.h.b16 %v156
    %v756 = vunpack.c.l.b16 %v157
    %v757 = vunpack.c.h.b16 %v157
    %v758 = vunpack.c.l.b16 %v158
    %v759 = vunpack.c.h.b16 %v158
    %v760 = vunpack.c.l.b16 %v159
    %v761 = vunpack.c.h.b16 %v159
    %v762 = vunpack.c.l.b16 %v160
    %v763 = vunpack.c.h.b16 %v160
    %v764 = vunpack.c.l.b16 %v161
    %v765 = vunpack.c.h.b16 %v161
    %v766 = vunpack.c.l.b16 %v162
    %v767 = vunpack.c.h.b16 %v162
    %v768 = vunpack.c.l.b16 %v163
    %v769 = vunpack.c.h.b16 %v163
    %v770 = vunpack.c.l.b16 %v164
    %v771 = vunpack.c.h.b16 %v164
    %v772 = vunpack.c.l.b16 %v165
    %v773 = vunpack.c.h.b16 %v165
    %v774 = vunpack.c.l.b16 %v166
    %v775 = vunpack.c.h.b16 %v166
    %v776 = vunpack.c.l.b16 %v167
    %v777 = vunpack.c.h.b16 %v167
    %v778 = vunpack.c.l.b16 %v168
    %v779 = vunpack.c.h.b16 %v168
    %v780 = vunpack.c.l.b16 %v169
    %v781 = vunpack.c.h.b16 %v169
    %v782 = vunpack.c.l.b16 %v170
    %v783 = vunpack.c.h.b16 %v170
    %v784 = vunpack.c.l.b16 %v171
    %v785 = vunpack.c.h.b16 %v171
    %v786 = vunpack.c.l.b16 %v172
    %v787 = vunpack.c.h.b16 %v172
    %v788 = vunpack.c.l.b16 %v173
    %v789 = vunpack.c.h.b16 %v173
    %v790 = vunpack.c.l.b16 %v174
    %v791 = vunpack.c.h.b16 %v174
    %v792 = vunpack.c.l.b16 %v175
    %v793 = vunpack.c.h.b16 %v175
    %v794 = vunpack.c.l.b16 %v176
    %v795 = vunpack.c.h.b16 %v176
    %v796 = vunpack.c.l.b16 %v177
    %v797 = vunpack.c.h.b16 %v177
    %v798 = vunpack.c.l.b16 %v178
    %v799 = vunpack.c.h.b16 %v178
    %v800 = vunpack.c.l.b16 %v179
    %v801 = vunpack.c.h.b16 %v179
    %v802 = vunpack.c.l.b16 %v180
    %v803 = vunpack.c.h.b16 %v180
    %v804 = vunpack.c.l.b16 %v181
    %v805 = vunpack.c.h.b16 %v181
    %v806 = vunpack.c.l.b16 %v182
    %v807 = vunpack.c.h.b16 %v182
    %v808 = vunpack.c.l.b16 %v183
    %v809 = vunpack.c.h.b16 %v183
    %v810 = vunpack.c.l.b16 %v184
    %v811 = vunpack.c.h.b16 %v184
    %v812 = vunpack.c.l.b16 %v185
    %v813 = vunpack.c.h.b16 %v185
    %v814 = vunpack.c.l.b16 %v186
    %v815 = vunpack.c.h.b16 %v186
    %v816 = vunpack.c.l.b16 %v187
    %v817 = vunpack.c.h.b16 %v187
    %v818 = vunpack.c.l.b16 %v188
    %v819 = vunpack.c.h.b16 %v188
    %v820 = vunpack.c.l.b16 %v189
    %v821 = vunpack.c.h.b16 %v189
    %v822 = vunpack.c.l.b16 %v190
    %v823 = vunpack.c.h.b16 %v190
    %v824 = vunpack.c.l.b16 %v191
    %v825 = vunpack.c.h.b16 %v191
    %v826 = vunpack.c.l.b16 %v192
    %v827 = vunpack.c.h.b16 %v192
    %v828 = vunpack.c.l.b16 %v193
    %v829 = vunpack.c.h.b16 %v193
    %v830 = vunpack.c.l.b16 %v194
    %v831 = vunpack.c.h.b16 %v194
    %v832 = vunpack.c.l.b16 %v195
    %v833 = vunpack.c.h.b16 %v195
    %v834 = vunpack.c.l.b16 %v196
    %v835 = vunpack.c.h.b16 %v196
    %v836 = vunpack.c.l.b16 %v197
    %v837 = vunpack.c.h.b16 %v197
    %v838 = vunpack.c.l.b16 %v198
    %v839 = vunpack.c.h.b16 %v198
    %v840 = vunpack.c.l.b16 %v199
    %v841 = vunpack.c.h.b16 %v199
    %v842 = vunpack.c.l.b16 %v200
    %v843 = vunpack.c.h.b16 %v200
    %v844 = vunpack.c.l.b16 %v201
    %v845 = vunpack.c.h.b16 %v201
    %v846 = vunpack.c.l.b16 %v202
    %v847 = vunpack.c.h.b16 %v202
    %v848 = vunpack.c.l.b16 %v203
    %v849 = vunpack.c.h.b16 %v203
    %v850 = vunpack.c.l.b16 %v204
    %v851 = vunpack.c.h.b16 %v204
    %v852 = vunpack.c.l.b16 %v205
    %v853 = vunpack.c.h.b16 %v205
    %v854 = vunpack.c.l.b16 %v206
    %v855 = vunpack.c.h.b16 %v206
    %v856 = vunpack.c.l.b16 %v207
    %v857 = vunpack.c.h.b16 %v207
    %v858 = vunpack.c.l.b16 %v208
    %v859 = vunpack.c.h.b16 %v208
    %v860 = vunpack.c.l.b16 %v209
    %v861 = vunpack.c.h.b16 %v209
    %v862 = vunpack.c.l.b16 %v210
    %v863 = vunpack.c.h.b16 %v210
    %v864 = vunpack.c.l.b16 %v211
    %v865 = vunpack.c.h.b16 %v211
    %v866 = vunpack.c.l.b16 %v212
    %v867 = vunpack.c.h.b16 %v212
    %v868 = vunpack.c.l.b16 %v213
    %v869 = vunpack.c.h.b16 %v213
    %v870 = vunpack.c.l.b16 %v214
    %v871 = vunpack.c.h.b16 %v214
    %v872 = vunpack.c.l.b16 %v215
    %v873 = vunpack.c.h.b16 %v215
    %v874 = vunpack.c.l.b16 %v216
    %v875 = vunpack.c.h.b16 %v216
    %v876 = vunpack.c.l.b16 %v217
    %v877 = vunpack.c.h.b16 %v217
    %v878 = vunpack.c.l.b16 %v218
    %v879 = vunpack.c.h.b16 %v218
    %v880 = vunpack.c.l.b16 %v219
    %v881 = vunpack.c.h.b16 %v219
    %v882 = vunpack.c.l.b16 %v220
    %v883 = vunpack.c.h.b16 %v220
    %v884 = vunpack.c.l.b16 %v221
    %v885 = vunpack.c.h.b16 %v221
    %v886 = vunpack.c.l.b16 %v222
    %v887 = vunpack.c.h.b16 %v222
    %v888 = vunpack.c.l.b16 %v223
    %v889 = vunpack.c.h.b16 %v223
    %v890 = vunpack.c.l.b16 %v224
    %v891 = vunpack.c.h.b16 %v224
    %v892 = vunpack.c.l.b16 %v225
    %v893 = vunpack.c.h.b16 %v225
    %v894 = vunpack.c.l.b16 %v226
    %v895 = vunpack.c.h.b16 %v226
    %v896 = vunpack.c.l.b16 %v227
    %v897 = vunpack.c.h.b16 %v227
    %v898 = vunpack.c.l.b16 %v228
    %v899 = vunpack.c.h.b16 %v228
    %v900 = vunpack.c.l.b16 %v229
    %v901 = vunpack.c.h.b16 %v229
    %v902 = vunpack.c.l.b16 %v230
    %v903 = vunpack.c.h.b16 %v230
    %v904 = vunpack.c.l.b16 %v231
    %v905 = vunpack.c.h.b16 %v231
    %v906 = vunpack.c.l.b16 %v232
    %v907 = vunpack.c.h.b16 %v232
    %v908 = vunpack.c.l.b16 %v233
    %v909 = vunpack.c.h.b16 %v233
    %v910 = vunpack.c.l.b16 %v234
    %v911 = vunpack.c.h.b16 %v234
    %v912 = vunpack.c.l.b16 %v235
    %v913 = vunpack.c.h.b16 %v235
    %v914 = vunpack.c.l.b16 %v236
    %v915 = vunpack.c.h.b16 %v236
    %v916 = vunpack.c.l.b16 %v237
    %v917 = vunpack.c.h.b16 %v237
    %v918 = vunpack.c.l.b16 %v238
    %v919 = vunpack.c.h.b16 %v238
    %v920 = vunpack.c.l.b16 %v239
    %v921 = vunpack.c.h.b16 %v239
    %v922 = vunpack.c.l.b16 %v240
    %v923 = vunpack.c.h.b16 %v240
    %v924 = vunpack.c.l.b16 %v241
    %v925 = vunpack.c.h.b16 %v241
    %v926 = vunpack.c.l.b16 %v242
    %v927 = vunpack.c.h.b16 %v242
    %v928 = vunpack.c.l.b16 %v243
    %v929 = vunpack.c.h.b16 %v243
    %v930 = vunpack.c.l.b16 %v244
    %v931 = vunpack.c.h.b16 %v244
    %v932 = vunpack.c.l.b16 %v245
    %v933 = vunpack.c.h.b16 %v245
    %v934 = vunpack.c.l.b16 %v246
    %v935 = vunpack.c.h.b16 %v246
    %v936 = vunpack.c.l.b16 %v247
    %v937 = vunpack.c.h.b16 %v247
    %v938 = vunpack.c.l.b16 %v248
    %v939 = vunpack.c.h.b16 %v248
    %v940 = vunpack.c.l.b16 %v249
    %v941 = vunpack.c.h.b16 %v249
    %v942 = vunpack.c.l.b16 %v250
    %v943 = vunpack.c.h.b16 %v250
    %v944 = vunpack.c.l.b16 %v251
    %v945 = vunpack.c.h.b16 %v251
    %v946 = vunpack.c.l.b16 %v252
    %v947 = vunpack.c.h.b16 %v252
    %v948 = vunpack.c.l.b16 %v253
    %v949 = vunpack.c.h.b16 %v253
    %v950 = vunpack.c.l.b16 %v254
    %v951 = vunpack.c.h.b16 %v254
    %v952 = vunpack.c.l.b16 %v255
    %v953 = vunpack.c.h.b16 %v255
    %v954 = vunpack.c.l.b16 %v256
    %v955 = vunpack.c.h.b16 %v256
    %v956 = vunpack.c.l.b16 %v257
    %v957 = vunpack.c.h.b16 %v257
    %v958 = vunpack.c.l.b16 %v258
    %v959 = vunpack.c.h.b16 %v258
    %v960 = vunpack.c.l.b16 %v259
    %v961 = vunpack.c.h.b16 %v259
    %v962 = vunpack.c.l.b16 %v260
    %v963 = vunpack.c.h.b16 %v260
    %v964 = vunpack.c.l.b16 %v261
    %v965 = vunpack.c.h.b16 %v261
    %v966 = vunpack.c.l.b16 %v262
    %v967 = vunpack.c.h.b16 %v262
    %v968 = vunpack.c.l.b16 %v263
    %v969 = vunpack.c.h.b16 %v263
    %v970 = vunpack.c.l.b16 %v264
    %v971 = vunpack.c.h.b16 %v264
    %v972 = vunpack.c.l.b16 %v265
    %v973 = vunpack.c.h.b16 %v265
    %v974 = vunpack.c.l.b16 %v266
    %v975 = vunpack.c.h.b16 %v266
    %v976 = vunpack.c.l.b16 %v267
    %v977 = vunpack.c.h.b16 %v267
    %v978 = vunpack.c.l.b16 %v268
    %v979 = vunpack.c.h.b16 %v268
    %v980 = vunpack.c.l.b16 %v269
    %v981 = vunpack.c.h.b16 %v269
    %v982 = vunpack.c.l.b16 %v270
    %v983 = vunpack.c.h.b16 %v270
    %v984 = vunpack.c.l.b16 %v271
    %v985 = vunpack.c.h.b16 %v271
    %v986 = vunpack.c.l.b16 %v272
    %v987 = vunpack.c.h.b16 %v272
    %v988 = vunpack.c.l.b16 %v273
    %v989 = vunpack.c.h.b16 %v273
    %v990 = vunpack.c.l.b16 %v274
    %v991 = vunpack.c.h.b16 %v274
    %v992 = vunpack.c.l.b16 %v275
    %v993 = vunpack.c.h.b16 %v275
    %v994 = vunpack.c.l.b16 %v276
    %v995 = vunpack.c.h.b16 %v276
    %v996 = vunpack.c.l.b16 %v277
    %v997 = vunpack.c.h.b16 %v277
    %v998 = vunpack.c.l.b16 %v278
    %v999 = vunpack.c.h.b16 %v278
    %v1000 = vunpack.c.l.b16 %v279
    %v1001 = vunpack.c.h.b16 %v279
    %v1002 = vunpack.c.l.b16 %v280
    %v1003 = vunpack.c.h.b16 %v280
    %v1004 = vunpack.c.l.b16 %v281
    %v1005 = vunpack.c.h.b16 %v281
    %v1006 = vunpack.c.l.b16 %v282
    %v1007 = vunpack.c.h.b16 %v282
    %v1008 = vunpack.c.l.b16 %v283
    %v1009 = vunpack.c.h.b16 %v283
    %v1010 = vunpack.c.l.b16 %v284
    %v1011 = vunpack.c.h.b16 %v284
    %v1012 = vunpack.c.l.b16 %v285
    %v1013 = vunpack.c.h.b16 %v285
    %v1014 = vunpack.c.l.b16 %v286
    %v1015 = vunpack.c.h.b16 %v286
    %v1016 = vunpack.c.l.b16 %v287
    %v1017 = vunpack.c.h.b16 %v287
    %v1018 = vunpack.c.l.b16 %v288
    %v1019 = vunpack.c.h.b16 %v288
    %v1020 = vunpack.c.l.b16 %v289
    %v1021 = vunpack.c.h.b16 %v289
    %v1022 = vunpack.c.l.b16 %v290
    %v1023 = vunpack.c.h.b16 %v290
    %v1024 = vunpack.c.l.b16 %v291
    %v1025 = vunpack.c.h.b16 %v291
    %v1026 = vunpack.c.l.b16 %v292
    %v1027 = vunpack.c.h.b16 %v292
    %v1028 = vunpack.c.l.b16 %v293
    %v1029 = vunpack.c.h.b16 %v293
    %v1030 = vunpack.c.l.b16 %v294
    %v1031 = vunpack.c.h.b16 %v294
    %v1032 = vunpack.c.l.b16 %v295
    %v1033 = vunpack.c.h.b16 %v295
    %v1034 = vunpack.c.l.b16 %v296
    %v1035 = vunpack.c.h.b16 %v296
    %v1036 = vunpack.c.l.b16 %v297
    %v1037 = vunpack.c.h.b16 %v297
    %v1038 = vunpack.c.l.b16 %v298
    %v1039 = vunpack.c.h.b16 %v298
    %v1040 = vunpack.c.l.b16 %v299
    %v1041 = vunpack.c.h.b16 %v299
    %v1042 = vunpack.c.l.b16 %v300
    %v1043 = vunpack.c.h.b16 %v300
    %v1044 = vunpack.c.l.b16 %v301
    %v1045 = vunpack.c.h.b16 %v301
    %v1046 = vunpack.c.l.b16 %v302
    %v1047 = vunpack.c.h.b16 %v302
    %v1048 = vunpack.c.l.b16 %v303
    %v1049 = vunpack.c.h.b16 %v303
    %v1050 = vunpack.c.l.b16 %v304
    %v1051 = vunpack.c.h.b16 %v304
    %v1052 = vunpack.c.l.b16 %v305
    %v1053 = vunpack.c.h.b16 %v305
    %v1054 = vunpack.c.l.b16 %v306
    %v1055 = vunpack.c.h.b16 %v306
    %v1056 = vunpack.c.l.b16 %v307
    %v1057 = vunpack.c.h.b16 %v307
    %v1058 = vunpack.c.l.b16 %v308
    %v1059 = vunpack.c.h.b16 %v308
    %v1060 = vunpack.c.l.b16 %v309
    %v1061 = vunpack.c.h.b16 %v309
    %v1062 = vunpack.c.l.b16 %v310
    %v1063 = vunpack.c.h.b16 %v310
    %v1064 = vunpack.c.l.b16 %v311
    %v1065 = vunpack.c.h.b16 %v311
    %v1066 = vunpack.c.l.b16 %v312
    %v1067 = vunpack.c.h.b16 %v312
    %v1068 = vunpack.c.l.b16 %v313
    %v1069 = vunpack.c.h.b16 %v313
    %v1070 = vunpack.c.l.b16 %v314
    %v1071 = vunpack.c.h.b16 %v314
    %v1072 = vunpack.c.l.b16 %v315
    %v1073 = vunpack.c.h.b16 %v315
    %v1074 = vunpack.c.l.b16 %v316
    %v1075 = vunpack.c.h.b16 %v316
    %v1076 = vunpack.c.l.b16 %v317
    %v1077 = vunpack.c.h.b16 %v317
    %v1078 = vunpack.c.l.b16 %v318
    %v1079 = vunpack.c.h.b16 %v318
    %v1080 = vunpack.c.l.b16 %v319
    %v1081 = vunpack.c.h.b16 %v319
    %v1082 = vunpack.c.l.b16 %v320
    %v1083 = vunpack.c.h.b16 %v320
    %v1084 = vunpack.c.l.b16 %v321
    %v1085 = vunpack.c.h.b16 %v321
    %v1086 = vunpack.c.l.b16 %v322
    %v1087 = vunpack.c.h.b16 %v322
    %v1088 = vunpack.c.l.b16 %v323
    %v1089 = vunpack.c.h.b16 %v323
    %v1090 = vunpack.c.l.b16 %v324
    %v1091 = vunpack.c.h.b16 %v324
    %v1092 = vunpack.c.l.b16 %v325
    %v1093 = vunpack.c.h.b16 %v325
    %v1094 = vunpack.c.l.b16 %v326
    %v1095 = vunpack.c.h.b16 %v326
    %v1096 = vunpack.c.l.b16 %v327
    %v1097 = vunpack.c.h.b16 %v327
    %v1098 = vunpack.c.l.b16 %v328
    %v1099 = vunpack.c.h.b16 %v328
    %v1100 = vunpack.c.l.b16 %v329
    %v1101 = vunpack.c.h.b16 %v329
    %v1102 = vunpack.c.l.b16 %v330
    %v1103 = vunpack.c.h.b16 %v330
    %v1104 = vunpack.c.l.b16 %v331
    %v1105 = vunpack.c.h.b16 %v331
    %v1106 = vunpack.c.l.b16 %v332
    %v1107 = vunpack.c.h.b16 %v332
    %v1108 = vunpack.c.l.b16 %v333
    %v1109 = vunpack.c.h.b16 %v333
    %v1110 = vunpack.c.l.b16 %v334
    %v1111 = vunpack.c.h.b16 %v334
    %v1112 = vunpack.c.l.b16 %v335
    %v1113 = vunpack.c.h.b16 %v335
    %v1114 = vunpack.c.l.b16 %v336
    %v1115 = vunpack.c.h.b16 %v336
    %v1116 = vunpack.c.l.b16 %v337
    %v1117 = vunpack.c.h.b16 %v337
    %v1118 = vunpack.c.l.b16 %v338
    %v1119 = vunpack.c.h.b16 %v338
    %v1120 = vunpack.c.l.b16 %v339
    %v1121 = vunpack.c.h.b16 %v339
    %v1122 = vunpack.c.l.b16 %v340
    %v1123 = vunpack.c.h.b16 %v340
    %v1124 = vunpack.c.l.b16 %v341
    %v1125 = vunpack.c.h.b16 %v341
    %v1126 = vunpack.c.l.b16 %v342
    %v1127 = vunpack.c.h.b16 %v342
    %v1128 = vunpack.c.l.b16 %v343
    %v1129 = vunpack.c.h.b16 %v343
    %v1130 = vunpack.c.l.b16 %v344
    %v1131 = vunpack.c.h.b16 %v344
    %v1132 = vunpack.c.l.b16 %v345
    %v1133 = vunpack.c.h.b16 %v345
    %v1134 = vunpack.c.l.b16 %v346
    %v1135 = vunpack.c.h.b16 %v346
    %v1136 = vunpack.c.l.b16 %v347
    %v1137 = vunpack.c.h.b16 %v347
    %v1138 = vpack.c.b16 %v630, %v626
    %v1139 = vpack.c.b16 %v631, %v627
    %v1140 = vpack.c.b16 %v632, %v628
    %v1141 = vpack.c.b16 %v633, %v629
    %v1142 = vpack.c.b16 %v638, %v634
    %v1143 = vpack.c.b16 %v639, %v635
    %v1144 = vpack.c.b16 %v640, %v636
    %v1145 = vpack.c.b16 %v641, %v637
    %v1146 = vpack.c.b16 %v646, %v642
    %v1147 = vpack.c.b16 %v647, %v643
    %v1148 = vpack.c.b16 %v648, %v644
    %v1149 = vpack.c.b16 %v649, %v645
    %v1150 = vpack.c.b16 %v654, %v650
    %v1151 = vpack.c.b16 %v655, %v651
    %v1152 = vpack.c.b16 %v656, %v652
    %v1153 = vpack.c.b16 %v657, %v653
    %v1154 = vpack.c.b16 %v662, %v658
    %v1155 = vpack.c.b16 %v663, %v659
    %v1156 = vpack.c.b16 %v664, %v660
    %v1157 = vpack.c.b16 %v665, %v661
    %v1158 = vpack.c.b16 %v670, %v666
    %v1159 = vpack.c.b16 %v671, %v667
    %v1160 = vpack.c.b16 %v672, %v668
    %v1161 = vpack.c.b16 %v673, %v669
    %v1162 = vpack.c.b16 %v678, %v674
    %v1163 = vpack.c.b16 %v679, %v675
    %v1164 = vpack.c.b16 %v680, %v676
    %v1165 = vpack.c.b16 %v681, %v677
    %v1166 = vpack.c.b16 %v686, %v682
    %v1167 = vpack.c.b16 %v687, %v683
    %v1168 = vpack.c.b16 %v688, %v684
    %v1169 = vpack.c.b16 %v689, %v685
    %v1170 = vpack.c.b16 %v694, %v690
    %v1171 = vpack.c.b16 %v695, %v691
    %v1172 = vpack.c.b16 %v696, %v692
    %v1173 = vpack.c.b16 %v697, %v693
    %v1174 = vpack.c.b16 %v702, %v698
    %v1175 = vpack.c.b16 %v703, %v699
    %v1176 = vpack.c.b16 %v704, %v700
    %v1177 = vpack.c.b16 %v705, %v701
    %v1178 = vpack.c.b16 %v710, %v706
    %v1179 = vpack.c.b16 %v711, %v707
    %v1180 = vpack.c.b16 %v712, %v708
    %v1181 = vpack.c.b16 %v713, %v709
    %v1182 = vpack.c.b16 %v718, %v714
    %v1183 = vpack.c.b16 %v719, %v715
    %v1184 = vpack.c.b16 %v720, %v716
    %v1185 = vpack.c.b16 %v721, %v717
    %v1186 = vpack.c.b16 %v726, %v722
    %v1187 = vpack.c.b16 %v727, %v723
    %v1188 = vpack.c.b16 %v728, %v724
    %v1189 = vpack.c.b16 %v729, %v725
    %v1190 = vpack.c.b16 %v734, %v730
    %v1191 = vpack.c.b16 %v735, %v731
    %v1192 = vpack.c.b16 %v736, %v732
    %v1193 = vpack.c.b16 %v737, %v733
    %v1194 = vpack.c.b16 %v742, %v738
    %v1195 = vpack.c.b16 %v743, %v739
    %v1196 = vpack.c.b16 %v744, %v740
    %v1197 = vpack.c.b16 %v745, %v741
    %v1198 = vpack.c.b16 %v750, %v746
    %v1199 = vpack.c.b16 %v751, %v747
    %v1200 = vpack.c.b16 %v752, %v748
    %v1201 = vpack.c.b16 %v753, %v749
    %v1202 = vpack.c.b16 %v758, %v754
    %v1203 = vpack.c.b16 %v759, %v755
    %v1204 = vpack.c.b16 %v760, %v756
    %v1205 = vpack.c.b16 %v761, %v757
    %v1206 = vpack.c.b16 %v766, %v762
    %v1207 = vpack.c.b16 %v767, %v763
    %v1208 = vpack.c.b16 %v768, %v764
    %v1209 = vpack.c.b16 %v769, %v765
    %v1210 = vpack.c.b16 %v774, %v770
    %v1211 = vpack.c.b16 %v775, %v771
    %v1212 = vpack.c.b16 %v776, %v772
    %v1213 = vpack.c.b16 %v777, %v773
    %v1214 = vpack.c.b16 %v782, %v778
    %v1215 = vpack.c.b16 %v783, %v779
    %v1216 = vpack.c.b16 %v784, %v780
    %v1217 = vpack.c.b16 %v785, %v781
    %v1218 = vpack.c.b16 %v790, %v786
    %v1219 = vpack.c.b16 %v791, %v787
    %v1220 = vpack.c.b16 %v792, %v788
    %v1221 = vpack.c.b16 %v793, %v789
    %v1222 = vpack.c.b16 %v798, %v794
    %v1223 = vpack.c.b16 %v799, %v795
    %v1224 = vpack.c.b16 %v800, %v796
    %v1225 = vpack.c.b16 %v801, %v797
    %v1226 = vpack.c.b16 %v806, %v802
    %v1227 = vpack.c.b16 %v807, %v803
    %v1228 = vpack.c.b16 %v808, %v804
    %v1229 = vpack.c.b16 %v809, %v805
    %v1230 = vpack.c.b16 %v814, %v810
    %v1231 = vpack.c.b16 %v815, %v811
    %v1232 = vpack.c.b16 %v816, %v812
    %v1233 = vpack.c.b16 %v817, %v813
    %v1234 = vpack.c.b16 %v822, %v818
    %v1235 = vpack.c.b16 %v823, %v819
    %v1236 = vpack.c.b16 %v824, %v820
    %v1237 = vpack.c.b16 %v825, %v821
    %v1238 = vpack.c.b16 %v830, %v826
    %v1239 = vpack.c.b16 %v831, %v827
    %v1240 = vpack.c.b16 %v832, %v828
    %v1241 = vpack.c.b16 %v833, %v829
    %v1242 = vpack.c.b16 %v838, %v834
    %v1243 = vpack.c.b16 %v839, %v835
    %v1244 = vpack.c.b16 %v840, %v836
    %v1245 = vpack.c.b16 %v841, %v837
    %v1246 = vpack.c.b16 %v846, %v842
    %v1247 = vpack.c.b16 %v847, %v843
    %v1248 = vpack.c.b16 %v848, %v844
    %v1249 = vpack.c.b16 %v849, %v845
    %v1250 = vpack.c.b16 %v854, %v850
    %v1251 = vpack.c.b16 %v855, %v851
    %v1252 = vpack.c.b16 %v856, %v852
    %v1253 = vpack.c.b16 %v857, %v853
    %v1254 = vpack.c.b16 %v862, %v858
    %v1255 = vpack.c.b16 %v863, %v859
    %v1256 = vpack.c.b16 %v864, %v860
    %v1257 = vpack.c.b16 %v865, %v861
    %v1258 = vpack.c.b16 %v870, %v866
    %v1259 = vpack.c.b16 %v871, %v867
    %v1260 = vpack.c.b16 %v872, %v868
    %v1261 = vpack.c.b16 %v873, %v869
    %v1262 = vpack.c.b16 %v878, %v874
    %v1263 = vpack.c.b16 %v879, %v875
    %v1264 = vpack.c.b16 %v880, %v876
    %v1265 = vpack.c.b16 %v881, %v877
    %v1266 = vpack.c.b16 %v886, %v882
    %v1267 = vpack.c.b16 %v887, %v883
    %v1268 = vpack.c.b16 %v888, %v884
    %v1269 = vpack.c.b16 %v889, %v885
    %v1270 = vpack.c.b16 %v894, %v890
    %v1271 = vpack.c.b16 %v895, %v891
    %v1272 = vpack.c.b16 %v896, %v892
    %v1273 = vpack.c.b16 %v897, %v893
    %v1274 = vpack.c.b16 %v902, %v898
    %v1275 = vpack.c.b16 %v903, %v899
    %v1276 = vpack.c.b16 %v904, %v900
    %v1277 = vpack.c.b16 %v905, %v901
    %v1278 = vpack.c.b16 %v910, %v906
    %v1279 = vpack.c.b16 %v911, %v907
    %v1280 = vpack.c.b16 %v912, %v908
    %v1281 = vpack.c.b16 %v913, %v909
    %v1282 = vpack.c.b16 %v918, %v914
    %v1283 = vpack.c.b16 %v919, %v915
    %v1284 = vpack.c.b16 %v920, %v916
    %v1285 = vpack.c.b16 %v921, %v917
    %v1286 = vpack.c.b16 %v926, %v922
    %v1287 = vpack.c.b16 %v927, %v923
    %v1288 = vpack.c.b16 %v928, %v924
    %v1289 = vpack.c.b16 %v929, %v925
    %v1290 = vpack.c.b16 %v934, %v930
    %v1291 = vpack.c.b16 %v935, %v931
    %v1292 = vpack.c.b16 %v936, %v932
    %v1293 = vpack.c.b16 %v937, %v933
    %v1294 = vpack.c.b16 %v942, %v938
    %v1295 = vpack.c.b16 %v943, %v939
    %v1296 = vpack.c.b16 %v944, %v940
    %v1297 = vpack.c.b16 %v945, %v941
    %v1298 = vpack.c.b16 %v950, %v946
    %v1299 = vpack.c.b16 %v951, %v947
    %v1300 = vpack.c.b16 %v952, %v948
    %v1301 = vpack.c.b16 %v953, %v949
    %v1302 = vpack.c.b16 %v958, %v954
    %v1303 = vpack.c.b16 %v959, %v955
    %v1304 = vpack.c.b16 %v960, %v956
    %v1305 = vpack.c.b16 %v961, %v957
    %v1306 = vpack.c.b16 %v966, %v962
    %v1307 = vpack.c.b16 %v967, %v963
    %v1308 = vpack.c.b16 %v968, %v964
    %v1309 = vpack.c.b16 %v969, %v965
    %v1310 = vpack.c.b16 %v974, %v970
    %v1311 = vpack.c.b16 %v975, %v971
    %v1312 = vpack.c.b16 %v976, %v972
    %v1313 = vpack.c.b16 %v977, %v973
    %v1314 = vpack.c.b16 %v982, %v978
    %v1315 = vpack.c.b16 %v983, %v979
    %v1316 = vpack.c.b16 %v984, %v980
    %v1317 = vpack.c.b16 %v985, %v981
    %v1318 = vpack.c.b16 %v990, %v986
    %v1319 = vpack.c.b16 %v991, %v987
    %v1320 = vpack.c.b16 %v992, %v988
    %v1321 = vpack.c.b16 %v993, %v989
    %v1322 = vpack.c.b16 %v998, %v994
    %v1323 = vpack.c.b16 %v999, %v995
    %v1324 = vpack.c.b16 %v1000, %v996
    %v1325 = vpack.c.b16 %v1001, %v997
    %v1326 = vpack.c.b16 %v1006, %v1002
    %v1327 = vpack.c.b16 %v1007, %v1003
    %v1328 = vpack.c.b16 %v1008, %v1004
    %v1329 = vpack.c.b16 %v1009, %v1005
    %v1330 = vpack.c.b16 %v1014, %v1010
    %v1331 = vpack.c.b16 %v1015, %v1011
    %v1332 = vpack.c.b16 %v1016, %v1012
    %v1333 = vpack.c.b16 %v1017, %v1013
    %v1334 = vpack.c.b16 %v1022, %v1018
    %v1335 = vpack.c.b16 %v1023, %v1019
    %v1336 = vpack.c.b16 %v1024, %v1020
    %v1337 = vpack.c.b16 %v1025, %v1021
    %v1338 = vpack.c.b16 %v1030, %v1026
    %v1339 = vpack.c.b16 %v1031, %v1027
    %v1340 = vpack.c.b16 %v1032, %v1028
    %v1341 = vpack.c.b16 %v1033, %v1029
    %v1342 = vpack.c.b16 %v1038, %v1034
    %v1343 = vpack.c.b16 %v1039, %v1035
    %v1344 = vpack.c.b16 %v1040, %v1036
    %v1345 = vpack.c.b16 %v1041, %v1037
    %v1346 = vpack.c.b16 %v1046, %v1042
    %v1347 = vpack.c.b16 %v1047, %v1043
    %v1348 = vpack.c.b16 %v1048, %v1044
    %v1349 = vpack.c.b16 %v1049, %v1045
    %v1350 = vpack.c.b16 %v1054, %v1050
    %v1351 = vpack.c.b16 %v1055, %v1051
    %v1352 = vpack.c.b16 %v1056, %v1052
    %v1353 = vpack.c.b16 %v1057, %v1053
    %v1354 = vpack.c.b16 %v1062, %v1058
    %v1355 = vpack.c.b16 %v1063, %v1059
    %v1356 = vpack.c.b16 %v1064, %v1060
    %v1357 = vpack.c.b16 %v1065, %v1061
    %v1358 = vpack.c.b16 %v1070, %v1066
    %v1359 = vpack.c.b16 %v1071, %v1067
    %v1360 = vpack.c.b16 %v1072, %v1068
    %v1361 = vpack.c.b16 %v1073, %v1069
    %v1362 = vpack.c.b16 %v1078, %v1074
    %v1363 = vpack.c.b16 %v1079, %v1075
    %v1364 = vpack.c.b16 %v1080, %v1076
    %v1365 = vpack.c.b16 %v1081, %v1077
    %v1366 = vpack.c.b16 %v1086, %v1082
    %v1367 = vpack.c.b16 %v1087, %v1083
    %v1368 = vpack.c.b16 %v1088, %v1084
    %v1369 = vpack.c.b16 %v1089, %v1085
    %v1370 = vpack.c.b16 %v1094, %v1090
    %v1371 = vpack.c.b16 %v1095, %v1091
    %v1372 = vpack.c.b16 %v1096, %v1092
    %v1373 = vpack.c.b16 %v1097, %v1093
    %v1374 = vpack.c.b16 %v1102, %v1098
    %v1375 = vpack.c.b16 %v1103, %v1099
    %v1376 = vpack.c.b16 %v1104, %v1100
    %v1377 = vpack.c.b16 %v1105, %v1101
    %v1378 = vpack.c.b16 %v1110, %v1106
    %v1379 = vpack.c.b16 %v1111, %v1107
    %v1380 = vpack.c.b16 %v1112, %v1108
    %v1381 = vpack.c.b16 %v1113, %v1109
    %v1382 = vpack.c.b16 %v1118, %v1114
    %v1383 = vpack.c.b16 %v1119, %v1115
    %v1384 = vpack.c.b16 %v1120, %v1116
    %v1385 = vpack.c.b16 %v1121, %v1117
    %v1386 = vpack.c.b16 %v1126, %v1122
    %v1387 = vpack.c.b16 %v1127, %v1123
    %v1388 = vpack.c.b16 %v1128, %v1124
    %v1389 = vpack.c.b16 %v1129, %v1125
    %v1390 = vpack.c.b16 %v1134, %v1130
    %v1391 = vpack.c.b16 %v1135, %v1131
    %v1392 = vpack.c.b16 %v1136, %v1132
    %v1393 = vpack.c.b16 %v1137, %v1133
    %1650 = vmatprep.subr.bf16.mxu0 %v1139
    %1651 = vmatpush1.bf16.msra.mxu0 %v1138
    %1652 = vmatprep.subr.bf16.mxu0 %v1143
    %1653 = vmatpush1.bf16.msra.mxu0 %v1142
    %1654 = vmatprep.subr.bf16.mxu0 %v1147
    %1655 = vmatpush1.bf16.msra.mxu0 %v1146
    %1656 = vmatprep.subr.bf16.mxu0 %v1151
    %1657 = vmatpush1.bf16.msra.mxu0 %v1150
    %1658 = vmatprep.subr.bf16.mxu0 %v1155
    %1659 = vmatpush1.bf16.msra.mxu0 %v1154
    %1660 = vmatprep.subr.bf16.mxu0 %v1159
    %1661 = vmatpush1.bf16.msra.mxu0 %v1158
    %1662 = vmatprep.subr.bf16.mxu0 %v1163
    %1663 = vmatpush1.bf16.msra.mxu0 %v1162
    %1664 = vmatprep.subr.bf16.mxu0 %v1167
    %1665 = vmatpush1.bf16.msra.mxu0 %v1166
    %1666 = vmatprep.subr.bf16.mxu0 %v1171
    %1667 = vmatpush1.bf16.msra.mxu0 %v1170
    %1668 = vmatprep.subr.bf16.mxu0 %v1175
    %1669 = vmatpush1.bf16.msra.mxu0 %v1174
    %1670 = vmatprep.subr.bf16.mxu0 %v1179
    %1671 = vmatpush1.bf16.msra.mxu0 %v1178
    %1672 = vmatprep.subr.bf16.mxu0 %v1183
    %1673 = vmatpush1.bf16.msra.mxu0 %v1182
    %1674 = vmatprep.subr.bf16.mxu0 %v1187
    %1675 = vmatpush1.bf16.msra.mxu0 %v1186
    %1676 = vmatprep.subr.bf16.mxu0 %v1191
    %1677 = vmatpush1.bf16.msra.mxu0 %v1190
    %1678 = vmatprep.subr.bf16.mxu0 %v1195
    %1679 = vmatpush1.bf16.msra.mxu0 %v1194
    %1680 = vmatprep.subr.bf16.mxu0 %v1199
    %1681 = vmatpush1.bf16.msra.mxu0 %v1198
    %1682 = vmatprep.mubr.bf16.mxu0 %v85
    %1683 = vmatmul.mubr.bf16.gmra.mrb[0].mxu0 %v84
    %v1684 = vpop.f32.mrb[0].mxu0
    %v1685 = vadd.f32 %v353, %v1684
    %v1686 = vpop.f32.mrb[0].mxu0
    %v1687 = vadd.f32 %v357, %v1686
    %v1688 = vpop.f32.mrb[0].mxu0
    %v1689 = vadd.f32 %v353, %v1688
    %v1690 = vpop.f32.mrb[0].mxu0
    %v1691 = vadd.f32 %v357, %v1690
    %1692 = vdwg.mxu0
    %1693 = vmatprep.subr.bf16.mxu0 %v1203
    %1694 = vmatpush1.bf16.msra.mxu0 %v1202
    %1695 = vmatprep.subr.bf16.mxu0 %v1207
    %1696 = vmatpush1.bf16.msra.mxu0 %v1206
    %1697 = vmatprep.subr.bf16.mxu0 %v1211
    %1698 = vmatpush1.bf16.msra.mxu0 %v1210
    %1699 = vmatprep.subr.bf16.mxu0 %v1215
    %1700 = vmatpush1.bf16.msra.mxu0 %v1214
    %1701 = vmatprep.subr.bf16.mxu0 %v1219
    %1702 = vmatpush1.bf16.msra.mxu0 %v1218
    %1703 = vmatprep.subr.bf16.mxu0 %v1223
    %1704 = vmatpush1.bf16.msra.mxu0 %v1222
    %1705 = vmatprep.subr.bf16.mxu0 %v1227
    %1706 = vmatpush1.bf16.msra.mxu0 %v1226
    %1707 = vmatprep.subr.bf16.mxu0 %v1231
    %1708 = vmatpush1.bf16.msra.mxu0 %v1230
    %1709 = vmatprep.subr.bf16.mxu0 %v1235
    %1710 = vmatpush1.bf16.msra.mxu0 %v1234
    %1711 = vmatprep.subr.bf16.mxu0 %v1239
    %1712 = vmatpush1.bf16.msra.mxu0 %v1238
    %1713 = vmatprep.subr.bf16.mxu0 %v1243
    %1714 = vmatpush1.bf16.msra.mxu0 %v1242
    %1715 = vmatprep.subr.bf16.mxu0 %v1247
    %1716 = vmatpush1.bf16.msra.mxu0 %v1246
    %1717 = vmatprep.subr.bf16.mxu0 %v1251
    %1718 = vmatpush1.bf16.msra.mxu0 %v1250
    %1719 = vmatprep.subr.bf16.mxu0 %v1255
    %1720 = vmatpush1.bf16.msra.mxu0 %v1254
    %1721 = vmatprep.subr.bf16.mxu0 %v1259
    %1722 = vmatpush1.bf16.msra.mxu0 %v1258
    %1723 = vmatprep.subr.bf16.mxu0 %v1263
    %1724 = vmatpush1.bf16.msra.mxu0 %v1262
    %1725 = vmatprep.mubr.bf16.mxu0 %v87
    %1726 = vmatmul.mubr.bf16.gmra.mrb[0].mxu0 %v86
    %v1727 = vpop.f32.mrb[0].mxu0
    %v1728 = vadd.f32 %v1685, %v1727
    %v1729 = vpop.f32.mrb[0].mxu0
    %v1730 = vadd.f32 %v1687, %v1729
    %v1731 = vpop.f32.mrb[0].mxu0
    %v1732 = vadd.f32 %v1689, %v1731
    %v1733 = vpop.f32.mrb[0].mxu0
    %v1734 = vadd.f32 %v1691, %v1733
    %1735 = vdwg.mxu0
    %1736 = vmatprep.subr.bf16.mxu0 %v1267
    %1737 = vmatpush1.bf16.msra.mxu0 %v1266
    %1738 = vmatprep.subr.bf16.mxu0 %v1271
    %1739 = vmatpush1.bf16.msra.mxu0 %v1270
    %1740 = vmatprep.subr.bf16.mxu0 %v1275
    %1741 = vmatpush1.bf16.msra.mxu0 %v1274
    %1742 = vmatprep.subr.bf16.mxu0 %v1279
    %1743 = vmatpush1.bf16.msra.mxu0 %v1278
    %1744 = vmatprep.subr.bf16.mxu0 %v1283
    %1745 = vmatpush1.bf16.msra.mxu0 %v1282
    %1746 = vmatprep.subr.bf16.mxu0 %v1287
    %1747 = vmatpush1.bf16.msra.mxu0 %v1286
    %1748 = vmatprep.subr.bf16.mxu0 %v1291
    %1749 = vmatpush1.bf16.msra.mxu0 %v1290
    %1750 = vmatprep.subr.bf16.mxu0 %v1295
    %1751 = vmatpush1.bf16.msra.mxu0 %v1294
    %1752 = vmatprep.subr.bf16.mxu0 %v1299
    %1753 = vmatpush1.bf16.msra.mxu0 %v1298
    %1754 = vmatprep.subr.bf16.mxu0 %v1303
    %1755 = vmatpush1.bf16.msra.mxu0 %v1302
    %1756 = vmatprep.subr.bf16.mxu0 %v1307
    %1757 = vmatpush1.bf16.msra.mxu0 %v1306
    %1758 = vmatprep.subr.bf16.mxu0 %v1311
    %1759 = vmatpush1.bf16.msra.mxu0 %v1310
    %1760 = vmatprep.subr.bf16.mxu0 %v1315
    %1761 = vmatpush1.bf16.msra.mxu0 %v1314
    %1762 = vmatprep.subr.bf16.mxu0 %v1319
    %1763 = vmatpush1.bf16.msra.mxu0 %v1318
    %1764 = vmatprep.subr.bf16.mxu0 %v1323
    %1765 = vmatpush1.bf16.msra.mxu0 %v1322
    %1766 = vmatprep.subr.bf16.mxu0 %v1327
    %1767 = vmatpush1.bf16.msra.mxu0 %v1326
    %1768 = vmatprep.mubr.bf16.mxu0 %v89
    %1769 = vmatmul.mubr.bf16.gmra.mrb[0].mxu0 %v88
    %v1770 = vpop.f32.mrb[0].mxu0
    %v1771 = vadd.f32 %v1728, %v1770
    %v1772 = vpop.f32.mrb[0].mxu0
    %v1773 = vadd.f32 %v1730, %v1772
    %v1774 = vpop.f32.mrb[0].mxu0
    %v1775 = vadd.f32 %v1732, %v1774
    %v1776 = vpop.f32.mrb[0].mxu0
    %v1777 = vadd.f32 %v1734, %v1776
    %1778 = vdwg.mxu0
    %1779 = vmatprep.subr.bf16.mxu0 %v1331
    %1780 = vmatpush1.bf16.msra.mxu0 %v1330
    %1781 = vmatprep.subr.bf16.mxu0 %v1335
    %1782 = vmatpush1.bf16.msra.mxu0 %v1334
    %1783 = vmatprep.subr.bf16.mxu0 %v1339
    %1784 = vmatpush1.bf16.msra.mxu0 %v1338
    %1785 = vmatprep.subr.bf16.mxu0 %v1343
    %1786 = vmatpush1.bf16.msra.mxu0 %v1342
    %1787 = vmatprep.subr.bf16.mxu0 %v1347
    %1788 = vmatpush1.bf16.msra.mxu0 %v1346
    %1789 = vmatprep.subr.bf16.mxu0 %v1351
    %1790 = vmatpush1.bf16.msra.mxu0 %v1350
    %1791 = vmatprep.subr.bf16.mxu0 %v1355
    %1792 = vmatpush1.bf16.msra.mxu0 %v1354
    %1793 = vmatprep.subr.bf16.mxu0 %v1359
    %1794 = vmatpush1.bf16.msra.mxu0 %v1358
    %1795 = vmatprep.subr.bf16.mxu0 %v1363
    %1796 = vmatpush1.bf16.msra.mxu0 %v1362
    %1797 = vmatprep.subr.bf16.mxu0 %v1367
    %1798 = vmatpush1.bf16.msra.mxu0 %v1366
    %1799 = vmatprep.subr.bf16.mxu0 %v1371
    %1800 = vmatpush1.bf16.msra.mxu0 %v1370
    %1801 = vmatprep.subr.bf16.mxu0 %v1375
    %1802 = vmatpush1.bf16.msra.mxu0 %v1374
    %1803 = vmatprep.subr.bf16.mxu0 %v1379
    %1804 = vmatpush1.bf16.msra.mxu0 %v1378
    %1805 = vmatprep.subr.bf16.mxu0 %v1383
    %1806 = vmatpush1.bf16.msra.mxu0 %v1382
    %1807 = vmatprep.subr.bf16.mxu0 %v1387
    %1808 = vmatpush1.bf16.msra.mxu0 %v1386
    %1809 = vmatprep.subr.bf16.mxu0 %v1391
    %1810 = vmatpush1.bf16.msra.mxu0 %v1390
    %1811 = vmatprep.mubr.bf16.mxu0 %v91
    %1812 = vmatmul.mubr.bf16.gmra.mrb[0].mxu0 %v90
    %v1813 = vpop.f32.mrb[0].mxu0
    %v1814 = vadd.f32 %v1771, %v1813
    %v1815 = vpop.f32.mrb[0].mxu0
    %v1816 = vadd.f32 %v1773, %v1815
    %v1817 = vpop.f32.mrb[0].mxu0
    %v1818 = vadd.f32 %v1775, %v1817
    %v1819 = vpop.f32.mrb[0].mxu0
    %v1820 = vadd.f32 %v1777, %v1819
    %1821 = vdwg.mxu0
    %1822 = vmatprep.subr.bf16.mxu0 %v1141
    %1823 = vmatpush1.bf16.msra.mxu0 %v1140
    %1824 = vmatprep.subr.bf16.mxu0 %v1145
    %1825 = vmatpush1.bf16.msra.mxu0 %v1144
    %1826 = vmatprep.subr.bf16.mxu0 %v1149
    %1827 = vmatpush1.bf16.msra.mxu0 %v1148
    %1828 = vmatprep.subr.bf16.mxu0 %v1153
    %1829 = vmatpush1.bf16.msra.mxu0 %v1152
    %1830 = vmatprep.subr.bf16.mxu0 %v1157
    %1831 = vmatpush1.bf16.msra.mxu0 %v1156
    %1832 = vmatprep.subr.bf16.mxu0 %v1161
    %1833 = vmatpush1.bf16.msra.mxu0 %v1160
    %1834 = vmatprep.subr.bf16.mxu0 %v1165
    %1835 = vmatpush1.bf16.msra.mxu0 %v1164
    %1836 = vmatprep.subr.bf16.mxu0 %v1169
    %1837 = vmatpush1.bf16.msra.mxu0 %v1168
    %1838 = vmatprep.subr.bf16.mxu0 %v1173
    %1839 = vmatpush1.bf16.msra.mxu0 %v1172
    %1840 = vmatprep.subr.bf16.mxu0 %v1177
    %1841 = vmatpush1.bf16.msra.mxu0 %v1176
    %1842 = vmatprep.subr.bf16.mxu0 %v1181
    %1843 = vmatpush1.bf16.msra.mxu0 %v1180
    %1844 = vmatprep.subr.bf16.mxu0 %v1185
    %1845 = vmatpush1.bf16.msra.mxu0 %v1184
    %1846 = vmatprep.subr.bf16.mxu0 %v1189
    %1847 = vmatpush1.bf16.msra.mxu0 %v1188
    %1848 = vmatprep.subr.bf16.mxu0 %v1193
    %1849 = vmatpush1.bf16.msra.mxu0 %v1192
    %1850 = vmatprep.subr.bf16.mxu0 %v1197
    %1851 = vmatpush1.bf16.msra.mxu0 %v1196
    %1852 = vmatprep.subr.bf16.mxu0 %v1201
    %1853 = vmatpush1.bf16.msra.mxu0 %v1200
    %1854 = vmatprep.mubr.bf16.mxu0 %v85
    %1855 = vmatmul.mubr.bf16.gmra.mrb[0].mxu0 %v84
    %v1856 = vpop.f32.mrb[0].mxu0
    %v1857 = vadd.f32 %v361, %v1856
    %v1858 = vpop.f32.mrb[0].mxu0
    %v1859 = vadd.f32 %v365, %v1858
    %v1860 = vpop.f32.mrb[0].mxu0
    %v1861 = vadd.f32 %v361, %v1860
    %v1862 = vpop.f32.mrb[0].mxu0
    %v1863 = vadd.f32 %v365, %v1862
    %1864 = vdwg.mxu0
    %1865 = vmatprep.subr.bf16.mxu0 %v1205
    %1866 = vmatpush1.bf16.msra.mxu0 %v1204
    %1867 = vmatprep.subr.bf16.mxu0 %v1209
    %1868 = vmatpush1.bf16.msra.mxu0 %v1208
    %1869 = vmatprep.subr.bf16.mxu0 %v1213
    %1870 = vmatpush1.bf16.msra.mxu0 %v1212
    %1871 = vmatprep.subr.bf16.mxu0 %v1217
    %1872 = vmatpush1.bf16.msra.mxu0 %v1216
    %1873 = vmatprep.subr.bf16.mxu0 %v1221
    %1874 = vmatpush1.bf16.msra.mxu0 %v1220
    %1875 = vmatprep.subr.bf16.mxu0 %v1225
    %1876 = vmatpush1.bf16.msra.mxu0 %v1224
    %1877 = vmatprep.subr.bf16.mxu0 %v1229
    %1878 = vmatpush1.bf16.msra.mxu0 %v1228
    %1879 = vmatprep.subr.bf16.mxu0 %v1233
    %1880 = vmatpush1.bf16.msra.mxu0 %v1232
    %1881 = vmatprep.subr.bf16.mxu0 %v1237
    %1882 = vmatpush1.bf16.msra.mxu0 %v1236
    %1883 = vmatprep.subr.bf16.mxu0 %v1241
    %1884 = vmatpush1.bf16.msra.mxu0 %v1240
    %1885 = vmatprep.subr.bf16.mxu0 %v1245
    %1886 = vmatpush1.bf16.msra.mxu0 %v1244
    %1887 = vmatprep.subr.bf16.mxu0 %v1249
    %1888 = vmatpush1.bf16.msra.mxu0 %v1248
    %1889 = vmatprep.subr.bf16.mxu0 %v1253
    %1890 = vmatpush1.bf16.msra.mxu0 %v1252
    %1891 = vmatprep.subr.bf16.mxu0 %v1257
    %1892 = vmatpush1.bf16.msra.mxu0 %v1256
    %1893 = vmatprep.subr.bf16.mxu0 %v1261
    %1894 = vmatpush1.bf16.msra.mxu0 %v1260
    %1895 = vmatprep.subr.bf16.mxu0 %v1265
    %1896 = vmatpush1.bf16.msra.mxu0 %v1264
    %1897 = vmatprep.mubr.bf16.mxu0 %v87
    %1898 = vmatmul.mubr.bf16.gmra.mrb[0].mxu0 %v86
    %v1899 = vpop.f32.mrb[0].mxu0
    %v1900 = vadd.f32 %v1857, %v1899
    %v1901 = vpop.f32.mrb[0].mxu0
    %v1902 = vadd.f32 %v1859, %v1901
    %v1903 = vpop.f32.mrb[0].mxu0
    %v1904 = vadd.f32 %v1861, %v1903
    %v1905 = vpop.f32.mrb[0].mxu0
    %v1906 = vadd.f32 %v1863, %v1905
    %1907 = vdwg.mxu0
    %1908 = vmatprep.subr.bf16.mxu0 %v1269
    %1909 = vmatpush1.bf16.msra.mxu0 %v1268
    %1910 = vmatprep.subr.bf16.mxu0 %v1273
    %1911 = vmatpush1.bf16.msra.mxu0 %v1272
    %1912 = vmatprep.subr.bf16.mxu0 %v1277
    %1913 = vmatpush1.bf16.msra.mxu0 %v1276
    %1914 = vmatprep.subr.bf16.mxu0 %v1281
    %1915 = vmatpush1.bf16.msra.mxu0 %v1280
    %1916 = vmatprep.subr.bf16.mxu0 %v1285
    %1917 = vmatpush1.bf16.msra.mxu0 %v1284
    %1918 = vmatprep.subr.bf16.mxu0 %v1289
    %1919 = vmatpush1.bf16.msra.mxu0 %v1288
    %1920 = vmatprep.subr.bf16.mxu0 %v1293
    %1921 = vmatpush1.bf16.msra.mxu0 %v1292
    %1922 = vmatprep.subr.bf16.mxu0 %v1297
    %1923 = vmatpush1.bf16.msra.mxu0 %v1296
    %1924 = vmatprep.subr.bf16.mxu0 %v1301
    %1925 = vmatpush1.bf16.msra.mxu0 %v1300
    %1926 = vmatprep.subr.bf16.mxu0 %v1305
    %1927 = vmatpush1.bf16.msra.mxu0 %v1304
    %1928 = vmatprep.subr.bf16.mxu0 %v1309
    %1929 = vmatpush1.bf16.msra.mxu0 %v1308
    %1930 = vmatprep.subr.bf16.mxu0 %v1313
    %1931 = vmatpush1.bf16.msra.mxu0 %v1312
    %1932 = vmatprep.subr.bf16.mxu0 %v1317
    %1933 = vmatpush1.bf16.msra.mxu0 %v1316
    %1934 = vmatprep.subr.bf16.mxu0 %v1321
    %1935 = vmatpush1.bf16.msra.mxu0 %v1320
    %1936 = vmatprep.subr.bf16.mxu0 %v1325
    %1937 = vmatpush1.bf16.msra.mxu0 %v1324
    %1938 = vmatprep.subr.bf16.mxu0 %v1329
    %1939 = vmatpush1.bf16.msra.mxu0 %v1328
    %1940 = vmatprep.mubr.bf16.mxu0 %v89
    %1941 = vmatmul.mubr.bf16.gmra.mrb[0].mxu0 %v88
    %v1942 = vpop.f32.mrb[0].mxu0
    %v1943 = vadd.f32 %v1900, %v1942
    %v1944 = vpop.f32.mrb[0].mxu0
    %v1945 = vadd.f32 %v1902, %v1944
    %v1946 = vpop.f32.mrb[0].mxu0
    %v1947 = vadd.f32 %v1904, %v1946
    %v1948 = vpop.f32.mrb[0].mxu0
    %v1949 = vadd.f32 %v1906, %v1948
    %1950 = vdwg.mxu0
    %1951 = vmatprep.subr.bf16.mxu0 %v1333
    %1952 = vmatpush1.bf16.msra.mxu0 %v1332
    %1953 = vmatprep.subr.bf16.mxu0 %v1337
    %1954 = vmatpush1.bf16.msra.mxu0 %v1336
    %1955 = vmatprep.subr.bf16.mxu0 %v1341
    %1956 = vmatpush1.bf16.msra.mxu0 %v1340
    %1957 = vmatprep.subr.bf16.mxu0 %v1345
    %1958 = vmatpush1.bf16.msra.mxu0 %v1344
    %1959 = vmatprep.subr.bf16.mxu0 %v1349
    %1960 = vmatpush1.bf16.msra.mxu0 %v1348
    %1961 = vmatprep.subr.bf16.mxu0 %v1353
    %1962 = vmatpush1.bf16.msra.mxu0 %v1352
    %1963 = vmatprep.subr.bf16.mxu0 %v1357
    %1964 = vmatpush1.bf16.msra.mxu0 %v1356
    %1965 = vmatprep.subr.bf16.mxu0 %v1361
    %1966 = vmatpush1.bf16.msra.mxu0 %v1360
    %1967 = vmatprep.subr.bf16.mxu0 %v1365
    %1968 = vmatpush1.bf16.msra.mxu0 %v1364
    %1969 = vmatprep.subr.bf16.mxu0 %v1369
    %1970 = vmatpush1.bf16.msra.mxu0 %v1368
    %1971 = vmatprep.subr.bf16.mxu0 %v1373
    %1972 = vmatpush1.bf16.msra.mxu0 %v1372
    %1973 = vmatprep.subr.bf16.mxu0 %v1377
    %1974 = vmatpush1.bf16.msra.mxu0 %v1376
    %1975 = vmatprep.subr.bf16.mxu0 %v1381
    %1976 = vmatpush1.bf16.msra.mxu0 %v1380
    %1977 = vmatprep.subr.bf16.mxu0 %v1385
    %1978 = vmatpush1.bf16.msra.mxu0 %v1384
    %1979 = vmatprep.subr.bf16.mxu0 %v1389
    %1980 = vmatpush1.bf16.msra.mxu0 %v1388
    %1981 = vmatprep.subr.bf16.mxu0 %v1393
    %1982 = vmatpush1.bf16.msra.mxu0 %v1392
    %1983 = vmatprep.mubr.bf16.mxu0 %v91
    %1984 = vmatmul.mubr.bf16.gmra.mrb[0].mxu0 %v90
    %v1985 = vpop.f32.mrb[0].mxu0
    %v1986 = vadd.f32 %v1943, %v1985
    %v1987 = vpop.f32.mrb[0].mxu0
    %v1988 = vadd.f32 %v1945, %v1987
    %v1989 = vpop.f32.mrb[0].mxu0
    %v1990 = vadd.f32 %v1947, %v1989
    %v1991 = vpop.f32.mrb[0].mxu0
    %v1992 = vadd.f32 %v1949, %v1991
    %1993 = vdwg.mxu0
    %vm1994 = vcmp.gt.f32.partialorder %v1814, 0.0
    %vm1995 = vcmp.gt.f32.partialorder %v1816, 0.0
    %vm1996 = vcmp.gt.f32.partialorder %v1986, 0.0
    %vm1997 = vcmp.gt.f32.partialorder %v1988, 0.0
    %vm1998 = vcmp.gt.f32.partialorder %v1818, 0.0
    %vm1999 = vcmp.gt.f32.partialorder %v1820, 0.0
    %vm2000 = vcmp.gt.f32.partialorder %v1990, 0.0
    %vm2001 = vcmp.gt.f32.partialorder %v1992, 0.0
    %v2002 = vmul.f32 %v1814, 0.1
    %v2003 = vmul.f32 %v1816, 0.1
    %v2004 = vmul.f32 %v1986, 0.1
    %v2005 = vmul.f32 %v1988, 0.1
    %v2006 = vmul.f32 %v1818, 0.1
    %v2007 = vmul.f32 %v1820, 0.1
    %v2008 = vmul.f32 %v1990, 0.1
    %v2009 = vmul.f32 %v1992, 0.1
    %v2010 = vsel %vm1994, %v1814, %v2002
    %v2011 = vsel %vm1995, %v1816, %v2003
    %v2012 = vsel %vm1996, %v1986, %v2004
    %v2013 = vsel %vm1997, %v1988, %v2005
    %v2014 = vsel %vm1998, %v1818, %v2006
    %v2015 = vsel %vm1999, %v1820, %v2007
    %v2016 = vsel %vm2000, %v1990, %v2008
    %v2017 = vsel %vm2001, %v1992, %v2009
    %v2018 = vpack.c.bf16 %v2014, %v2010
    %v2019 = vpack.c.bf16 %v2015, %v2011
    %v2020 = vpack.c.bf16 %v2016, %v2012
    %v2021 = vpack.c.bf16 %v2017, %v2013
    %v2022 = vld [vmem:[#allocation7] sm:$0xff]
    %v2023 = vld [vmem:[#allocation7 + $0x8] sm:$0xff]
    %v2024 = vld [vmem:[#allocation7 + $0x10] sm:$0xff]
    %v2025 = vld [vmem:[#allocation7 + $0x18] sm:$0xff]
    %v2026 = vld [vmem:[#allocation7 + $0x20] sm:$0xff]
    %v2027 = vld [vmem:[#allocation7 + $0x28] sm:$0xff]
    %v2028 = vld [vmem:[#allocation7 + $0x30] sm:$0xff]
    %v2029 = vld [vmem:[#allocation7 + $0x38] sm:$0xff]
    %v2030 = vld [vmem:[#allocation7 + $0x40] sm:$0xff]
    %v2031 = vld [vmem:[#allocation7 + $0x48] sm:$0xff]
    %v2032 = vld [vmem:[#allocation7 + $0x50] sm:$0xff]
    %v2033 = vld [vmem:[#allocation7 + $0x58] sm:$0xff]
    %v2034 = vld [vmem:[#allocation7 + $0x60] sm:$0xff]
    %v2035 = vld [vmem:[#allocation7 + $0x68] sm:$0xff]
    %v2036 = vld [vmem:[#allocation7 + $0x70] sm:$0xff]
    %v2037 = vld [vmem:[#allocation7 + $0x78] sm:$0xff]
    %v2038 = vld [vmem:[#allocation7 + $0x80] sm:$0xff]
    %v2039 = vld [vmem:[#allocation7 + $0x88] sm:$0xff]
    %v2040 = vld [vmem:[#allocation7 + $0x90] sm:$0xff]
    %v2041 = vld [vmem:[#allocation7 + $0x98] sm:$0xff]
    %v2042 = vld [vmem:[#allocation7 + $0xa0] sm:$0xff]
    %v2043 = vld [vmem:[#allocation7 + $0xa8] sm:$0xff]
    %v2044 = vld [vmem:[#allocation7 + $0xb0] sm:$0xff]
    %v2045 = vld [vmem:[#allocation7 + $0xb8] sm:$0xff]
    %v2046 = vld [vmem:[#allocation7 + $0xc0] sm:$0xff]
    %v2047 = vld [vmem:[#allocation7 + $0xc8] sm:$0xff]
    %v2048 = vld [vmem:[#allocation7 + $0xd0] sm:$0xff]
    %v2049 = vld [vmem:[#allocation7 + $0xd8] sm:$0xff]
    %v2050 = vld [vmem:[#allocation7 + $0xe0] sm:$0xff]
    %v2051 = vld [vmem:[#allocation7 + $0xe8] sm:$0xff]
    %v2052 = vld [vmem:[#allocation7 + $0xf0] sm:$0xff]
    %v2053 = vld [vmem:[#allocation7 + $0xf8] sm:$0xff]
    %v2054 = vld [vmem:[#allocation7 + $0x100] sm:$0xff]
    %v2055 = vld [vmem:[#allocation7 + $0x108] sm:$0xff]
    %v2056 = vld [vmem:[#allocation7 + $0x110] sm:$0xff]
    %v2057 = vld [vmem:[#allocation7 + $0x118] sm:$0xff]
    %v2058 = vld [vmem:[#allocation7 + $0x120] sm:$0xff]
    %v2059 = vld [vmem:[#allocation7 + $0x128] sm:$0xff]
    %v2060 = vld [vmem:[#allocation7 + $0x130] sm:$0xff]
    %v2061 = vld [vmem:[#allocation7 + $0x138] sm:$0xff]
    %v2062 = vld [vmem:[#allocation7 + $0x140] sm:$0xff]
    %v2063 = vld [vmem:[#allocation7 + $0x148] sm:$0xff]
    %v2064 = vld [vmem:[#allocation7 + $0x150] sm:$0xff]
    %v2065 = vld [vmem:[#allocation7 + $0x158] sm:$0xff]
    %v2066 = vld [vmem:[#allocation7 + $0x160] sm:$0xff]
    %v2067 = vld [vmem:[#allocation7 + $0x168] sm:$0xff]
    %v2068 = vld [vmem:[#allocation7 + $0x170] sm:$0xff]
    %v2069 = vld [vmem:[#allocation7 + $0x178] sm:$0xff]
    %v2070 = vld [vmem:[#allocation7 + $0x180] sm:$0xff]
    %v2071 = vld [vmem:[#allocation7 + $0x188] sm:$0xff]
    %v2072 = vld [vmem:[#allocation7 + $0x190] sm:$0xff]
    %v2073 = vld [vmem:[#allocation7 + $0x198] sm:$0xff]
    %v2074 = vld [vmem:[#allocation7 + $0x1a0] sm:$0xff]
    %v2075 = vld [vmem:[#allocation7 + $0x1a8] sm:$0xff]
    %v2076 = vld [vmem:[#allocation7 + $0x1b0] sm:$0xff]
    %v2077 = vld [vmem:[#allocation7 + $0x1b8] sm:$0xff]
    %v2078 = vld [vmem:[#allocation7 + $0x1c0] sm:$0xff]
    %v2079 = vld [vmem:[#allocation7 + $0x1c8] sm:$0xff]
    %v2080 = vld [vmem:[#allocation7 + $0x1d0] sm:$0xff]
    %v2081 = vld [vmem:[#allocation7 + $0x1d8] sm:$0xff]
    %v2082 = vld [vmem:[#allocation7 + $0x1e0] sm:$0xff]
    %v2083 = vld [vmem:[#allocation7 + $0x1e8] sm:$0xff]
    %v2084 = vld [vmem:[#allocation7 + $0x1f0] sm:$0xff]
    %v2085 = vld [vmem:[#allocation7 + $0x1f8] sm:$0xff]
    %v2086 = vld [vmem:[%s4] sm:$0x3]
    %v2088 = vlaneseq
    %v2089 = vshrl.u32 %v2088, 7
    %v2090 = vsub.s32 0, %v2089
    %v2091 = vrot.slane %v2086, %v2090
    %v2092 = vlaneseq
    %v2093 = vshrl.u32 %v2092, 7
    %v2094 = vsub.s32 1, %v2093
    %v2095 = vrot.slane %v2086, %v2094
    %v2162 = vunpack.c.l.b16 %v2022
    %v2163 = vunpack.c.h.b16 %v2022
    %v2164 = vunpack.c.l.b16 %v2023
    %v2165 = vunpack.c.h.b16 %v2023
    %v2166 = vunpack.c.l.b16 %v2024
    %v2167 = vunpack.c.h.b16 %v2024
    %v2168 = vunpack.c.l.b16 %v2025
    %v2169 = vunpack.c.h.b16 %v2025
    %v2170 = vunpack.c.l.b16 %v2026
    %v2171 = vunpack.c.h.b16 %v2026
    %v2172 = vunpack.c.l.b16 %v2027
    %v2173 = vunpack.c.h.b16 %v2027
    %v2174 = vunpack.c.l.b16 %v2028
    %v2175 = vunpack.c.h.b16 %v2028
    %v2176 = vunpack.c.l.b16 %v2029
    %v2177 = vunpack.c.h.b16 %v2029
    %v2178 = vunpack.c.l.b16 %v2030
    %v2179 = vunpack.c.h.b16 %v2030
    %v2180 = vunpack.c.l.b16 %v2031
    %v2181 = vunpack.c.h.b16 %v2031
    %v2182 = vunpack.c.l.b16 %v2032
    %v2183 = vunpack.c.h.b16 %v2032
    %v2184 = vunpack.c.l.b16 %v2033
    %v2185 = vunpack.c.h.b16 %v2033
    %v2186 = vunpack.c.l.b16 %v2034
    %v2187 = vunpack.c.h.b16 %v2034
    %v2188 = vunpack.c.l.b16 %v2035
    %v2189 = vunpack.c.h.b16 %v2035
    %v2190 = vunpack.c.l.b16 %v2036
    %v2191 = vunpack.c.h.b16 %v2036
    %v2192 = vunpack.c.l.b16 %v2037
    %v2193 = vunpack.c.h.b16 %v2037
    %v2194 = vunpack.c.l.b16 %v2038
    %v2195 = vunpack.c.h.b16 %v2038
    %v2196 = vunpack.c.l.b16 %v2039
    %v2197 = vunpack.c.h.b16 %v2039
    %v2198 = vunpack.c.l.b16 %v2040
    %v2199 = vunpack.c.h.b16 %v2040
    %v2200 = vunpack.c.l.b16 %v2041
    %v2201 = vunpack.c.h.b16 %v2041
    %v2202 = vunpack.c.l.b16 %v2042
    %v2203 = vunpack.c.h.b16 %v2042
    %v2204 = vunpack.c.l.b16 %v2043
    %v2205 = vunpack.c.h.b16 %v2043
    %v2206 = vunpack.c.l.b16 %v2044
    %v2207 = vunpack.c.h.b16 %v2044
    %v2208 = vunpack.c.l.b16 %v2045
    %v2209 = vunpack.c.h.b16 %v2045
    %v2210 = vunpack.c.l.b16 %v2046
    %v2211 = vunpack.c.h.b16 %v2046
    %v2212 = vunpack.c.l.b16 %v2047
    %v2213 = vunpack.c.h.b16 %v2047
    %v2214 = vunpack.c.l.b16 %v2048
    %v2215 = vunpack.c.h.b16 %v2048
    %v2216 = vunpack.c.l.b16 %v2049
    %v2217 = vunpack.c.h.b16 %v2049
    %v2218 = vunpack.c.l.b16 %v2050
    %v2219 = vunpack.c.h.b16 %v2050
    %v2220 = vunpack.c.l.b16 %v2051
    %v2221 = vunpack.c.h.b16 %v2051
    %v2222 = vunpack.c.l.b16 %v2052
    %v2223 = vunpack.c.h.b16 %v2052
    %v2224 = vunpack.c.l.b16 %v2053
    %v2225 = vunpack.c.h.b16 %v2053
    %v2226 = vunpack.c.l.b16 %v2054
    %v2227 = vunpack.c.h.b16 %v2054
    %v2228 = vunpack.c.l.b16 %v2055
    %v2229 = vunpack.c.h.b16 %v2055
    %v2230 = vunpack.c.l.b16 %v2056
    %v2231 = vunpack.c.h.b16 %v2056
    %v2232 = vunpack.c.l.b16 %v2057
    %v2233 = vunpack.c.h.b16 %v2057
    %v2234 = vunpack.c.l.b16 %v2058
    %v2235 = vunpack.c.h.b16 %v2058
    %v2236 = vunpack.c.l.b16 %v2059
    %v2237 = vunpack.c.h.b16 %v2059
    %v2238 = vunpack.c.l.b16 %v2060
    %v2239 = vunpack.c.h.b16 %v2060
    %v2240 = vunpack.c.l.b16 %v2061
    %v2241 = vunpack.c.h.b16 %v2061
    %v2242 = vunpack.c.l.b16 %v2062
    %v2243 = vunpack.c.h.b16 %v2062
    %v2244 = vunpack.c.l.b16 %v2063
    %v2245 = vunpack.c.h.b16 %v2063
    %v2246 = vunpack.c.l.b16 %v2064
    %v2247 = vunpack.c.h.b16 %v2064
    %v2248 = vunpack.c.l.b16 %v2065
    %v2249 = vunpack.c.h.b16 %v2065
    %v2250 = vunpack.c.l.b16 %v2066
    %v2251 = vunpack.c.h.b16 %v2066
    %v2252 = vunpack.c.l.b16 %v2067
    %v2253 = vunpack.c.h.b16 %v2067
    %v2254 = vunpack.c.l.b16 %v2068
    %v2255 = vunpack.c.h.b16 %v2068
    %v2256 = vunpack.c.l.b16 %v2069
    %v2257 = vunpack.c.h.b16 %v2069
    %v2258 = vunpack.c.l.b16 %v2070
    %v2259 = vunpack.c.h.b16 %v2070
    %v2260 = vunpack.c.l.b16 %v2071
    %v2261 = vunpack.c.h.b16 %v2071
    %v2262 = vunpack.c.l.b16 %v2072
    %v2263 = vunpack.c.h.b16 %v2072
    %v2264 = vunpack.c.l.b16 %v2073
    %v2265 = vunpack.c.h.b16 %v2073
    %v2266 = vunpack.c.l.b16 %v2074
    %v2267 = vunpack.c.h.b16 %v2074
    %v2268 = vunpack.c.l.b16 %v2075
    %v2269 = vunpack.c.h.b16 %v2075
    %v2270 = vunpack.c.l.b16 %v2076
    %v2271 = vunpack.c.h.b16 %v2076
    %v2272 = vunpack.c.l.b16 %v2077
    %v2273 = vunpack.c.h.b16 %v2077
    %v2274 = vunpack.c.l.b16 %v2078
    %v2275 = vunpack.c.h.b16 %v2078
    %v2276 = vunpack.c.l.b16 %v2079
    %v2277 = vunpack.c.h.b16 %v2079
    %v2278 = vunpack.c.l.b16 %v2080
    %v2279 = vunpack.c.h.b16 %v2080
    %v2280 = vunpack.c.l.b16 %v2081
    %v2281 = vunpack.c.h.b16 %v2081
    %v2282 = vunpack.c.l.b16 %v2082
    %v2283 = vunpack.c.h.b16 %v2082
    %v2284 = vunpack.c.l.b16 %v2083
    %v2285 = vunpack.c.h.b16 %v2083
    %v2286 = vunpack.c.l.b16 %v2084
    %v2287 = vunpack.c.h.b16 %v2084
    %v2288 = vunpack.c.l.b16 %v2085
    %v2289 = vunpack.c.h.b16 %v2085
    %v2290 = vpack.c.b16 %v2164, %v2162
    %v2291 = vpack.c.b16 %v2165, %v2163
    %v2292 = vpack.c.b16 %v2168, %v2166
    %v2293 = vpack.c.b16 %v2169, %v2167
    %v2294 = vpack.c.b16 %v2172, %v2170
    %v2295 = vpack.c.b16 %v2173, %v2171
    %v2296 = vpack.c.b16 %v2176, %v2174
    %v2297 = vpack.c.b16 %v2177, %v2175
    %v2298 = vpack.c.b16 %v2180, %v2178
    %v2299 = vpack.c.b16 %v2181, %v2179
    %v2300 = vpack.c.b16 %v2184, %v2182
    %v2301 = vpack.c.b16 %v2185, %v2183
    %v2302 = vpack.c.b16 %v2188, %v2186
    %v2303 = vpack.c.b16 %v2189, %v2187
    %v2304 = vpack.c.b16 %v2192, %v2190
    %v2305 = vpack.c.b16 %v2193, %v2191
    %v2306 = vpack.c.b16 %v2196, %v2194
    %v2307 = vpack.c.b16 %v2197, %v2195
    %v2308 = vpack.c.b16 %v2200, %v2198
    %v2309 = vpack.c.b16 %v2201, %v2199
    %v2310 = vpack.c.b16 %v2204, %v2202
    %v2311 = vpack.c.b16 %v2205, %v2203
    %v2312 = vpack.c.b16 %v2208, %v2206
    %v2313 = vpack.c.b16 %v2209, %v2207
    %v2314 = vpack.c.b16 %v2212, %v2210
    %v2315 = vpack.c.b16 %v2213, %v2211
    %v2316 = vpack.c.b16 %v2216, %v2214
    %v2317 = vpack.c.b16 %v2217, %v2215
    %v2318 = vpack.c.b16 %v2220, %v2218
    %v2319 = vpack.c.b16 %v2221, %v2219
    %v2320 = vpack.c.b16 %v2224, %v2222
    %v2321 = vpack.c.b16 %v2225, %v2223
    %v2322 = vpack.c.b16 %v2228, %v2226
    %v2323 = vpack.c.b16 %v2229, %v2227
    %v2324 = vpack.c.b16 %v2232, %v2230
    %v2325 = vpack.c.b16 %v2233, %v2231
    %v2326 = vpack.c.b16 %v2236, %v2234
    %v2327 = vpack.c.b16 %v2237, %v2235
    %v2328 = vpack.c.b16 %v2240, %v2238
    %v2329 = vpack.c.b16 %v2241, %v2239
    %v2330 = vpack.c.b16 %v2244, %v2242
    %v2331 = vpack.c.b16 %v2245, %v2243
    %v2332 = vpack.c.b16 %v2248, %v2246
    %v2333 = vpack.c.b16 %v2249, %v2247
    %v2334 = vpack.c.b16 %v2252, %v2250
    %v2335 = vpack.c.b16 %v2253, %v2251
    %v2336 = vpack.c.b16 %v2256, %v2254
    %v2337 = vpack.c.b16 %v2257, %v2255
    %v2338 = vpack.c.b16 %v2260, %v2258
    %v2339 = vpack.c.b16 %v2261, %v2259
    %v2340 = vpack.c.b16 %v2264, %v2262
    %v2341 = vpack.c.b16 %v2265, %v2263
    %v2342 = vpack.c.b16 %v2268, %v2266
    %v2343 = vpack.c.b16 %v2269, %v2267
    %v2344 = vpack.c.b16 %v2272, %v2270
    %v2345 = vpack.c.b16 %v2273, %v2271
    %v2346 = vpack.c.b16 %v2276, %v2274
    %v2347 = vpack.c.b16 %v2277, %v2275
    %v2348 = vpack.c.b16 %v2280, %v2278
    %v2349 = vpack.c.b16 %v2281, %v2279
    %v2350 = vpack.c.b16 %v2284, %v2282
    %v2351 = vpack.c.b16 %v2285, %v2283
    %v2352 = vpack.c.b16 %v2288, %v2286
    %v2353 = vpack.c.b16 %v2289, %v2287
    %2418 = vmatprep.subr.bf16.mxu0 %v2291
    %2419 = vmatpush1.bf16.msra.mxu0 %v2290
    %2420 = vmatprep.subr.bf16.mxu0 %v2293
    %2421 = vmatpush1.bf16.msra.mxu0 %v2292
    %2422 = vmatprep.subr.bf16.mxu0 %v2295
    %2423 = vmatpush1.bf16.msra.mxu0 %v2294
    %2424 = vmatprep.subr.bf16.mxu0 %v2297
    %2425 = vmatpush1.bf16.msra.mxu0 %v2296
    %2426 = vmatprep.subr.bf16.mxu0 %v2299
    %2427 = vmatpush1.bf16.msra.mxu0 %v2298
    %2428 = vmatprep.subr.bf16.mxu0 %v2301
    %2429 = vmatpush1.bf16.msra.mxu0 %v2300
    %2430 = vmatprep.subr.bf16.mxu0 %v2303
    %2431 = vmatpush1.bf16.msra.mxu0 %v2302
    %2432 = vmatprep.subr.bf16.mxu0 %v2305
    %2433 = vmatpush1.bf16.msra.mxu0 %v2304
    %2434 = vmatprep.subr.bf16.mxu0 %v2307
    %2435 = vmatpush1.bf16.msra.mxu0 %v2306
    %2436 = vmatprep.subr.bf16.mxu0 %v2309
    %2437 = vmatpush1.bf16.msra.mxu0 %v2308
    %2438 = vmatprep.subr.bf16.mxu0 %v2311
    %2439 = vmatpush1.bf16.msra.mxu0 %v2310
    %2440 = vmatprep.subr.bf16.mxu0 %v2313
    %2441 = vmatpush1.bf16.msra.mxu0 %v2312
    %2442 = vmatprep.subr.bf16.mxu0 %v2315
    %2443 = vmatpush1.bf16.msra.mxu0 %v2314
    %2444 = vmatprep.subr.bf16.mxu0 %v2317
    %2445 = vmatpush1.bf16.msra.mxu0 %v2316
    %2446 = vmatprep.subr.bf16.mxu0 %v2319
    %2447 = vmatpush1.bf16.msra.mxu0 %v2318
    %2448 = vmatprep.subr.bf16.mxu0 %v2321
    %2449 = vmatpush1.bf16.msra.mxu0 %v2320
    %2450 = vmatprep.mubr.bf16.mxu0 %v2019
    %2451 = vmatmul.mubr.bf16.gmra.mrb[0].mxu0 %v2018
    %v2452 = vpop.f32.mrb[0].mxu0
    %v2453 = vadd.f32 %v2091, %v2452
    %v2454 = vpop.f32.mrb[0].mxu0
    %v2455 = vadd.f32 %v2095, %v2454
    %v2456 = vpop.f32.mrb[0].mxu0
    %v2457 = vadd.f32 %v2091, %v2456
    %v2458 = vpop.f32.mrb[0].mxu0
    %v2459 = vadd.f32 %v2095, %v2458
    %2460 = vdwg.mxu0
    %2461 = vmatprep.subr.bf16.mxu0 %v2323
    %2462 = vmatpush1.bf16.msra.mxu0 %v2322
    %2463 = vmatprep.subr.bf16.mxu0 %v2325
    %2464 = vmatpush1.bf16.msra.mxu0 %v2324
    %2465 = vmatprep.subr.bf16.mxu0 %v2327
    %2466 = vmatpush1.bf16.msra.mxu0 %v2326
    %2467 = vmatprep.subr.bf16.mxu0 %v2329
    %2468 = vmatpush1.bf16.msra.mxu0 %v2328
    %2469 = vmatprep.subr.bf16.mxu0 %v2331
    %2470 = vmatpush1.bf16.msra.mxu0 %v2330
    %2471 = vmatprep.subr.bf16.mxu0 %v2333
    %2472 = vmatpush1.bf16.msra.mxu0 %v2332
    %2473 = vmatprep.subr.bf16.mxu0 %v2335
    %2474 = vmatpush1.bf16.msra.mxu0 %v2334
    %2475 = vmatprep.subr.bf16.mxu0 %v2337
    %2476 = vmatpush1.bf16.msra.mxu0 %v2336
    %2477 = vmatprep.subr.bf16.mxu0 %v2339
    %2478 = vmatpush1.bf16.msra.mxu0 %v2338
    %2479 = vmatprep.subr.bf16.mxu0 %v2341
    %2480 = vmatpush1.bf16.msra.mxu0 %v2340
    %2481 = vmatprep.subr.bf16.mxu0 %v2343
    %2482 = vmatpush1.bf16.msra.mxu0 %v2342
    %2483 = vmatprep.subr.bf16.mxu0 %v2345
    %2484 = vmatpush1.bf16.msra.mxu0 %v2344
    %2485 = vmatprep.subr.bf16.mxu0 %v2347
    %2486 = vmatpush1.bf16.msra.mxu0 %v2346
    %2487 = vmatprep.subr.bf16.mxu0 %v2349
    %2488 = vmatpush1.bf16.msra.mxu0 %v2348
    %2489 = vmatprep.subr.bf16.mxu0 %v2351
    %2490 = vmatpush1.bf16.msra.mxu0 %v2350
    %2491 = vmatprep.subr.bf16.mxu0 %v2353
    %2492 = vmatpush1.bf16.msra.mxu0 %v2352
    %2493 = vmatprep.mubr.bf16.mxu0 %v2021
    %2494 = vmatmul.mubr.bf16.gmra.mrb[0].mxu0 %v2020
    %v2495 = vpop.f32.mrb[0].mxu0
    %v2496 = vadd.f32 %v2453, %v2495
    %v2497 = vpop.f32.mrb[0].mxu0
    %v2498 = vadd.f32 %v2455, %v2497
    %v2499 = vpop.f32.mrb[0].mxu0
    %v2500 = vadd.f32 %v2457, %v2499
    %v2501 = vpop.f32.mrb[0].mxu0
    %v2502 = vadd.f32 %v2459, %v2501
    %2503 = vdwg.mxu0
    %vm2504 = vcmp.gt.f32.partialorder %v2496, 0.0
    %vm2505 = vcmp.gt.f32.partialorder %v2498, 0.0
    %vm2506 = vcmp.gt.f32.partialorder %v2500, 0.0
    %vm2507 = vcmp.gt.f32.partialorder %v2502, 0.0
    %v2508 = vmul.f32 %v2496, 0.1
    %v2509 = vmul.f32 %v2498, 0.1
    %v2510 = vmul.f32 %v2500, 0.1
    %v2511 = vmul.f32 %v2502, 0.1
    %v2512 = vsel %vm2504, %v2496, %v2508
    %v2513 = vsel %vm2505, %v2498, %v2509
    %v2514 = vsel %vm2506, %v2500, %v2510
    %v2515 = vsel %vm2507, %v2502, %v2511
    %v2516 = vld [vmem:[%s5] sm:$0x3]
    %v2518 = vlaneseq
    %v2519 = vshrl.u32 %v2518, 7
    %v2520 = vsub.s32 0, %v2519
    %v2521 = vrot.slane %v2516, %v2520
    %v2522 = vlaneseq
    %v2523 = vshrl.u32 %v2522, 7
    %v2524 = vsub.s32 1, %v2523
    %v2525 = vrot.slane %v2516, %v2524
    %v2528 = vmul.f32 %v2512, %v2521
    %v2529 = vmul.f32 %v2513, %v2525
    %v2530 = vmul.f32 %v2514, %v2521
    %v2531 = vmul.f32 %v2515, %v2525
    %v2532 = vadd.f32 %v2528, %v2529
    %2533 = vadd.xlane.f32.xlu0 %v2532
    %v2534 = vpop.xlane.xlu0 %2533
    %v2535 = vadd.f32 %v2530, %v2531
    %2536 = vadd.xlane.f32.xlu0 %v2535
    %v2537 = vpop.xlane.xlu0 %2536
    %s2538 = sld [smem:[#allocation2]]
    %v2539 = vstv %s2538
    %v2540 = vadd.f32 %v2534, %v2539
    %v2541 = vadd.f32 %v2537, %v2539
    %v2542 = vand.u32 2147483647, %v2540
    %v2543 = vand.u32 2147483647, %v2541
    %v2544 = vsub.f32 0.0, %v2542
    %v2545 = vsub.f32 0.0, %v2543
    %v2546 = vmul.f32 %v2544, 1.442695
    %v2547 = vpow.pop %v2546
    %v2548 = vmul.f32 %v2545, 1.442695
    %v2549 = vpow.pop %v2548
    %vm2550 = vcmp.ge.f32.partialorder %v2540, 0.0
    %vm2551 = vcmp.ge.f32.partialorder %v2541, 0.0
    %v2552 = vsel %vm2550, 1.0, %v2547
    %v2553 = vsel %vm2551, 1.0, %v2549
    %v2554 = vadd.f32 %v2547, 1.0
    %v2555 = vadd.f32 %v2549, 1.0
    %v2556 = vrcp.pop %v2554
    %v2557 = vmul.f32 %v2552, %v2556
    %v2558 = vrcp.pop %v2555
    %v2559 = vmul.f32 %v2553, %v2558
    %v2560 = vmin.f32 %v2557, 1.0
    %v2561 = vmin.f32 %v2559, 1.0
    %vm2562 = vcmask 7168
    %2563 = vst.msk [vmem:[%s7] sm:$0xff] %vm2562, %v2560
    %2564 = vst.msk [vmem:[%s7 + $0x8] sm:$0xff] %vm2562, %v2561
    // Predicated region
    $region42: #{tpu_custom_call.1} parent=1 // pred_check
      _
    $region43: #{tpu_custom_call.1} parent=1 // pred_check_branch
      %2566 = sbr.rel (0) target = $region45
    $region44: #{tpu_custom_call.1} parent=1 // pred_region
      _
    $region45: #{tpu_custom_call.1} parent=1 // pred_fallthru
      _
    // Predicated region
    $region46: #{tpu_custom_call.1} parent=1 // pred_check
      _
    $region47: #{tpu_custom_call.1} parent=1 // pred_check_branch
      %2568 = sbr.rel (0) target = $region49
    $region48: #{tpu_custom_call.1} parent=1 // pred_region
      _
    $region49: #{tpu_custom_call.1} parent=1 // pred_fallthru
      _
    %2569 = vsyncpa [#allocation4], 1
    %2570 = vsyncpa [#allocation6], 1

// kernel: tpu_custom_call.1
$region0: #{tpu_custom_call.1}
  #allocation0 [shape = 'u32[]', space=smem, size = 0x4, offset = 0x4, fixed_abs, tag = 'smem constant byte address 0x4 - core index']
  #allocation1 [shape = 'u32[144,128]{1,0:T(1,128)}', space=vmem, size = 0x12000, scoped, tag = 'internal scratch']
  #allocation2 [shape = 'f32[1,1]{1,0:T(1,128)S(6)}', space=smem, size = 0x200, scoped, tag = 'scoped memory for tpu_custom_call.1']
  %s0 = inlined_call_operand.hbm [shape: f32[16,1024], index: 0, kind: input, shape index: {}]
  %s1 = inlined_call_operand.hbm [shape: bf16[1024,512], index: 1, kind: input, shape index: {}]
  %s2 = inlined_call_operand.vmem [shape: f32[1,512], index: 2, kind: input, shape index: {}]
  %s3 = inlined_call_operand.hbm [shape: bf16[512,256], index: 3, kind: input, shape index: {}]
  %s4 = inlined_call_operand.vmem [shape: f32[1,256], index: 4, kind: input, shape index: {}]
  %s5 = inlined_call_operand.vmem [shape: f32[1,256], index: 5, kind: input, shape index: {}]
  %s6 = inlined_call_operand.<no memory space> [shape: f32[1,1], index: 6, kind: input, shape index: {}]
  %s7 = inlined_call_operand.vmem [shape: f32[16,1], index: 7, kind: output, shape index: {}]
  %s8 = sld [smem:[#allocation0]]
  $region50: #{tpu_custom_call.1} parent=0
    _
  %s10 = ssub.s32 1, %s8
  %s11 = scalar_select 0, %s10, %s8
  %12 = sst [smem:[#allocation2]] %s6
  $region1: #{tpu_custom_call.1} parent=0
    #allocation3 [shape = 'u8[65536]{0}', space=vmem, size = 0x10000, scoped, tag = 'input window, operand 0, single buffered']
    #allocation4 [shape = 's32[1]{0}', space=sflag, size = 0x4, scoped, tag = 'scoped memory for tpu_custom_call.1']
    #allocation5 [shape = 'u8[1048576]{0}', space=vmem, size = 0x100000, scoped, tag = 'input window, operand 1, single buffered']
    #allocation6 [shape = 's32[1]{0}', space=sflag, size = 0x4, scoped, tag = 'scoped memory for tpu_custom_call.1']
    #allocation7 [shape = 'u8[262144]{0}', space=vmem, size = 0x40000, scoped, tag = 'input window, operand 3, single buffered']
    %13 = vsyncpa [#allocation4], 0
    %14 = vsyncpa [#allocation6], 0
    // Predicated region
    $region2: #{tpu_custom_call.1} parent=1 // pred_check
      _
    $region3: #{tpu_custom_call.1} parent=1 // pred_check_branch
      %16 = sbr.rel (0) target = $region5
    $region4: #{tpu_custom_call.1} parent=1 // pred_region
      %s18 = ssub.s32 2048, 2048
      %19 = vsyncadd [#allocation4], %s18
      %s20 = sshll.u32 [#allocation3], 4
      %s21 = int_to_ptr.vmem [resolvable:$true] %s20
      %26 = dma.hbm_to_vmem [thread:$0]  %s0, 2048, %s21, [#allocation4], 1024, 1024, 64
    $region5: #{tpu_custom_call.1} parent=1 // pred_fallthru
      _
    // Predicated region
    $region6: #{tpu_custom_call.1} parent=1 // pred_check
      _
    $region7: #{tpu_custom_call.1} parent=1 // pred_check_branch
      %28 = sbr.rel (0) target = $region9
    $region8: #{tpu_custom_call.1} parent=1 // pred_region
      %s30 = ssub.s32 32768, 32768
      %31 = vsyncadd [#allocation6], %s30
      %s32 = sshll.u32 [#allocation5], 4
      %s33 = int_to_ptr.vmem [resolvable:$true] %s32
      %38 = dma.hbm_to_vmem [thread:$0]  %s1, 32768, %s33, [#allocation6], 256, 256, 16
    $region9: #{tpu_custom_call.1} parent=1 // pred_fallthru
      _
    // Predicated region
    $region10: #{tpu_custom_call.1} parent=1 // pred_check
      _
    $region11: #{tpu_custom_call.1} parent=1 // pred_check_branch
      %40 = sbr.rel (0) target = $region13
    $region12: #{tpu_custom_call.1} parent=1 // pred_region
      _
    $region13: #{tpu_custom_call.1} parent=1 // pred_fallthru
      _
    // Predicated region
    $region14: #{tpu_custom_call.1} parent=1 // pred_check
      _
    $region15: #{tpu_custom_call.1} parent=1 // pred_check_branch
      %42 = sbr.rel (0) target = $region17
    $region16: #{tpu_custom_call.1} parent=1 // pred_region
      %s44 = ssub.s32 8192, 8192
      %45 = vsyncadd [#allocation6], %s44
      %s46 = sshll.u32 [#allocation7], 4
      %s47 = int_to_ptr.vmem [resolvable:$true] %s46
      %52 = dma.hbm_to_vmem [thread:$0]  %s3, 8192, %s47, [#allocation6], 128, 128, 8
    $region17: #{tpu_custom_call.1} parent=1 // pred_fallthru
      _
    // Predicated region
    $region18: #{tpu_custom_call.1} parent=1 // pred_check
      _
    $region19: #{tpu_custom_call.1} parent=1 // pred_check_branch
      %54 = sbr.rel (0) target = $region21
    $region20: #{tpu_custom_call.1} parent=1 // pred_region
      _
    $region21: #{tpu_custom_call.1} parent=1 // pred_fallthru
      _
    // Predicated region
    $region22: #{tpu_custom_call.1} parent=1 // pred_check
      _
    $region23: #{tpu_custom_call.1} parent=1 // pred_check_branch
      %56 = sbr.rel (0) target = $region25
    $region24: #{tpu_custom_call.1} parent=1 // pred_region
      _
    $region25: #{tpu_custom_call.1} parent=1 // pred_fallthru
      _
    // Predicated region
    $region26: #{tpu_custom_call.1} parent=1 // pred_check
      _
    $region27: #{tpu_custom_call.1} parent=1 // pred_check_branch
      %58 = sbr.rel (0) target = $region29
    $region28: #{tpu_custom_call.1} parent=1 // pred_region
      _
    $region29: #{tpu_custom_call.1} parent=1 // pred_fallthru
      _
    // Predicated region
    $region30: #{tpu_custom_call.1} parent=1 // pred_check
      _
    $region31: #{tpu_custom_call.1} parent=1 // pred_check_branch
      %60 = sbr.rel (0) target = $region33
    $region32: #{tpu_custom_call.1} parent=1 // pred_region
      %61 = dma.done [#allocation4], 2048
    $region33: #{tpu_custom_call.1} parent=1 // pred_fallthru
      _
    // Predicated region
    $region34: #{tpu_custom_call.1} parent=1 // pred_check
      _
    $region35: #{tpu_custom_call.1} parent=1 // pred_check_branch
      %63 = sbr.rel (0) target = $region37
    $region36: #{tpu_custom_call.1} parent=1 // pred_region
      %64 = dma.done [#allocation6], 32768
    $region37: #{tpu_custom_call.1} parent=1 // pred_fallthru
      _
    // Predicated region
    $region38: #{tpu_custom_call.1} parent=1 // pred_check
      _
    $region39: #{tpu_custom_call.1} parent=1 // pred_check_branch
      %66 = sbr.rel (0) target = $region41
    $region40: #{tpu_custom_call.1} parent=1 // pred_region
      %67 = dma.done [#allocation6], 8192
    $region41: #{tpu_custom_call.1} parent=1 // pred_fallthru
      _
    %v68 = vld [vmem:[#allocation3] sm:$0xff]
    %v69 = vld [vmem:[#allocation3 + $0x8] sm:$0xff]
    %v70 = vld [vmem:[#allocation3 + $0x10] sm:$0xff]
    %v71 = vld [vmem:[#allocation3 + $0x18] sm:$0xff]
    %v72 = vld [vmem:[#allocation3 + $0x20] sm:$0xff]
    %v73 = vld [vmem:[#allocation3 + $0x28] sm:$0xff]
    %v74 = vld [vmem:[#allocation3 + $0x30] sm:$0xff]
    %v75 = vld [vmem:[#allocation3 + $0x38] sm:$0xff]
    %v76 = vld [vmem:[#allocation3 + $0x40] sm:$0xff]
    %v77 = vld [vmem:[#allocation3 + $0x48] sm:$0xff]
    %v78 = vld [vmem:[#allocation3 + $0x50] sm:$0xff]
    %v79 = vld [vmem:[#allocation3 + $0x58] sm:$0xff]
    %v80 = vld [vmem:[#allocation3 + $0x60] sm:$0xff]
    %v81 = vld [vmem:[#allocation3 + $0x68] sm:$0xff]
    %v82 = vld [vmem:[#allocation3 + $0x70] sm:$0xff]
    %v83 = vld [vmem:[#allocation3 + $0x78] sm:$0xff]
    %v84 = vpack.c.bf16 %v76, %v68
    %v85 = vpack.c.bf16 %v77, %v69
    %v86 = vpack.c.bf16 %v78, %v70
    %v87 = vpack.c.bf16 %v79, %v71
    %v88 = vpack.c.bf16 %v80, %v72
    %v89 = vpack.c.bf16 %v81, %v73
    %v90 = vpack.c.bf16 %v82, %v74
    %v91 = vpack.c.bf16 %v83, %v75
    %v92 = vld [vmem:[#allocation5] sm:$0xff]
    %v93 = vld [vmem:[#allocation5 + $0x8] sm:$0xff]
    %v94 = vld [vmem:[#allocation5 + $0x10] sm:$0xff]
    %v95 = vld [vmem:[#allocation5 + $0x18] sm:$0xff]
    %v96 = vld [vmem:[#allocation5 + $0x20] sm:$0xff]
    %v97 = vld [vmem:[#allocation5 + $0x28] sm:$0xff]
    %v98 = vld [vmem:[#allocation5 + $0x30] sm:$0xff]
    %v99 = vld [vmem:[#allocation5 + $0x38] sm:$0xff]
    %v100 = vld [vmem:[#allocation5 + $0x40] sm:$0xff]
    %v101 = vld [vmem:[#allocation5 + $0x48] sm:$0xff]
    %v102 = vld [vmem:[#allocation5 + $0x50] sm:$0xff]
    %v103 = vld [vmem:[#allocation5 + $0x58] sm:$0xff]
    %v104 = vld [vmem:[#allocation5 + $0x60] sm:$0xff]
    %v105 = vld [vmem:[#allocation5 + $0x68] sm:$0xff]
    %v106 = vld [vmem:[#allocation5 + $0x70] sm:$0xff]
    %v107 = vld [vmem:[#allocation5 + $0x78] sm:$0xff]
    %v108 = vld [vmem:[#allocation5 + $0x80] sm:$0xff]
    %v109 = vld [vmem:[#allocation5 + $0x88] sm:$0xff]
    %v110 = vld [vmem:[#allocation5 + $0x90] sm:$0xff]
    %v111 = vld [vmem:[#allocation5 + $0x98] sm:$0xff]
    %v112 = vld [vmem:[#allocation5 + $0xa0] sm:$0xff]
    %v113 = vld [vmem:[#allocation5 + $0xa8] sm:$0xff]
    %v114 = vld [vmem:[#allocation5 + $0xb0] sm:$0xff]
    %v115 = vld [vmem:[#allocation5 + $0xb8] sm:$0xff]
    %v116 = vld [vmem:[#allocation5 + $0xc0] sm:$0xff]
    %v117 = vld [vmem:[#allocation5 + $0xc8] sm:$0xff]
    %v118 = vld [vmem:[#allocation5 + $0xd0] sm:$0xff]
    %v119 = vld [vmem:[#allocation5 + $0xd8] sm:$0xff]
    %v120 = vld [vmem:[#allocation5 + $0xe0] sm:$0xff]
    %v121 = vld [vmem:[#allocation5 + $0xe8] sm:$0xff]
    %v122 = vld [vmem:[#allocation5 + $0xf0] sm:$0xff]
    %v123 = vld [vmem:[#allocation5 + $0xf8] sm:$0xff]
    %v124 = vld [vmem:[#allocation5 + $0x100] sm:$0xff]
    %v125 = vld [vmem:[#allocation5 + $0x108] sm:$0xff]
    %v126 = vld [vmem:[#allocation5 + $0x110] sm:$0xff]
    %v127 = vld [vmem:[#allocation5 + $0x118] sm:$0xff]
    %v128 = vld [vmem:[#allocation5 + $0x120] sm:$0xff]
    %v129 = vld [vmem:[#allocation5 + $0x128] sm:$0xff]
    %v130 = vld [vmem:[#allocation5 + $0x130] sm:$0xff]
    %v131 = vld [vmem:[#allocation5 + $0x138] sm:$0xff]
    %v132 = vld [vmem:[#allocation5 + $0x140] sm:$0xff]
    %v133 = vld [vmem:[#allocation5 + $0x148] sm:$0xff]
    %v134 = vld [vmem:[#allocation5 + $0x150] sm:$0xff]
    %v135 = vld [vmem:[#allocation5 + $0x158] sm:$0xff]
    %v136 = vld [vmem:[#allocation5 + $0x160] sm:$0xff]
    %v137 = vld [vmem:[#allocation5 + $0x168] sm:$0xff]
    %v138 = vld [vmem:[#allocation5 + $0x170] sm:$0xff]
    %v139 = vld [vmem:[#allocation5 + $0x178] sm:$0xff]
    %v140 = vld [vmem:[#allocation5 + $0x180] sm:$0xff]
    %v141 = vld [vmem:[#allocation5 + $0x188] sm:$0xff]
    %v142 = vld [vmem:[#allocation5 + $0x190] sm:$0xff]
    %v143 = vld [vmem:[#allocation5 + $0x198] sm:$0xff]
    %v144 = vld [vmem:[#allocation5 + $0x1a0] sm:$0xff]
    %v145 = vld [vmem:[#allocation5 + $0x1a8] sm:$0xff]
    %v146 = vld [vmem:[#allocation5 + $0x1b0] sm:$0xff]
    %v147 = vld [vmem:[#allocation5 + $0x1b8] sm:$0xff]
    %v148 = vld [vmem:[#allocation5 + $0x1c0] sm:$0xff]
    %v149 = vld [vmem:[#allocation5 + $0x1c8] sm:$0xff]
    %v150 = vld [vmem:[#allocation5 + $0x1d0] sm:$0xff]
    %v151 = vld [vmem:[#allocation5 + $0x1d8] sm:$0xff]
    %v152 = vld [vmem:[#allocation5 + $0x1e0] sm:$0xff]
    %v153 = vld [vmem:[#allocation5 + $0x1e8] sm:$0xff]
    %v154 = vld [vmem:[#allocation5 + $0x1f0] sm:$0xff]
    %v155 = vld [vmem:[#allocation5 + $0x1f8] sm:$0xff]
    %v156 = vld [vmem:[#allocation5 + $0x200] sm:$0xff]
    %v157 = vld [vmem:[#allocation5 + $0x208] sm:$0xff]
    %v158 = vld [vmem:[#allocation5 + $0x210] sm:$0xff]
    %v159 = vld [vmem:[#allocation5 + $0x218] sm:$0xff]
    %v160 = vld [vmem:[#allocation5 + $0x220] sm:$0xff]
    %v161 = vld [vmem:[#allocation5 + $0x228] sm:$0xff]
    %v162 = vld [vmem:[#allocation5 + $0x230] sm:$0xff]
    %v163 = vld [vmem:[#allocation5 + $0x238] sm:$0xff]
    %v164 = vld [vmem:[#allocation5 + $0x240] sm:$0xff]
    %v165 = vld [vmem:[#allocation5 + $0x248] sm:$0xff]
    %v166 = vld [vmem:[#allocation5 + $0x250] sm:$0xff]
    %v167 = vld [vmem:[#allocation5 + $0x258] sm:$0xff]
    %v168 = vld [vmem:[#allocation5 + $0x260] sm:$0xff]
    %v169 = vld [vmem:[#allocation5 + $0x268] sm:$0xff]
    %v170 = vld [vmem:[#allocation5 + $0x270] sm:$0xff]
    %v171 = vld [vmem:[#allocation5 + $0x278] sm:$0xff]
    %v172 = vld [vmem:[#allocation5 + $0x280] sm:$0xff]
    %v173 = vld [vmem:[#allocation5 + $0x288] sm:$0xff]
    %v174 = vld [vmem:[#allocation5 + $0x290] sm:$0xff]
    %v175 = vld [vmem:[#allocation5 + $0x298] sm:$0xff]
    %v176 = vld [vmem:[#allocation5 + $0x2a0] sm:$0xff]
    %v177 = vld [vmem:[#allocation5 + $0x2a8] sm:$0xff]
    %v178 = vld [vmem:[#allocation5 + $0x2b0] sm:$0xff]
    %v179 = vld [vmem:[#allocation5 + $0x2b8] sm:$0xff]
    %v180 = vld [vmem:[#allocation5 + $0x2c0] sm:$0xff]
    %v181 = vld [vmem:[#allocation5 + $0x2c8] sm:$0xff]
    %v182 = vld [vmem:[#allocation5 + $0x2d0] sm:$0xff]
    %v183 = vld [vmem:[#allocation5 + $0x2d8] sm:$0xff]
    %v184 = vld [vmem:[#allocation5 + $0x2e0] sm:$0xff]
    %v185 = vld [vmem:[#allocation5 + $0x2e8] sm:$0xff]
    %v186 = vld [vmem:[#allocation5 + $0x2f0] sm:$0xff]
    %v187 = vld [vmem:[#allocation5 + $0x2f8] sm:$0xff]
    %v188 = vld [vmem:[#allocation5 + $0x300] sm:$0xff]
    %v189 = vld [vmem:[#allocation5 + $0x308] sm:$0xff]
    %v190 = vld [vmem:[#allocation5 + $0x310] sm:$0xff]
    %v191 = vld [vmem:[#allocation5 + $0x318] sm:$0xff]
    %v192 = vld [vmem:[#allocation5 + $0x320] sm:$0xff]
    %v193 = vld [vmem:[#allocation5 + $0x328] sm:$0xff]
    %v194 = vld [vmem:[#allocation5 + $0x330] sm:$0xff]
    %v195 = vld [vmem:[#allocation5 + $0x338] sm:$0xff]
    %v196 = vld [vmem:[#allocation5 + $0x340] sm:$0xff]
    %v197 = vld [vmem:[#allocation5 + $0x348] sm:$0xff]
    %v198 = vld [vmem:[#allocation5 + $0x350] sm:$0xff]
    %v199 = vld [vmem:[#allocation5 + $0x358] sm:$0xff]
    %v200 = vld [vmem:[#allocation5 + $0x360] sm:$0xff]
    %v201 = vld [vmem:[#allocation5 + $0x368] sm:$0xff]
    %v202 = vld [vmem:[#allocation5 + $0x370] sm:$0xff]
    %v203 = vld [vmem:[#allocation5 + $0x378] sm:$0xff]
    %v204 = vld [vmem:[#allocation5 + $0x380] sm:$0xff]
    %v205 = vld [vmem:[#allocation5 + $0x388] sm:$0xff]
    %v206 = vld [vmem:[#allocation5 + $0x390] sm:$0xff]
    %v207 = vld [vmem:[#allocation5 + $0x398] sm:$0xff]
    %v208 = vld [vmem:[#allocation5 + $0x3a0] sm:$0xff]
    %v209 = vld [vmem:[#allocation5 + $0x3a8] sm:$0xff]
    %v210 = vld [vmem:[#allocation5 + $0x3b0] sm:$0xff]
    %v211 = vld [vmem:[#allocation5 + $0x3b8] sm:$0xff]
    %v212 = vld [vmem:[#allocation5 + $0x3c0] sm:$0xff]
    %v213 = vld [vmem:[#allocation5 + $0x3c8] sm:$0xff]
    %v214 = vld [vmem:[#allocation5 + $0x3d0] sm:$0xff]
    %v215 = vld [vmem:[#allocation5 + $0x3d8] sm:$0xff]
    %v216 = vld [vmem:[#allocation5 + $0x3e0] sm:$0xff]
    %v217 = vld [vmem:[#allocation5 + $0x3e8] sm:$0xff]
    %v218 = vld [vmem:[#allocation5 + $0x3f0] sm:$0xff]
    %v219 = vld [vmem:[#allocation5 + $0x3f8] sm:$0xff]
    %v220 = vld [vmem:[#allocation5 + $0x400] sm:$0xff]
    %v221 = vld [vmem:[#allocation5 + $0x408] sm:$0xff]
    %v222 = vld [vmem:[#allocation5 + $0x410] sm:$0xff]
    %v223 = vld [vmem:[#allocation5 + $0x418] sm:$0xff]
    %v224 = vld [vmem:[#allocation5 + $0x420] sm:$0xff]
    %v225 = vld [vmem:[#allocation5 + $0x428] sm:$0xff]
    %v226 = vld [vmem:[#allocation5 + $0x430] sm:$0xff]
    %v227 = vld [vmem:[#allocation5 + $0x438] sm:$0xff]
    %v228 = vld [vmem:[#allocation5 + $0x440] sm:$0xff]
    %v229 = vld [vmem:[#allocation5 + $0x448] sm:$0xff]
    %v230 = vld [vmem:[#allocation5 + $0x450] sm:$0xff]
    %v231 = vld [vmem:[#allocation5 + $0x458] sm:$0xff]
    %v232 = vld [vmem:[#allocation5 + $0x460] sm:$0xff]
    %v233 = vld [vmem:[#allocation5 + $0x468] sm:$0xff]
    %v234 = vld [vmem:[#allocation5 + $0x470] sm:$0xff]
    %v235 = vld [vmem:[#allocation5 + $0x478] sm:$0xff]
    %v236 = vld [vmem:[#allocation5 + $0x480] sm:$0xff]
    %v237 = vld [vmem:[#allocation5 + $0x488] sm:$0xff]
    %v238 = vld [vmem:[#allocation5 + $0x490] sm:$0xff]
    %v239 = vld [vmem:[#allocation5 + $0x498] sm:$0xff]
    %v240 = vld [vmem:[#allocation5 + $0x4a0] sm:$0xff]
    %v241 = vld [vmem:[#allocation5 + $0x4a8] sm:$0xff]
    %v242 = vld [vmem:[#allocation5 + $0x4b0] sm:$0xff]
    %v243 = vld [vmem:[#allocation5 + $0x4b8] sm:$0xff]
    %v244 = vld [vmem:[#allocation5 + $0x4c0] sm:$0xff]
    %v245 = vld [vmem:[#allocation5 + $0x4c8] sm:$0xff]
    %v246 = vld [vmem:[#allocation5 + $0x4d0] sm:$0xff]
    %v247 = vld [vmem:[#allocation5 + $0x4d8] sm:$0xff]
    %v248 = vld [vmem:[#allocation5 + $0x4e0] sm:$0xff]
    %v249 = vld [vmem:[#allocation5 + $0x4e8] sm:$0xff]
    %v250 = vld [vmem:[#allocation5 + $0x4f0] sm:$0xff]
    %v251 = vld [vmem:[#allocation5 + $0x4f8] sm:$0xff]
    %v252 = vld [vmem:[#allocation5 + $0x500] sm:$0xff]
    %v253 = vld [vmem:[#allocation5 + $0x508] sm:$0xff]
    %v254 = vld [vmem:[#allocation5 + $0x510] sm:$0xff]
    %v255 = vld [vmem:[#allocation5 + $0x518] sm:$0xff]
    %v256 = vld [vmem:[#allocation5 + $0x520] sm:$0xff]
    %v257 = vld [vmem:[#allocation5 + $0x528] sm:$0xff]
    %v258 = vld [vmem:[#allocation5 + $0x530] sm:$0xff]
    %v259 = vld [vmem:[#allocation5 + $0x538] sm:$0xff]
    %v260 = vld [vmem:[#allocation5 + $0x540] sm:$0xff]
    %v261 = vld [vmem:[#allocation5 + $0x548] sm:$0xff]
    %v262 = vld [vmem:[#allocation5 + $0x550] sm:$0xff]
    %v263 = vld [vmem:[#allocation5 + $0x558] sm:$0xff]
    %v264 = vld [vmem:[#allocation5 + $0x560] sm:$0xff]
    %v265 = vld [vmem:[#allocation5 + $0x568] sm:$0xff]
    %v266 = vld [vmem:[#allocation5 + $0x570] sm:$0xff]
    %v267 = vld [vmem:[#allocation5 + $0x578] sm:$0xff]
    %v268 = vld [vmem:[#allocation5 + $0x580] sm:$0xff]
    %v269 = vld [vmem:[#allocation5 + $0x588] sm:$0xff]
    %v270 = vld [vmem:[#allocation5 + $0x590] sm:$0xff]
    %v271 = vld [vmem:[#allocation5 + $0x598] sm:$0xff]
    %v272 = vld [vmem:[#allocation5 + $0x5a0] sm:$0xff]
    %v273 = vld [vmem:[#allocation5 + $0x5a8] sm:$0xff]
    %v274 = vld [vmem:[#allocation5 + $0x5b0] sm:$0xff]
    %v275 = vld [vmem:[#allocation5 + $0x5b8] sm:$0xff]
    %v276 = vld [vmem:[#allocation5 + $0x5c0] sm:$0xff]
    %v277 = vld [vmem:[#allocation5 + $0x5c8] sm:$0xff]
    %v278 = vld [vmem:[#allocation5 + $0x5d0] sm:$0xff]
    %v279 = vld [vmem:[#allocation5 + $0x5d8] sm:$0xff]
    %v280 = vld [vmem:[#allocation5 + $0x5e0] sm:$0xff]
    %v281 = vld [vmem:[#allocation5 + $0x5e8] sm:$0xff]
    %v282 = vld [vmem:[#allocation5 + $0x5f0] sm:$0xff]
    %v283 = vld [vmem:[#allocation5 + $0x5f8] sm:$0xff]
    %v284 = vld [vmem:[#allocation5 + $0x600] sm:$0xff]
    %v285 = vld [vmem:[#allocation5 + $0x608] sm:$0xff]
    %v286 = vld [vmem:[#allocation5 + $0x610] sm:$0xff]
    %v287 = vld [vmem:[#allocation5 + $0x618] sm:$0xff]
    %v288 = vld [vmem:[#allocation5 + $0x620] sm:$0xff]
    %v289 = vld [vmem:[#allocation5 + $0x628] sm:$0xff]
    %v290 = vld [vmem:[#allocation5 + $0x630] sm:$0xff]
    %v291 = vld [vmem:[#allocation5 + $0x638] sm:$0xff]
    %v292 = vld [vmem:[#allocation5 + $0x640] sm:$0xff]
    %v293 = vld [vmem:[#allocation5 + $0x648] sm:$0xff]
    %v294 = vld [vmem:[#allocation5 + $0x650] sm:$0xff]
    %v295 = vld [vmem:[#allocation5 + $0x658] sm:$0xff]
    %v296 = vld [vmem:[#allocation5 + $0x660] sm:$0xff]
    %v297 = vld [vmem:[#allocation5 + $0x668] sm:$0xff]
    %v298 = vld [vmem:[#allocation5 + $0x670] sm:$0xff]
    %v299 = vld [vmem:[#allocation5 + $0x678] sm:$0xff]
    %v300 = vld [vmem:[#allocation5 + $0x680] sm:$0xff]
    %v301 = vld [vmem:[#allocation5 + $0x688] sm:$0xff]
    %v302 = vld [vmem:[#allocation5 + $0x690] sm:$0xff]
    %v303 = vld [vmem:[#allocation5 + $0x698] sm:$0xff]
    %v304 = vld [vmem:[#allocation5 + $0x6a0] sm:$0xff]
    %v305 = vld [vmem:[#allocation5 + $0x6a8] sm:$0xff]
    %v306 = vld [vmem:[#allocation5 + $0x6b0] sm:$0xff]
    %v307 = vld [vmem:[#allocation5 + $0x6b8] sm:$0xff]
    %v308 = vld [vmem:[#allocation5 + $0x6c0] sm:$0xff]
    %v309 = vld [vmem:[#allocation5 + $0x6c8] sm:$0xff]
    %v310 = vld [vmem:[#allocation5 + $0x6d0] sm:$0xff]
    %v311 = vld [vmem:[#allocation5 + $0x6d8] sm:$0xff]
    %v312 = vld [vmem:[#allocation5 + $0x6e0] sm:$0xff]
    %v313 = vld [vmem:[#allocation5 + $0x6e8] sm:$0xff]
    %v314 = vld [vmem:[#allocation5 + $0x6f0] sm:$0xff]
    %v315 = vld [vmem:[#allocation5 + $0x6f8] sm:$0xff]
    %v316 = vld [vmem:[#allocation5 + $0x700] sm:$0xff]
    %v317 = vld [vmem:[#allocation5 + $0x708] sm:$0xff]
    %v318 = vld [vmem:[#allocation5 + $0x710] sm:$0xff]
    %v319 = vld [vmem:[#allocation5 + $0x718] sm:$0xff]
    %v320 = vld [vmem:[#allocation5 + $0x720] sm:$0xff]
    %v321 = vld [vmem:[#allocation5 + $0x728] sm:$0xff]
    %v322 = vld [vmem:[#allocation5 + $0x730] sm:$0xff]
    %v323 = vld [vmem:[#allocation5 + $0x738] sm:$0xff]
    %v324 = vld [vmem:[#allocation5 + $0x740] sm:$0xff]
    %v325 = vld [vmem:[#allocation5 + $0x748] sm:$0xff]
    %v326 = vld [vmem:[#allocation5 + $0x750] sm:$0xff]
    %v327 = vld [vmem:[#allocation5 + $0x758] sm:$0xff]
    %v328 = vld [vmem:[#allocation5 + $0x760] sm:$0xff]
    %v329 = vld [vmem:[#allocation5 + $0x768] sm:$0xff]
    %v330 = vld [vmem:[#allocation5 + $0x770] sm:$0xff]
    %v331 = vld [vmem:[#allocation5 + $0x778] sm:$0xff]
    %v332 = vld [vmem:[#allocation5 + $0x780] sm:$0xff]
    %v333 = vld [vmem:[#allocation5 + $0x788] sm:$0xff]
    %v334 = vld [vmem:[#allocation5 + $0x790] sm:$0xff]
    %v335 = vld [vmem:[#allocation5 + $0x798] sm:$0xff]
    %v336 = vld [vmem:[#allocation5 + $0x7a0] sm:$0xff]
    %v337 = vld [vmem:[#allocation5 + $0x7a8] sm:$0xff]
    %v338 = vld [vmem:[#allocation5 + $0x7b0] sm:$0xff]
    %v339 = vld [vmem:[#allocation5 + $0x7b8] sm:$0xff]
    %v340 = vld [vmem:[#allocation5 + $0x7c0] sm:$0xff]
    %v341 = vld [vmem:[#allocation5 + $0x7c8] sm:$0xff]
    %v342 = vld [vmem:[#allocation5 + $0x7d0] sm:$0xff]
    %v343 = vld [vmem:[#allocation5 + $0x7d8] sm:$0xff]
    %v344 = vld [vmem:[#allocation5 + $0x7e0] sm:$0xff]
    %v345 = vld [vmem:[#allocation5 + $0x7e8] sm:$0xff]
    %v346 = vld [vmem:[#allocation5 + $0x7f0] sm:$0xff]
    %v347 = vld [vmem:[#allocation5 + $0x7f8] sm:$0xff]
    %v348 = vld [vmem:[%s2] sm:$0xf]
    %v350 = vlaneseq
    %v351 = vshrl.u32 %v350, 7
    %v352 = vsub.s32 0, %v351
    %v353 = vrot.slane %v348, %v352
    %v354 = vlaneseq
    %v355 = vshrl.u32 %v354, 7
    %v356 = vsub.s32 1, %v355
    %v357 = vrot.slane %v348, %v356
    %v358 = vlaneseq
    %v359 = vshrl.u32 %v358, 7
    %v360 = vsub.s32 2, %v359
    %v361 = vrot.slane %v348, %v360
    %v362 = vlaneseq
    %v363 = vshrl.u32 %v362, 7
    %v364 = vsub.s32 3, %v363
    %v365 = vrot.slane %v348, %v364
    %v626 = vunpack.c.l.b16 %v92
    %v627 = vunpack.c.h.b16 %v92
    %v628 = vunpack.c.l.b16 %v93
    %v629 = vunpack.c.h.b16 %v93
    %v630 = vunpack.c.l.b16 %v94
    %v631 = vunpack.c.h.b16 %v94
    %v632 = vunpack.c.l.b16 %v95
    %v633 = vunpack.c.h.b16 %v95
    %v634 = vunpack.c.l.b16 %v96
    %v635 = vunpack.c.h.b16 %v96
    %v636 = vunpack.c.l.b16 %v97
    %v637 = vunpack.c.h.b16 %v97
    %v638 = vunpack.c.l.b16 %v98
    %v639 = vunpack.c.h.b16 %v98
    %v640 = vunpack.c.l.b16 %v99
    %v641 = vunpack.c.h.b16 %v99
    %v642 = vunpack.c.l.b16 %v100
    %v643 = vunpack.c.h.b16 %v100
    %v644 = vunpack.c.l.b16 %v101
    %v645 = vunpack.c.h.b16 %v101
    %v646 = vunpack.c.l.b16 %v102
    %v647 = vunpack.c.h.b16 %v102
    %v648 = vunpack.c.l.b16 %v103
    %v649 = vunpack.c.h.b16 %v103
    %v650 = vunpack.c.l.b16 %v104
    %v651 = vunpack.c.h.b16 %v104
    %v652 = vunpack.c.l.b16 %v105
    %v653 = vunpack.c.h.b16 %v105
    %v654 = vunpack.c.l.b16 %v106
    %v655 = vunpack.c.h.b16 %v106
    %v656 = vunpack.c.l.b16 %v107
    %v657 = vunpack.c.h.b16 %v107
    %v658 = vunpack.c.l.b16 %v108
    %v659 = vunpack.c.h.b16 %v108
    %v660 = vunpack.c.l.b16 %v109
    %v661 = vunpack.c.h.b16 %v109
    %v662 = vunpack.c.l.b16 %v110
    %v663 = vunpack.c.h.b16 %v110
    %v664 = vunpack.c.l.b16 %v111
    %v665 = vunpack.c.h.b16 %v111
    %v666 = vunpack.c.l.b16 %v112
    %v667 = vunpack.c.h.b16 %v112
    %v668 = vunpack.c.l.b16 %v113
    %v669 = vunpack.c.h.b16 %v113
    %v670 = vunpack.c.l.b16 %v114
    %v671 = vunpack.c.h.b16 %v114
    %v672 = vunpack.c.l.b16 %v115
    %v673 = vunpack.c.h.b16 %v115
    %v674 = vunpack.c.l.b16 %v116
    %v675 = vunpack.c.h.b16 %v116
    %v676 = vunpack.c.l.b16 %v117
    %v677 = vunpack.c.h.b16 %v117
    %v678 = vunpack.c.l.b16 %v118
    %v679 = vunpack.c.h.b16 %v118
    %v680 = vunpack.c.l.b16 %v119
    %v681 = vunpack.c.h.b16 %v119
    %v682 = vunpack.c.l.b16 %v120
    %v683 = vunpack.c.h.b16 %v120
    %v684 = vunpack.c.l.b16 %v121
    %v685 = vunpack.c.h.b16 %v121
    %v686 = vunpack.c.l.b16 %v122
    %v687 = vunpack.c.h.b16 %v122
    %v688 = vunpack.c.l.b16 %v123
    %v689 = vunpack.c.h.b16 %v123
    %v690 = vunpack.c.l.b16 %v124
    %v691 = vunpack.c.h.b16 %v124
    %v692 = vunpack.c.l.b16 %v125
    %v693 = vunpack.c.h.b16 %v125
    %v694 = vunpack.c.l.b16 %v126
    %v695 = vunpack.c.h.b16 %v126
    %v696 = vunpack.c.l.b16 %v127
    %v697 = vunpack.c.h.b16 %v127
    %v698 = vunpack.c.l.b16 %v128
    %v699 = vunpack.c.h.b16 %v128
    %v700 = vunpack.c.l.b16 %v129
    %v701 = vunpack.c.h.b16 %v129
    %v702 = vunpack.c.l.b16 %v130
    %v703 = vunpack.c.h.b16 %v130
    %v704 = vunpack.c.l.b16 %v131
    %v705 = vunpack.c.h.b16 %v131
    %v706 = vunpack.c.l.b16 %v132
    %v707 = vunpack.c.h.b16 %v132
    %v708 = vunpack.c.l.b16 %v133
    %v709 = vunpack.c.h.b16 %v133
    %v710 = vunpack.c.l.b16 %v134
    %v711 = vunpack.c.h.b16 %v134
    %v712 = vunpack.c.l.b16 %v135
    %v713 = vunpack.c.h.b16 %v135
    %v714 = vunpack.c.l.b16 %v136
    %v715 = vunpack.c.h.b16 %v136
    %v716 = vunpack.c.l.b16 %v137
    %v717 = vunpack.c.h.b16 %v137
    %v718 = vunpack.c.l.b16 %v138
    %v719 = vunpack.c.h.b16 %v138
    %v720 = vunpack.c.l.b16 %v139
    %v721 = vunpack.c.h.b16 %v139
    %v722 = vunpack.c.l.b16 %v140
    %v723 = vunpack.c.h.b16 %v140
    %v724 = vunpack.c.l.b16 %v141
    %v725 = vunpack.c.h.b16 %v141
    %v726 = vunpack.c.l.b16 %v142
    %v727 = vunpack.c.h.b16 %v142
    %v728 = vunpack.c.l.b16 %v143
    %v729 = vunpack.c.h.b16 %v143
    %v730 = vunpack.c.l.b16 %v144
    %v731 = vunpack.c.h.b16 %v144
    %v732 = vunpack.c.l.b16 %v145
    %v733 = vunpack.c.h.b16 %v145
    %v734 = vunpack.c.l.b16 %v146
    %v735 = vunpack.c.h.b16 %v146
    %v736 = vunpack.c.l.b16 %v147
    %v737 = vunpack.c.h.b16 %v147
    %v738 = vunpack.c.l.b16 %v148
    %v739 = vunpack.c.h.b16 %v148
    %v740 = vunpack.c.l.b16 %v149
    %v741 = vunpack.c.h.b16 %v149
    %v742 = vunpack.c.l.b16 %v150
    %v743 = vunpack.c.h.b16 %v150
    %v744 = vunpack.c.l.b16 %v151
    %v745 = vunpack.c.h.b16 %v151
    %v746 = vunpack.c.l.b16 %v152
    %v747 = vunpack.c.h.b16 %v152
    %v748 = vunpack.c.l.b16 %v153
    %v749 = vunpack.c.h.b16 %v153
    %v750 = vunpack.c.l.b16 %v154
    %v751 = vunpack.c.h.b16 %v154
    %v752 = vunpack.c.l.b16 %v155
    %v753 = vunpack.c.h.b16 %v155
    %v754 = vunpack.c.l.b16 %v156
    %v755 = vunpack.c.h.b16 %v156
    %v756 = vunpack.c.l.b16 %v157
    %v757 = vunpack.c.h.b16 %v157
    %v758 = vunpack.c.l.b16 %v158
    %v759 = vunpack.c.h.b16 %v158
    %v760 = vunpack.c.l.b16 %v159
    %v761 = vunpack.c.h.b16 %v159
    %v762 = vunpack.c.l.b16 %v160
    %v763 = vunpack.c.h.b16 %v160
    %v764 = vunpack.c.l.b16 %v161
    %v765 = vunpack.c.h.b16 %v161
    %v766 = vunpack.c.l.b16 %v162
    %v767 = vunpack.c.h.b16 %v162
    %v768 = vunpack.c.l.b16 %v163
    %v769 = vunpack.c.h.b16 %v163
    %v770 = vunpack.c.l.b16 %v164
    %v771 = vunpack.c.h.b16 %v164
    %v772 = vunpack.c.l.b16 %v165
    %v773 = vunpack.c.h.b16 %v165
    %v774 = vunpack.c.l.b16 %v166
    %v775 = vunpack.c.h.b16 %v166
    %v776 = vunpack.c.l.b16 %v167
    %v777 = vunpack.c.h.b16 %v167
    %v778 = vunpack.c.l.b16 %v168
    %v779 = vunpack.c.h.b16 %v168
    %v780 = vunpack.c.l.b16 %v169
    %v781 = vunpack.c.h.b16 %v169
    %v782 = vunpack.c.l.b16 %v170
    %v783 = vunpack.c.h.b16 %v170
    %v784 = vunpack.c.l.b16 %v171
    %v785 = vunpack.c.h.b16 %v171
    %v786 = vunpack.c.l.b16 %v172
    %v787 = vunpack.c.h.b16 %v172
    %v788 = vunpack.c.l.b16 %v173
    %v789 = vunpack.c.h.b16 %v173
    %v790 = vunpack.c.l.b16 %v174
    %v791 = vunpack.c.h.b16 %v174
    %v792 = vunpack.c.l.b16 %v175
    %v793 = vunpack.c.h.b16 %v175
    %v794 = vunpack.c.l.b16 %v176
    %v795 = vunpack.c.h.b16 %v176
    %v796 = vunpack.c.l.b16 %v177
    %v797 = vunpack.c.h.b16 %v177
    %v798 = vunpack.c.l.b16 %v178
    %v799 = vunpack.c.h.b16 %v178
    %v800 = vunpack.c.l.b16 %v179
    %v801 = vunpack.c.h.b16 %v179
    %v802 = vunpack.c.l.b16 %v180
    %v803 = vunpack.c.h.b16 %v180
    %v804 = vunpack.c.l.b16 %v181
    %v805 = vunpack.c.h.b16 %v181
    %v806 = vunpack.c.l.b16 %v182
    %v807 = vunpack.c.h.b16 %v182
    %v808 = vunpack.c.l.b16 %v183
    %v809 = vunpack.c.h.b16 %v183
    %v810 = vunpack.c.l.b16 %v184
    %v811 = vunpack.c.h.b16 %v184
    %v812 = vunpack.c.l.b16 %v185
    %v813 = vunpack.c.h.b16 %v185
    %v814 = vunpack.c.l.b16 %v186
    %v815 = vunpack.c.h.b16 %v186
    %v816 = vunpack.c.l.b16 %v187
    %v817 = vunpack.c.h.b16 %v187
    %v818 = vunpack.c.l.b16 %v188
    %v819 = vunpack.c.h.b16 %v188
    %v820 = vunpack.c.l.b16 %v189
    %v821 = vunpack.c.h.b16 %v189
    %v822 = vunpack.c.l.b16 %v190
    %v823 = vunpack.c.h.b16 %v190
    %v824 = vunpack.c.l.b16 %v191
    %v825 = vunpack.c.h.b16 %v191
    %v826 = vunpack.c.l.b16 %v192
    %v827 = vunpack.c.h.b16 %v192
    %v828 = vunpack.c.l.b16 %v193
    %v829 = vunpack.c.h.b16 %v193
    %v830 = vunpack.c.l.b16 %v194
    %v831 = vunpack.c.h.b16 %v194
    %v832 = vunpack.c.l.b16 %v195
    %v833 = vunpack.c.h.b16 %v195
    %v834 = vunpack.c.l.b16 %v196
    %v835 = vunpack.c.h.b16 %v196
    %v836 = vunpack.c.l.b16 %v197
    %v837 = vunpack.c.h.b16 %v197
    %v838 = vunpack.c.l.b16 %v198
    %v839 = vunpack.c.h.b16 %v198
    %v840 = vunpack.c.l.b16 %v199
    %v841 = vunpack.c.h.b16 %v199
    %v842 = vunpack.c.l.b16 %v200
    %v843 = vunpack.c.h.b16 %v200
    %v844 = vunpack.c.l.b16 %v201
    %v845 = vunpack.c.h.b16 %v201
    %v846 = vunpack.c.l.b16 %v202
    %v847 = vunpack.c.h.b16 %v202
    %v848 = vunpack.c.l.b16 %v203
    %v849 = vunpack.c.h.b16 %v203
    %v850 = vunpack.c.l.b16 %v204
    %v851 = vunpack.c.h.b16 %v204
    %v852 = vunpack.c.l.b16 %v205
    %v853 = vunpack.c.h.b16 %v205
    %v854 = vunpack.c.l.b16 %v206
    %v855 = vunpack.c.h.b16 %v206
    %v856 = vunpack.c.l.b16 %v207
    %v857 = vunpack.c.h.b16 %v207
    %v858 = vunpack.c.l.b16 %v208
    %v859 = vunpack.c.h.b16 %v208
    %v860 = vunpack.c.l.b16 %v209
    %v861 = vunpack.c.h.b16 %v209
    %v862 = vunpack.c.l.b16 %v210
    %v863 = vunpack.c.h.b16 %v210
    %v864 = vunpack.c.l.b16 %v211
    %v865 = vunpack.c.h.b16 %v211
    %v866 = vunpack.c.l.b16 %v212
    %v867 = vunpack.c.h.b16 %v212
    %v868 = vunpack.c.l.b16 %v213
    %v869 = vunpack.c.h.b16 %v213
    %v870 = vunpack.c.l.b16 %v214
    %v871 = vunpack.c.h.b16 %v214
    %v872 = vunpack.c.l.b16 %v215
    %v873 = vunpack.c.h.b16 %v215
    %v874 = vunpack.c.l.b16 %v216
    %v875 = vunpack.c.h.b16 %v216
    %v876 = vunpack.c.l.b16 %v217
    %v877 = vunpack.c.h.b16 %v217
    %v878 = vunpack.c.l.b16 %v218
    %v879 = vunpack.c.h.b16 %v218
    %v880 = vunpack.c.l.b16 %v219
    %v881 = vunpack.c.h.b16 %v219
    %v882 = vunpack.c.l.b16 %v220
    %v883 = vunpack.c.h.b16 %v220
    %v884 = vunpack.c.l.b16 %v221
    %v885 = vunpack.c.h.b16 %v221
    %v886 = vunpack.c.l.b16 %v222
    %v887 = vunpack.c.h.b16 %v222
    %v888 = vunpack.c.l.b16 %v223
    %v889 = vunpack.c.h.b16 %v223
    %v890 = vunpack.c.l.b16 %v224
    %v891 = vunpack.c.h.b16 %v224
    %v892 = vunpack.c.l.b16 %v225
    %v893 = vunpack.c.h.b16 %v225
    %v894 = vunpack.c.l.b16 %v226
    %v895 = vunpack.c.h.b16 %v226
    %v896 = vunpack.c.l.b16 %v227
    %v897 = vunpack.c.h.b16 %v227
    %v898 = vunpack.c.l.b16 %v228
    %v899 = vunpack.c.h.b16 %v228
    %v900 = vunpack.c.l.b16 %v229
    %v901 = vunpack.c.h.b16 %v229
    %v902 = vunpack.c.l.b16 %v230
    %v903 = vunpack.c.h.b16 %v230
    %v904 = vunpack.c.l.b16 %v231
    %v905 = vunpack.c.h.b16 %v231
    %v906 = vunpack.c.l.b16 %v232
    %v907 = vunpack.c.h.b16 %v232
    %v908 = vunpack.c.l.b16 %v233
    %v909 = vunpack.c.h.b16 %v233
    %v910 = vunpack.c.l.b16 %v234
    %v911 = vunpack.c.h.b16 %v234
    %v912 = vunpack.c.l.b16 %v235
    %v913 = vunpack.c.h.b16 %v235
    %v914 = vunpack.c.l.b16 %v236
    %v915 = vunpack.c.h.b16 %v236
    %v916 = vunpack.c.l.b16 %v237
    %v917 = vunpack.c.h.b16 %v237
    %v918 = vunpack.c.l.b16 %v238
    %v919 = vunpack.c.h.b16 %v238
    %v920 = vunpack.c.l.b16 %v239
    %v921 = vunpack.c.h.b16 %v239
    %v922 = vunpack.c.l.b16 %v240
    %v923 = vunpack.c.h.b16 %v240
    %v924 = vunpack.c.l.b16 %v241
    %v925 = vunpack.c.h.b16 %v241
    %v926 = vunpack.c.l.b16 %v242
    %v927 = vunpack.c.h.b16 %v242
    %v928 = vunpack.c.l.b16 %v243
    %v929 = vunpack.c.h.b16 %v243
    %v930 = vunpack.c.l.b16 %v244
    %v931 = vunpack.c.h.b16 %v244
    %v932 = vunpack.c.l.b16 %v245
    %v933 = vunpack.c.h.b16 %v245
    %v934 = vunpack.c.l.b16 %v246
    %v935 = vunpack.c.h.b16 %v246
    %v936 = vunpack.c.l.b16 %v247
    %v937 = vunpack.c.h.b16 %v247
    %v938 = vunpack.c.l.b16 %v248
    %v939 = vunpack.c.h.b16 %v248
    %v940 = vunpack.c.l.b16 %v249
    %v941 = vunpack.c.h.b16 %v249
    %v942 = vunpack.c.l.b16 %v250
    %v943 = vunpack.c.h.b16 %v250
    %v944 = vunpack.c.l.b16 %v251
    %v945 = vunpack.c.h.b16 %v251
    %v946 = vunpack.c.l.b16 %v252
    %v947 = vunpack.c.h.b16 %v252
    %v948 = vunpack.c.l.b16 %v253
    %v949 = vunpack.c.h.b16 %v253
    %v950 = vunpack.c.l.b16 %v254
    %v951 = vunpack.c.h.b16 %v254
    %v952 = vunpack.c.l.b16 %v255
    %v953 = vunpack.c.h.b16 %v255
    %v954 = vunpack.c.l.b16 %v256
    %v955 = vunpack.c.h.b16 %v256
    %v956 = vunpack.c.l.b16 %v257
    %v957 = vunpack.c.h.b16 %v257
    %v958 = vunpack.c.l.b16 %v258
    %v959 = vunpack.c.h.b16 %v258
    %v960 = vunpack.c.l.b16 %v259
    %v961 = vunpack.c.h.b16 %v259
    %v962 = vunpack.c.l.b16 %v260
    %v963 = vunpack.c.h.b16 %v260
    %v964 = vunpack.c.l.b16 %v261
    %v965 = vunpack.c.h.b16 %v261
    %v966 = vunpack.c.l.b16 %v262
    %v967 = vunpack.c.h.b16 %v262
    %v968 = vunpack.c.l.b16 %v263
    %v969 = vunpack.c.h.b16 %v263
    %v970 = vunpack.c.l.b16 %v264
    %v971 = vunpack.c.h.b16 %v264
    %v972 = vunpack.c.l.b16 %v265
    %v973 = vunpack.c.h.b16 %v265
    %v974 = vunpack.c.l.b16 %v266
    %v975 = vunpack.c.h.b16 %v266
    %v976 = vunpack.c.l.b16 %v267
    %v977 = vunpack.c.h.b16 %v267
    %v978 = vunpack.c.l.b16 %v268
    %v979 = vunpack.c.h.b16 %v268
    %v980 = vunpack.c.l.b16 %v269
    %v981 = vunpack.c.h.b16 %v269
    %v982 = vunpack.c.l.b16 %v270
    %v983 = vunpack.c.h.b16 %v270
    %v984 = vunpack.c.l.b16 %v271
    %v985 = vunpack.c.h.b16 %v271
    %v986 = vunpack.c.l.b16 %v272
    %v987 = vunpack.c.h.b16 %v272
    %v988 = vunpack.c.l.b16 %v273
    %v989 = vunpack.c.h.b16 %v273
    %v990 = vunpack.c.l.b16 %v274
    %v991 = vunpack.c.h.b16 %v274
    %v992 = vunpack.c.l.b16 %v275
    %v993 = vunpack.c.h.b16 %v275
    %v994 = vunpack.c.l.b16 %v276
    %v995 = vunpack.c.h.b16 %v276
    %v996 = vunpack.c.l.b16 %v277
    %v997 = vunpack.c.h.b16 %v277
    %v998 = vunpack.c.l.b16 %v278
    %v999 = vunpack.c.h.b16 %v278
    %v1000 = vunpack.c.l.b16 %v279
    %v1001 = vunpack.c.h.b16 %v279
    %v1002 = vunpack.c.l.b16 %v280
    %v1003 = vunpack.c.h.b16 %v280
    %v1004 = vunpack.c.l.b16 %v281
    %v1005 = vunpack.c.h.b16 %v281
    %v1006 = vunpack.c.l.b16 %v282
    %v1007 = vunpack.c.h.b16 %v282
    %v1008 = vunpack.c.l.b16 %v283
    %v1009 = vunpack.c.h.b16 %v283
    %v1010 = vunpack.c.l.b16 %v284
    %v1011 = vunpack.c.h.b16 %v284
    %v1012 = vunpack.c.l.b16 %v285
    %v1013 = vunpack.c.h.b16 %v285
    %v1014 = vunpack.c.l.b16 %v286
    %v1015 = vunpack.c.h.b16 %v286
    %v1016 = vunpack.c.l.b16 %v287
    %v1017 = vunpack.c.h.b16 %v287
    %v1018 = vunpack.c.l.b16 %v288
    %v1019 = vunpack.c.h.b16 %v288
    %v1020 = vunpack.c.l.b16 %v289
    %v1021 = vunpack.c.h.b16 %v289
    %v1022 = vunpack.c.l.b16 %v290
    %v1023 = vunpack.c.h.b16 %v290
    %v1024 = vunpack.c.l.b16 %v291
    %v1025 = vunpack.c.h.b16 %v291
    %v1026 = vunpack.c.l.b16 %v292
    %v1027 = vunpack.c.h.b16 %v292
    %v1028 = vunpack.c.l.b16 %v293
    %v1029 = vunpack.c.h.b16 %v293
    %v1030 = vunpack.c.l.b16 %v294
    %v1031 = vunpack.c.h.b16 %v294
    %v1032 = vunpack.c.l.b16 %v295
    %v1033 = vunpack.c.h.b16 %v295
    %v1034 = vunpack.c.l.b16 %v296
    %v1035 = vunpack.c.h.b16 %v296
    %v1036 = vunpack.c.l.b16 %v297
    %v1037 = vunpack.c.h.b16 %v297
    %v1038 = vunpack.c.l.b16 %v298
    %v1039 = vunpack.c.h.b16 %v298
    %v1040 = vunpack.c.l.b16 %v299
    %v1041 = vunpack.c.h.b16 %v299
    %v1042 = vunpack.c.l.b16 %v300
    %v1043 = vunpack.c.h.b16 %v300
    %v1044 = vunpack.c.l.b16 %v301
    %v1045 = vunpack.c.h.b16 %v301
    %v1046 = vunpack.c.l.b16 %v302
    %v1047 = vunpack.c.h.b16 %v302
    %v1048 = vunpack.c.l.b16 %v303
    %v1049 = vunpack.c.h.b16 %v303
    %v1050 = vunpack.c.l.b16 %v304
    %v1051 = vunpack.c.h.b16 %v304
    %v1052 = vunpack.c.l.b16 %v305
    %v1053 = vunpack.c.h.b16 %v305
    %v1054 = vunpack.c.l.b16 %v306
    %v1055 = vunpack.c.h.b16 %v306
    %v1056 = vunpack.c.l.b16 %v307
    %v1057 = vunpack.c.h.b16 %v307
    %v1058 = vunpack.c.l.b16 %v308
    %v1059 = vunpack.c.h.b16 %v308
    %v1060 = vunpack.c.l.b16 %v309
    %v1061 = vunpack.c.h.b16 %v309
    %v1062 = vunpack.c.l.b16 %v310
    %v1063 = vunpack.c.h.b16 %v310
    %v1064 = vunpack.c.l.b16 %v311
    %v1065 = vunpack.c.h.b16 %v311
    %v1066 = vunpack.c.l.b16 %v312
    %v1067 = vunpack.c.h.b16 %v312
    %v1068 = vunpack.c.l.b16 %v313
    %v1069 = vunpack.c.h.b16 %v313
    %v1070 = vunpack.c.l.b16 %v314
    %v1071 = vunpack.c.h.b16 %v314
    %v1072 = vunpack.c.l.b16 %v315
    %v1073 = vunpack.c.h.b16 %v315
    %v1074 = vunpack.c.l.b16 %v316
    %v1075 = vunpack.c.h.b16 %v316
    %v1076 = vunpack.c.l.b16 %v317
    %v1077 = vunpack.c.h.b16 %v317
    %v1078 = vunpack.c.l.b16 %v318
    %v1079 = vunpack.c.h.b16 %v318
    %v1080 = vunpack.c.l.b16 %v319
    %v1081 = vunpack.c.h.b16 %v319
    %v1082 = vunpack.c.l.b16 %v320
    %v1083 = vunpack.c.h.b16 %v320
    %v1084 = vunpack.c.l.b16 %v321
    %v1085 = vunpack.c.h.b16 %v321
    %v1086 = vunpack.c.l.b16 %v322
    %v1087 = vunpack.c.h.b16 %v322
    %v1088 = vunpack.c.l.b16 %v323
    %v1089 = vunpack.c.h.b16 %v323
    %v1090 = vunpack.c.l.b16 %v324
    %v1091 = vunpack.c.h.b16 %v324
    %v1092 = vunpack.c.l.b16 %v325
    %v1093 = vunpack.c.h.b16 %v325
    %v1094 = vunpack.c.l.b16 %v326
    %v1095 = vunpack.c.h.b16 %v326
    %v1096 = vunpack.c.l.b16 %v327
    %v1097 = vunpack.c.h.b16 %v327
    %v1098 = vunpack.c.l.b16 %v328
    %v1099 = vunpack.c.h.b16 %v328
    %v1100 = vunpack.c.l.b16 %v329
    %v1101 = vunpack.c.h.b16 %v329
    %v1102 = vunpack.c.l.b16 %v330
    %v1103 = vunpack.c.h.b16 %v330
    %v1104 = vunpack.c.l.b16 %v331
    %v1105 = vunpack.c.h.b16 %v331
    %v1106 = vunpack.c.l.b16 %v332
    %v1107 = vunpack.c.h.b16 %v332
    %v1108 = vunpack.c.l.b16 %v333
    %v1109 = vunpack.c.h.b16 %v333
    %v1110 = vunpack.c.l.b16 %v334
    %v1111 = vunpack.c.h.b16 %v334
    %v1112 = vunpack.c.l.b16 %v335
    %v1113 = vunpack.c.h.b16 %v335
    %v1114 = vunpack.c.l.b16 %v336
    %v1115 = vunpack.c.h.b16 %v336
    %v1116 = vunpack.c.l.b16 %v337
    %v1117 = vunpack.c.h.b16 %v337
    %v1118 = vunpack.c.l.b16 %v338
    %v1119 = vunpack.c.h.b16 %v338
    %v1120 = vunpack.c.l.b16 %v339
    %v1121 = vunpack.c.h.b16 %v339
    %v1122 = vunpack.c.l.b16 %v340
    %v1123 = vunpack.c.h.b16 %v340
    %v1124 = vunpack.c.l.b16 %v341
    %v1125 = vunpack.c.h.b16 %v341
    %v1126 = vunpack.c.l.b16 %v342
    %v1127 = vunpack.c.h.b16 %v342
    %v1128 = vunpack.c.l.b16 %v343
    %v1129 = vunpack.c.h.b16 %v343
    %v1130 = vunpack.c.l.b16 %v344
    %v1131 = vunpack.c.h.b16 %v344
    %v1132 = vunpack.c.l.b16 %v345
    %v1133 = vunpack.c.h.b16 %v345
    %v1134 = vunpack.c.l.b16 %v346
    %v1135 = vunpack.c.h.b16 %v346
    %v1136 = vunpack.c.l.b16 %v347
    %v1137 = vunpack.c.h.b16 %v347
    %v1138 = vpack.c.b16 %v630, %v626
    %v1139 = vpack.c.b16 %v631, %v627
    %v1140 = vpack.c.b16 %v632, %v628
    %v1141 = vpack.c.b16 %v633, %v629
    %v1142 = vpack.c.b16 %v638, %v634
    %v1143 = vpack.c.b16 %v639, %v635
    %v1144 = vpack.c.b16 %v640, %v636
    %v1145 = vpack.c.b16 %v641, %v637
    %v1146 = vpack.c.b16 %v646, %v642
    %v1147 = vpack.c.b16 %v647, %v643
    %v1148 = vpack.c.b16 %v648, %v644
    %v1149 = vpack.c.b16 %v649, %v645
    %v1150 = vpack.c.b16 %v654, %v650
    %v1151 = vpack.c.b16 %v655, %v651
    %v1152 = vpack.c.b16 %v656, %v652
    %v1153 = vpack.c.b16 %v657, %v653
    %v1154 = vpack.c.b16 %v662, %v658
    %v1155 = vpack.c.b16 %v663, %v659
    %v1156 = vpack.c.b16 %v664, %v660
    %v1157 = vpack.c.b16 %v665, %v661
    %v1158 = vpack.c.b16 %v670, %v666
    %v1159 = vpack.c.b16 %v671, %v667
    %v1160 = vpack.c.b16 %v672, %v668
    %v1161 = vpack.c.b16 %v673, %v669
    %v1162 = vpack.c.b16 %v678, %v674
    %v1163 = vpack.c.b16 %v679, %v675
    %v1164 = vpack.c.b16 %v680, %v676
    %v1165 = vpack.c.b16 %v681, %v677
    %v1166 = vpack.c.b16 %v686, %v682
    %v1167 = vpack.c.b16 %v687, %v683
    %v1168 = vpack.c.b16 %v688, %v684
    %v1169 = vpack.c.b16 %v689, %v685
    %v1170 = vpack.c.b16 %v694, %v690
    %v1171 = vpack.c.b16 %v695, %v691
    %v1172 = vpack.c.b16 %v696, %v692
    %v1173 = vpack.c.b16 %v697, %v693
    %v1174 = vpack.c.b16 %v702, %v698
    %v1175 = vpack.c.b16 %v703, %v699
    %v1176 = vpack.c.b16 %v704, %v700
    %v1177 = vpack.c.b16 %v705, %v701
    %v1178 = vpack.c.b16 %v710, %v706
    %v1179 = vpack.c.b16 %v711, %v707
    %v1180 = vpack.c.b16 %v712, %v708
    %v1181 = vpack.c.b16 %v713, %v709
    %v1182 = vpack.c.b16 %v718, %v714
    %v1183 = vpack.c.b16 %v719, %v715
    %v1184 = vpack.c.b16 %v720, %v716
    %v1185 = vpack.c.b16 %v721, %v717
    %v1186 = vpack.c.b16 %v726, %v722
    %v1187 = vpack.c.b16 %v727, %v723
    %v1188 = vpack.c.b16 %v728, %v724
    %v1189 = vpack.c.b16 %v729, %v725
    %v1190 = vpack.c.b16 %v734, %v730
    %v1191 = vpack.c.b16 %v735, %v731
    %v1192 = vpack.c.b16 %v736, %v732
    %v1193 = vpack.c.b16 %v737, %v733
    %v1194 = vpack.c.b16 %v742, %v738
    %v1195 = vpack.c.b16 %v743, %v739
    %v1196 = vpack.c.b16 %v744, %v740
    %v1197 = vpack.c.b16 %v745, %v741
    %v1198 = vpack.c.b16 %v750, %v746
    %v1199 = vpack.c.b16 %v751, %v747
    %v1200 = vpack.c.b16 %v752, %v748
    %v1201 = vpack.c.b16 %v753, %v749
    %v1202 = vpack.c.b16 %v758, %v754
    %v1203 = vpack.c.b16 %v759, %v755
    %v1204 = vpack.c.b16 %v760, %v756
    %v1205 = vpack.c.b16 %v761, %v757
    %v1206 = vpack.c.b16 %v766, %v762
    %v1207 = vpack.c.b16 %v767, %v763
    %v1208 = vpack.c.b16 %v768, %v764
    %v1209 = vpack.c.b16 %v769, %v765
    %v1210 = vpack.c.b16 %v774, %v770
    %v1211 = vpack.c.b16 %v775, %v771
    %v1212 = vpack.c.b16 %v776, %v772
    %v1213 = vpack.c.b16 %v777, %v773
    %v1214 = vpack.c.b16 %v782, %v778
    %v1215 = vpack.c.b16 %v783, %v779
    %v1216 = vpack.c.b16 %v784, %v780
    %v1217 = vpack.c.b16 %v785, %v781
    %v1218 = vpack.c.b16 %v790, %v786
    %v1219 = vpack.c.b16 %v791, %v787
    %v1220 = vpack.c.b16 %v792, %v788
    %v1221 = vpack.c.b16 %v793, %v789
    %v1222 = vpack.c.b16 %v798, %v794
    %v1223 = vpack.c.b16 %v799, %v795
    %v1224 = vpack.c.b16 %v800, %v796
    %v1225 = vpack.c.b16 %v801, %v797
    %v1226 = vpack.c.b16 %v806, %v802
    %v1227 = vpack.c.b16 %v807, %v803
    %v1228 = vpack.c.b16 %v808, %v804
    %v1229 = vpack.c.b16 %v809, %v805
    %v1230 = vpack.c.b16 %v814, %v810
    %v1231 = vpack.c.b16 %v815, %v811
    %v1232 = vpack.c.b16 %v816, %v812
    %v1233 = vpack.c.b16 %v817, %v813
    %v1234 = vpack.c.b16 %v822, %v818
    %v1235 = vpack.c.b16 %v823, %v819
    %v1236 = vpack.c.b16 %v824, %v820
    %v1237 = vpack.c.b16 %v825, %v821
    %v1238 = vpack.c.b16 %v830, %v826
    %v1239 = vpack.c.b16 %v831, %v827
    %v1240 = vpack.c.b16 %v832, %v828
    %v1241 = vpack.c.b16 %v833, %v829
    %v1242 = vpack.c.b16 %v838, %v834
    %v1243 = vpack.c.b16 %v839, %v835
    %v1244 = vpack.c.b16 %v840, %v836
    %v1245 = vpack.c.b16 %v841, %v837
    %v1246 = vpack.c.b16 %v846, %v842
    %v1247 = vpack.c.b16 %v847, %v843
    %v1248 = vpack.c.b16 %v848, %v844
    %v1249 = vpack.c.b16 %v849, %v845
    %v1250 = vpack.c.b16 %v854, %v850
    %v1251 = vpack.c.b16 %v855, %v851
    %v1252 = vpack.c.b16 %v856, %v852
    %v1253 = vpack.c.b16 %v857, %v853
    %v1254 = vpack.c.b16 %v862, %v858
    %v1255 = vpack.c.b16 %v863, %v859
    %v1256 = vpack.c.b16 %v864, %v860
    %v1257 = vpack.c.b16 %v865, %v861
    %v1258 = vpack.c.b16 %v870, %v866
    %v1259 = vpack.c.b16 %v871, %v867
    %v1260 = vpack.c.b16 %v872, %v868
    %v1261 = vpack.c.b16 %v873, %v869
    %v1262 = vpack.c.b16 %v878, %v874
    %v1263 = vpack.c.b16 %v879, %v875
    %v1264 = vpack.c.b16 %v880, %v876
    %v1265 = vpack.c.b16 %v881, %v877
    %v1266 = vpack.c.b16 %v886, %v882
    %v1267 = vpack.c.b16 %v887, %v883
    %v1268 = vpack.c.b16 %v888, %v884
    %v1269 = vpack.c.b16 %v889, %v885
    %v1270 = vpack.c.b16 %v894, %v890
    %v1271 = vpack.c.b16 %v895, %v891
    %v1272 = vpack.c.b16 %v896, %v892
    %v1273 = vpack.c.b16 %v897, %v893
    %v1274 = vpack.c.b16 %v902, %v898
    %v1275 = vpack.c.b16 %v903, %v899
    %v1276 = vpack.c.b16 %v904, %v900
    %v1277 = vpack.c.b16 %v905, %v901
    %v1278 = vpack.c.b16 %v910, %v906
    %v1279 = vpack.c.b16 %v911, %v907
    %v1280 = vpack.c.b16 %v912, %v908
    %v1281 = vpack.c.b16 %v913, %v909
    %v1282 = vpack.c.b16 %v918, %v914
    %v1283 = vpack.c.b16 %v919, %v915
    %v1284 = vpack.c.b16 %v920, %v916
    %v1285 = vpack.c.b16 %v921, %v917
    %v1286 = vpack.c.b16 %v926, %v922
    %v1287 = vpack.c.b16 %v927, %v923
    %v1288 = vpack.c.b16 %v928, %v924
    %v1289 = vpack.c.b16 %v929, %v925
    %v1290 = vpack.c.b16 %v934, %v930
    %v1291 = vpack.c.b16 %v935, %v931
    %v1292 = vpack.c.b16 %v936, %v932
    %v1293 = vpack.c.b16 %v937, %v933
    %v1294 = vpack.c.b16 %v942, %v938
    %v1295 = vpack.c.b16 %v943, %v939
    %v1296 = vpack.c.b16 %v944, %v940
    %v1297 = vpack.c.b16 %v945, %v941
    %v1298 = vpack.c.b16 %v950, %v946
    %v1299 = vpack.c.b16 %v951, %v947
    %v1300 = vpack.c.b16 %v952, %v948
    %v1301 = vpack.c.b16 %v953, %v949
    %v1302 = vpack.c.b16 %v958, %v954
    %v1303 = vpack.c.b16 %v959, %v955
    %v1304 = vpack.c.b16 %v960, %v956
    %v1305 = vpack.c.b16 %v961, %v957
    %v1306 = vpack.c.b16 %v966, %v962
    %v1307 = vpack.c.b16 %v967, %v963
    %v1308 = vpack.c.b16 %v968, %v964
    %v1309 = vpack.c.b16 %v969, %v965
    %v1310 = vpack.c.b16 %v974, %v970
    %v1311 = vpack.c.b16 %v975, %v971
    %v1312 = vpack.c.b16 %v976, %v972
    %v1313 = vpack.c.b16 %v977, %v973
    %v1314 = vpack.c.b16 %v982, %v978
    %v1315 = vpack.c.b16 %v983, %v979
    %v1316 = vpack.c.b16 %v984, %v980
    %v1317 = vpack.c.b16 %v985, %v981
    %v1318 = vpack.c.b16 %v990, %v986
    %v1319 = vpack.c.b16 %v991, %v987
    %v1320 = vpack.c.b16 %v992, %v988
    %v1321 = vpack.c.b16 %v993, %v989
    %v1322 = vpack.c.b16 %v998, %v994
    %v1323 = vpack.c.b16 %v999, %v995
    %v1324 = vpack.c.b16 %v1000, %v996
    %v1325 = vpack.c.b16 %v1001, %v997
    %v1326 = vpack.c.b16 %v1006, %v1002
    %v1327 = vpack.c.b16 %v1007, %v1003
    %v1328 = vpack.c.b16 %v1008, %v1004
    %v1329 = vpack.c.b16 %v1009, %v1005
    %v1330 = vpack.c.b16 %v1014, %v1010
    %v1331 = vpack.c.b16 %v1015, %v1011
    %v1332 = vpack.c.b16 %v1016, %v1012
    %v1333 = vpack.c.b16 %v1017, %v1013
    %v1334 = vpack.c.b16 %v1022, %v1018
    %v1335 = vpack.c.b16 %v1023, %v1019
    %v1336 = vpack.c.b16 %v1024, %v1020
    %v1337 = vpack.c.b16 %v1025, %v1021
    %v1338 = vpack.c.b16 %v1030, %v1026
    %v1339 = vpack.c.b16 %v1031, %v1027
    %v1340 = vpack.c.b16 %v1032, %v1028
    %v1341 = vpack.c.b16 %v1033, %v1029
    %v1342 = vpack.c.b16 %v1038, %v1034
    %v1343 = vpack.c.b16 %v1039, %v1035
    %v1344 = vpack.c.b16 %v1040, %v1036
    %v1345 = vpack.c.b16 %v1041, %v1037
    %v1346 = vpack.c.b16 %v1046, %v1042
    %v1347 = vpack.c.b16 %v1047, %v1043
    %v1348 = vpack.c.b16 %v1048, %v1044
    %v1349 = vpack.c.b16 %v1049, %v1045
    %v1350 = vpack.c.b16 %v1054, %v1050
    %v1351 = vpack.c.b16 %v1055, %v1051
    %v1352 = vpack.c.b16 %v1056, %v1052
    %v1353 = vpack.c.b16 %v1057, %v1053
    %v1354 = vpack.c.b16 %v1062, %v1058
    %v1355 = vpack.c.b16 %v1063, %v1059
    %v1356 = vpack.c.b16 %v1064, %v1060
    %v1357 = vpack.c.b16 %v1065, %v1061
    %v1358 = vpack.c.b16 %v1070, %v1066
    %v1359 = vpack.c.b16 %v1071, %v1067
    %v1360 = vpack.c.b16 %v1072, %v1068
    %v1361 = vpack.c.b16 %v1073, %v1069
    %v1362 = vpack.c.b16 %v1078, %v1074
    %v1363 = vpack.c.b16 %v1079, %v1075
    %v1364 = vpack.c.b16 %v1080, %v1076
    %v1365 = vpack.c.b16 %v1081, %v1077
    %v1366 = vpack.c.b16 %v1086, %v1082
    %v1367 = vpack.c.b16 %v1087, %v1083
    %v1368 = vpack.c.b16 %v1088, %v1084
    %v1369 = vpack.c.b16 %v1089, %v1085
    %v1370 = vpack.c.b16 %v1094, %v1090
    %v1371 = vpack.c.b16 %v1095, %v1091
    %v1372 = vpack.c.b16 %v1096, %v1092
    %v1373 = vpack.c.b16 %v1097, %v1093
    %v1374 = vpack.c.b16 %v1102, %v1098
    %v1375 = vpack.c.b16 %v1103, %v1099
    %v1376 = vpack.c.b16 %v1104, %v1100
    %v1377 = vpack.c.b16 %v1105, %v1101
    %v1378 = vpack.c.b16 %v1110, %v1106
    %v1379 = vpack.c.b16 %v1111, %v1107
    %v1380 = vpack.c.b16 %v1112, %v1108
    %v1381 = vpack.c.b16 %v1113, %v1109
    %v1382 = vpack.c.b16 %v1118, %v1114
    %v1383 = vpack.c.b16 %v1119, %v1115
    %v1384 = vpack.c.b16 %v1120, %v1116
    %v1385 = vpack.c.b16 %v1121, %v1117
    %v1386 = vpack.c.b16 %v1126, %v1122
    %v1387 = vpack.c.b16 %v1127, %v1123
    %v1388 = vpack.c.b16 %v1128, %v1124
    %v1389 = vpack.c.b16 %v1129, %v1125
    %v1390 = vpack.c.b16 %v1134, %v1130
    %v1391 = vpack.c.b16 %v1135, %v1131
    %v1392 = vpack.c.b16 %v1136, %v1132
    %v1393 = vpack.c.b16 %v1137, %v1133
    %1650 = vmatprep.subr.bf16.mxu0 %v1139
    %1651 = vmatpush1.bf16.msra.mxu0 %v1138
    %1652 = vmatprep.subr.bf16.mxu0 %v1143
    %1653 = vmatpush1.bf16.msra.mxu0 %v1142
    %1654 = vmatprep.subr.bf16.mxu0 %v1147
    %1655 = vmatpush1.bf16.msra.mxu0 %v1146
    %1656 = vmatprep.subr.bf16.mxu0 %v1151
    %1657 = vmatpush1.bf16.msra.mxu0 %v1150
    %1658 = vmatprep.subr.bf16.mxu0 %v1155
    %1659 = vmatpush1.bf16.msra.mxu0 %v1154
    %1660 = vmatprep.subr.bf16.mxu0 %v1159
    %1661 = vmatpush1.bf16.msra.mxu0 %v1158
    %1662 = vmatprep.subr.bf16.mxu0 %v1163
    %1663 = vmatpush1.bf16.msra.mxu0 %v1162
    %1664 = vmatprep.subr.bf16.mxu0 %v1167
    %1665 = vmatpush1.bf16.msra.mxu0 %v1166
    %1666 = vmatprep.subr.bf16.mxu0 %v1171
    %1667 = vmatpush1.bf16.msra.mxu0 %v1170
    %1668 = vmatprep.subr.bf16.mxu0 %v1175
    %1669 = vmatpush1.bf16.msra.mxu0 %v1174
    %1670 = vmatprep.subr.bf16.mxu0 %v1179
    %1671 = vmatpush1.bf16.msra.mxu0 %v1178
    %1672 = vmatprep.subr.bf16.mxu0 %v1183
    %1673 = vmatpush1.bf16.msra.mxu0 %v1182
    %1674 = vmatprep.subr.bf16.mxu0 %v1187
    %1675 = vmatpush1.bf16.msra.mxu0 %v1186
    %1676 = vmatprep.subr.bf16.mxu0 %v1191
    %1677 = vmatpush1.bf16.msra.mxu0 %v1190
    %1678 = vmatprep.subr.bf16.mxu0 %v1195
    %1679 = vmatpush1.bf16.msra.mxu0 %v1194
    %1680 = vmatprep.subr.bf16.mxu0 %v1199
    %1681 = vmatpush1.bf16.msra.mxu0 %v1198
    %1682 = vmatprep.mubr.bf16.mxu0 %v85
    %1683 = vmatmul.mubr.bf16.gmra.mrb[0].mxu0 %v84
    %v1684 = vpop.f32.mrb[0].mxu0
    %v1685 = vadd.f32 %v353, %v1684
    %v1686 = vpop.f32.mrb[0].mxu0
    %v1687 = vadd.f32 %v357, %v1686
    %v1688 = vpop.f32.mrb[0].mxu0
    %v1689 = vadd.f32 %v353, %v1688
    %v1690 = vpop.f32.mrb[0].mxu0
    %v1691 = vadd.f32 %v357, %v1690
    %1692 = vdwg.mxu0
    %1693 = vmatprep.subr.bf16.mxu0 %v1203
    %1694 = vmatpush1.bf16.msra.mxu0 %v1202
    %1695 = vmatprep.subr.bf16.mxu0 %v1207
    %1696 = vmatpush1.bf16.msra.mxu0 %v1206
    %1697 = vmatprep.subr.bf16.mxu0 %v1211
    %1698 = vmatpush1.bf16.msra.mxu0 %v1210
    %1699 = vmatprep.subr.bf16.mxu0 %v1215
    %1700 = vmatpush1.bf16.msra.mxu0 %v1214
    %1701 = vmatprep.subr.bf16.mxu0 %v1219
    %1702 = vmatpush1.bf16.msra.mxu0 %v1218
    %1703 = vmatprep.subr.bf16.mxu0 %v1223
    %1704 = vmatpush1.bf16.msra.mxu0 %v1222
    %1705 = vmatprep.subr.bf16.mxu0 %v1227
    %1706 = vmatpush1.bf16.msra.mxu0 %v1226
    %1707 = vmatprep.subr.bf16.mxu0 %v1231
    %1708 = vmatpush1.bf16.msra.mxu0 %v1230
    %1709 = vmatprep.subr.bf16.mxu0 %v1235
    %1710 = vmatpush1.bf16.msra.mxu0 %v1234
    %1711 = vmatprep.subr.bf16.mxu0 %v1239
    %1712 = vmatpush1.bf16.msra.mxu0 %v1238
    %1713 = vmatprep.subr.bf16.mxu0 %v1243
    %1714 = vmatpush1.bf16.msra.mxu0 %v1242
    %1715 = vmatprep.subr.bf16.mxu0 %v1247
    %1716 = vmatpush1.bf16.msra.mxu0 %v1246
    %1717 = vmatprep.subr.bf16.mxu0 %v1251
    %1718 = vmatpush1.bf16.msra.mxu0 %v1250
    %1719 = vmatprep.subr.bf16.mxu0 %v1255
    %1720 = vmatpush1.bf16.msra.mxu0 %v1254
    %1721 = vmatprep.subr.bf16.mxu0 %v1259
    %1722 = vmatpush1.bf16.msra.mxu0 %v1258
    %1723 = vmatprep.subr.bf16.mxu0 %v1263
    %1724 = vmatpush1.bf16.msra.mxu0 %v1262
    %1725 = vmatprep.mubr.bf16.mxu0 %v87
    %1726 = vmatmul.mubr.bf16.gmra.mrb[0].mxu0 %v86
    %v1727 = vpop.f32.mrb[0].mxu0
    %v1728 = vadd.f32 %v1685, %v1727
    %v1729 = vpop.f32.mrb[0].mxu0
    %v1730 = vadd.f32 %v1687, %v1729
    %v1731 = vpop.f32.mrb[0].mxu0
    %v1732 = vadd.f32 %v1689, %v1731
    %v1733 = vpop.f32.mrb[0].mxu0
    %v1734 = vadd.f32 %v1691, %v1733
    %1735 = vdwg.mxu0
    %1736 = vmatprep.subr.bf16.mxu0 %v1267
    %1737 = vmatpush1.bf16.msra.mxu0 %v1266
    %1738 = vmatprep.subr.bf16.mxu0 %v1271
    %1739 = vmatpush1.bf16.msra.mxu0 %v1270
    %1740 = vmatprep.subr.bf16.mxu0 %v1275
    %1741 = vmatpush1.bf16.msra.mxu0 %v1274
    %1742 = vmatprep.subr.bf16.mxu0 %v1279
    %1743 = vmatpush1.bf16.msra.mxu0 %v1278
    %1744 = vmatprep.subr.bf16.mxu0 %v1283
    %1745 = vmatpush1.bf16.msra.mxu0 %v1282
    %1746 = vmatprep.subr.bf16.mxu0 %v1287
    %1747 = vmatpush1.bf16.msra.mxu0 %v1286
    %1748 = vmatprep.subr.bf16.mxu0 %v1291
    %1749 = vmatpush1.bf16.msra.mxu0 %v1290
    %1750 = vmatprep.subr.bf16.mxu0 %v1295
    %1751 = vmatpush1.bf16.msra.mxu0 %v1294
    %1752 = vmatprep.subr.bf16.mxu0 %v1299
    %1753 = vmatpush1.bf16.msra.mxu0 %v1298
    %1754 = vmatprep.subr.bf16.mxu0 %v1303
    %1755 = vmatpush1.bf16.msra.mxu0 %v1302
    %1756 = vmatprep.subr.bf16.mxu0 %v1307
    %1757 = vmatpush1.bf16.msra.mxu0 %v1306
    %1758 = vmatprep.subr.bf16.mxu0 %v1311
    %1759 = vmatpush1.bf16.msra.mxu0 %v1310
    %1760 = vmatprep.subr.bf16.mxu0 %v1315
    %1761 = vmatpush1.bf16.msra.mxu0 %v1314
    %1762 = vmatprep.subr.bf16.mxu0 %v1319
    %1763 = vmatpush1.bf16.msra.mxu0 %v1318
    %1764 = vmatprep.subr.bf16.mxu0 %v1323
    %1765 = vmatpush1.bf16.msra.mxu0 %v1322
    %1766 = vmatprep.subr.bf16.mxu0 %v1327
    %1767 = vmatpush1.bf16.msra.mxu0 %v1326
    %1768 = vmatprep.mubr.bf16.mxu0 %v89
    %1769 = vmatmul.mubr.bf16.gmra.mrb[0].mxu0 %v88
    %v1770 = vpop.f32.mrb[0].mxu0
    %v1771 = vadd.f32 %v1728, %v1770
    %v1772 = vpop.f32.mrb[0].mxu0
    %v1773 = vadd.f32 %v1730, %v1772
    %v1774 = vpop.f32.mrb[0].mxu0
    %v1775 = vadd.f32 %v1732, %v1774
    %v1776 = vpop.f32.mrb[0].mxu0
    %v1777 = vadd.f32 %v1734, %v1776
    %1778 = vdwg.mxu0
    %1779 = vmatprep.subr.bf16.mxu0 %v1331
    %1780 = vmatpush1.bf16.msra.mxu0 %v1330
    %1781 = vmatprep.subr.bf16.mxu0 %v1335
    %1782 = vmatpush1.bf16.msra.mxu0 %v1334
    %1783 = vmatprep.subr.bf16.mxu0 %v1339
    %1784 = vmatpush1.bf16.msra.mxu0 %v1338
    %1785 = vmatprep.subr.bf16.mxu0 %v1343
    %1786 = vmatpush1.bf16.msra.mxu0 %v1342
    %1787 = vmatprep.subr.bf16.mxu0 %v1347
    %1788 = vmatpush1.bf16.msra.mxu0 %v1346
    %1789 = vmatprep.subr.bf16.mxu0 %v1351
    %1790 = vmatpush1.bf16.msra.mxu0 %v1350
    %1791 = vmatprep.subr.bf16.mxu0 %v1355
    %1792 = vmatpush1.bf16.msra.mxu0 %v1354
    %1793 = vmatprep.subr.bf16.mxu0 %v1359
    %1794 = vmatpush1.bf16.msra.mxu0 %v1358
    %1795 = vmatprep.subr.bf16.mxu0 %v1363
    %1796 = vmatpush1.bf16.msra.mxu0 %v1362
    %1797 = vmatprep.subr.bf16.mxu0 %v1367
    %1798 = vmatpush1.bf16.msra.mxu0 %v1366
    %1799 = vmatprep.subr.bf16.mxu0 %v1371
    %1800 = vmatpush1.bf16.msra.mxu0 %v1370
    %1801 = vmatprep.subr.bf16.mxu0 %v1375
    %1802 = vmatpush1.bf16.msra.mxu0 %v1374
    %1803 = vmatprep.subr.bf16.mxu0 %v1379
    %1804 = vmatpush1.bf16.msra.mxu0 %v1378
    %1805 = vmatprep.subr.bf16.mxu0 %v1383
    %1806 = vmatpush1.bf16.msra.mxu0 %v1382
    %1807 = vmatprep.subr.bf16.mxu0 %v1387
    %1808 = vmatpush1.bf16.msra.mxu0 %v1386
    %1809 = vmatprep.subr.bf16.mxu0 %v1391
    %1810 = vmatpush1.bf16.msra.mxu0 %v1390
    %1811 = vmatprep.mubr.bf16.mxu0 %v91
    %1812 = vmatmul.mubr.bf16.gmra.mrb[0].mxu0 %v90
    %v1813 = vpop.f32.mrb[0].mxu0
    %v1814 = vadd.f32 %v1771, %v1813
    %v1815 = vpop.f32.mrb[0].mxu0
    %v1816 = vadd.f32 %v1773, %v1815
    %v1817 = vpop.f32.mrb[0].mxu0
    %v1818 = vadd.f32 %v1775, %v1817
    %v1819 = vpop.f32.mrb[0].mxu0
    %v1820 = vadd.f32 %v1777, %v1819
    %1821 = vdwg.mxu0
    %1822 = vmatprep.subr.bf16.mxu0 %v1141
    %1823 = vmatpush1.bf16.msra.mxu0 %v1140
    %1824 = vmatprep.subr.bf16.mxu0 %v1145
    %1825 = vmatpush1.bf16.msra.mxu0 %v1144
    %1826 = vmatprep.subr.bf16.mxu0 %v1149
    %1827 = vmatpush1.bf16.msra.mxu0 %v1148
    %1828 = vmatprep.subr.bf16.mxu0 %v1153
    %1829 = vmatpush1.bf16.msra.mxu0 %v1152
    %1830 = vmatprep.subr.bf16.mxu0 %v1157
    %1831 = vmatpush1.bf16.msra.mxu0 %v1156
    %1832 = vmatprep.subr.bf16.mxu0 %v1161
    %1833 = vmatpush1.bf16.msra.mxu0 %v1160
    %1834 = vmatprep.subr.bf16.mxu0 %v1165
    %1835 = vmatpush1.bf16.msra.mxu0 %v1164
    %1836 = vmatprep.subr.bf16.mxu0 %v1169
    %1837 = vmatpush1.bf16.msra.mxu0 %v1168
    %1838 = vmatprep.subr.bf16.mxu0 %v1173
    %1839 = vmatpush1.bf16.msra.mxu0 %v1172
    %1840 = vmatprep.subr.bf16.mxu0 %v1177
    %1841 = vmatpush1.bf16.msra.mxu0 %v1176
    %1842 = vmatprep.subr.bf16.mxu0 %v1181
    %1843 = vmatpush1.bf16.msra.mxu0 %v1180
    %1844 = vmatprep.subr.bf16.mxu0 %v1185
    %1845 = vmatpush1.bf16.msra.mxu0 %v1184
    %1846 = vmatprep.subr.bf16.mxu0 %v1189
    %1847 = vmatpush1.bf16.msra.mxu0 %v1188
    %1848 = vmatprep.subr.bf16.mxu0 %v1193
    %1849 = vmatpush1.bf16.msra.mxu0 %v1192
    %1850 = vmatprep.subr.bf16.mxu0 %v1197
    %1851 = vmatpush1.bf16.msra.mxu0 %v1196
    %1852 = vmatprep.subr.bf16.mxu0 %v1201
    %1853 = vmatpush1.bf16.msra.mxu0 %v1200
    %1854 = vmatprep.mubr.bf16.mxu0 %v85
    %1855 = vmatmul.mubr.bf16.gmra.mrb[0].mxu0 %v84
    %v1856 = vpop.f32.mrb[0].mxu0
    %v1857 = vadd.f32 %v361, %v1856
    %v1858 = vpop.f32.mrb[0].mxu0
    %v1859 = vadd.f32 %v365, %v1858
    %v1860 = vpop.f32.mrb[0].mxu0
    %v1861 = vadd.f32 %v361, %v1860
    %v1862 = vpop.f32.mrb[0].mxu0
    %v1863 = vadd.f32 %v365, %v1862
    %1864 = vdwg.mxu0
    %1865 = vmatprep.subr.bf16.mxu0 %v1205
    %1866 = vmatpush1.bf16.msra.mxu0 %v1204
    %1867 = vmatprep.subr.bf16.mxu0 %v1209
    %1868 = vmatpush1.bf16.msra.mxu0 %v1208
    %1869 = vmatprep.subr.bf16.mxu0 %v1213
    %1870 = vmatpush1.bf16.msra.mxu0 %v1212
    %1871 = vmatprep.subr.bf16.mxu0 %v1217
    %1872 = vmatpush1.bf16.msra.mxu0 %v1216
    %1873 = vmatprep.subr.bf16.mxu0 %v1221
    %1874 = vmatpush1.bf16.msra.mxu0 %v1220
    %1875 = vmatprep.subr.bf16.mxu0 %v1225
    %1876 = vmatpush1.bf16.msra.mxu0 %v1224
    %1877 = vmatprep.subr.bf16.mxu0 %v1229
    %1878 = vmatpush1.bf16.msra.mxu0 %v1228
    %1879 = vmatprep.subr.bf16.mxu0 %v1233
    %1880 = vmatpush1.bf16.msra.mxu0 %v1232
    %1881 = vmatprep.subr.bf16.mxu0 %v1237
    %1882 = vmatpush1.bf16.msra.mxu0 %v1236
    %1883 = vmatprep.subr.bf16.mxu0 %v1241
    %1884 = vmatpush1.bf16.msra.mxu0 %v1240
    %1885 = vmatprep.subr.bf16.mxu0 %v1245
    %1886 = vmatpush1.bf16.msra.mxu0 %v1244
    %1887 = vmatprep.subr.bf16.mxu0 %v1249
    %1888 = vmatpush1.bf16.msra.mxu0 %v1248
    %1889 = vmatprep.subr.bf16.mxu0 %v1253
    %1890 = vmatpush1.bf16.msra.mxu0 %v1252
    %1891 = vmatprep.subr.bf16.mxu0 %v1257
    %1892 = vmatpush1.bf16.msra.mxu0 %v1256
    %1893 = vmatprep.subr.bf16.mxu0 %v1261
    %1894 = vmatpush1.bf16.msra.mxu0 %v1260
    %1895 = vmatprep.subr.bf16.mxu0 %v1265
    %1896 = vmatpush1.bf16.msra.mxu0 %v1264
    %1897 = vmatprep.mubr.bf16.mxu0 %v87
    %1898 = vmatmul.mubr.bf16.gmra.mrb[0].mxu0 %v86
    %v1899 = vpop.f32.mrb[0].mxu0
    %v1900 = vadd.f32 %v1857, %v1899
    %v1901 = vpop.f32.mrb[0].mxu0
    %v1902 = vadd.f32 %v1859, %v1901
    %v1903 = vpop.f32.mrb[0].mxu0
    %v1904 = vadd.f32 %v1861, %v1903
    %v1905 = vpop.f32.mrb[0].mxu0
    %v1906 = vadd.f32 %v1863, %v1905
    %1907 = vdwg.mxu0
    %1908 = vmatprep.subr.bf16.mxu0 %v1269
    %1909 = vmatpush1.bf16.msra.mxu0 %v1268
    %1910 = vmatprep.subr.bf16.mxu0 %v1273
    %1911 = vmatpush1.bf16.msra.mxu0 %v1272
    %1912 = vmatprep.subr.bf16.mxu0 %v1277
    %1913 = vmatpush1.bf16.msra.mxu0 %v1276
    %1914 = vmatprep.subr.bf16.mxu0 %v1281
    %1915 = vmatpush1.bf16.msra.mxu0 %v1280
    %1916 = vmatprep.subr.bf16.mxu0 %v1285
    %1917 = vmatpush1.bf16.msra.mxu0 %v1284
    %1918 = vmatprep.subr.bf16.mxu0 %v1289
    %1919 = vmatpush1.bf16.msra.mxu0 %v1288
    %1920 = vmatprep.subr.bf16.mxu0 %v1293
    %1921 = vmatpush1.bf16.msra.mxu0 %v1292
    %1922 = vmatprep.subr.bf16.mxu0 %v1297
    %1923 = vmatpush1.bf16.msra.mxu0 %v1296
    %1924 = vmatprep.subr.bf16.mxu0 %v1301
    %1925 = vmatpush1.bf16.msra.mxu0 %v1300
    %1926 = vmatprep.subr.bf16.mxu0 %v1305
    %1927 = vmatpush1.bf16.msra.mxu0 %v1304
    %1928 = vmatprep.subr.bf16.mxu0 %v1309
    %1929 = vmatpush1.bf16.msra.mxu0 %v1308
    %1930 = vmatprep.subr.bf16.mxu0 %v1313
    %1931 = vmatpush1.bf16.msra.mxu0 %v1312
    %1932 = vmatprep.subr.bf16.mxu0 %v1317
    %1933 = vmatpush1.bf16.msra.mxu0 %v1316
    %1934 = vmatprep.subr.bf16.mxu0 %v1321
    %1935 = vmatpush1.bf16.msra.mxu0 %v1320
    %1936 = vmatprep.subr.bf16.mxu0 %v1325
    %1937 = vmatpush1.bf16.msra.mxu0 %v1324
    %1938 = vmatprep.subr.bf16.mxu0 %v1329
    %1939 = vmatpush1.bf16.msra.mxu0 %v1328
    %1940 = vmatprep.mubr.bf16.mxu0 %v89
    %1941 = vmatmul.mubr.bf16.gmra.mrb[0].mxu0 %v88
    %v1942 = vpop.f32.mrb[0].mxu0
    %v1943 = vadd.f32 %v1900, %v1942
    %v1944 = vpop.f32.mrb[0].mxu0
    %v1945 = vadd.f32 %v1902, %v1944
    %v1946 = vpop.f32.mrb[0].mxu0
    %v1947 = vadd.f32 %v1904, %v1946
    %v1948 = vpop.f32.mrb[0].mxu0
    %v1949 = vadd.f32 %v1906, %v1948
    %1950 = vdwg.mxu0
    %1951 = vmatprep.subr.bf16.mxu0 %v1333
    %1952 = vmatpush1.bf16.msra.mxu0 %v1332
    %1953 = vmatprep.subr.bf16.mxu0 %v1337
    %1954 = vmatpush1.bf16.msra.mxu0 %v1336
    %1955 = vmatprep.subr.bf16.mxu0 %v1341
    %1956 = vmatpush1.bf16.msra.mxu0 %v1340
    %1957 = vmatprep.subr.bf16.mxu0 %v1345
    %1958 = vmatpush1.bf16.msra.mxu0 %v1344
    %1959 = vmatprep.subr.bf16.mxu0 %v1349
    %1960 = vmatpush1.bf16.msra.mxu0 %v1348
    %1961 = vmatprep.subr.bf16.mxu0 %v1353
    %1962 = vmatpush1.bf16.msra.mxu0 %v1352
    %1963 = vmatprep.subr.bf16.mxu0 %v1357
    %1964 = vmatpush1.bf16.msra.mxu0 %v1356
    %1965 = vmatprep.subr.bf16.mxu0 %v1361
    %1966 = vmatpush1.bf16.msra.mxu0 %v1360
    %1967 = vmatprep.subr.bf16.mxu0 %v1365
    %1968 = vmatpush1.bf16.msra.mxu0 %v1364
    %1969 = vmatprep.subr.bf16.mxu0 %v1369
    %1970 = vmatpush1.bf16.msra.mxu0 %v1368
    %1971 = vmatprep.subr.bf16.mxu0 %v1373
    %1972 = vmatpush1.bf16.msra.mxu0 %v1372
    %1973 = vmatprep.subr.bf16.mxu0 %v1377
    %1974 = vmatpush1.bf16.msra.mxu0 %v1376
    %1975 = vmatprep.subr.bf16.mxu0 %v1381
    %1976 = vmatpush1.bf16.msra.mxu0 %v1380
    %1977 = vmatprep.subr.bf16.mxu0 %v1385
    %1978 = vmatpush1.bf16.msra.mxu0 %v1384
    %1979 = vmatprep.subr.bf16.mxu0 %v1389
    %1980 = vmatpush1.bf16.msra.mxu0 %v1388
    %1981 = vmatprep.subr.bf16.mxu0 %v1393
    %1982 = vmatpush1.bf16.msra.mxu0 %v1392
    %1983 = vmatprep.mubr.bf16.mxu0 %v91
    %1984 = vmatmul.mubr.bf16.gmra.mrb[0].mxu0 %v90
    %v1985 = vpop.f32.mrb[0].mxu0
    %v1986 = vadd.f32 %v1943, %v1985
    %v1987 = vpop.f32.mrb[0].mxu0
    %v1988 = vadd.f32 %v1945, %v1987
    %v1989 = vpop.f32.mrb[0].mxu0
    %v1990 = vadd.f32 %v1947, %v1989
    %v1991 = vpop.f32.mrb[0].mxu0
    %v1992 = vadd.f32 %v1949, %v1991
    %1993 = vdwg.mxu0
    %vm1994 = vcmp.gt.f32.partialorder %v1814, 0.0
    %vm1995 = vcmp.gt.f32.partialorder %v1816, 0.0
    %vm1996 = vcmp.gt.f32.partialorder %v1986, 0.0
    %vm1997 = vcmp.gt.f32.partialorder %v1988, 0.0
    %vm1998 = vcmp.gt.f32.partialorder %v1818, 0.0
    %vm1999 = vcmp.gt.f32.partialorder %v1820, 0.0
    %vm2000 = vcmp.gt.f32.partialorder %v1990, 0.0
    %vm2001 = vcmp.gt.f32.partialorder %v1992, 0.0
    %v2002 = vmul.f32 %v1814, 0.1
    %v2003 = vmul.f32 %v1816, 0.1
    %v2004 = vmul.f32 %v1986, 0.1
    %v2005 = vmul.f32 %v1988, 0.1
    %v2006 = vmul.f32 %v1818, 0.1
    %v2007 = vmul.f32 %v1820, 0.1
    %v2008 = vmul.f32 %v1990, 0.1
    %v2009 = vmul.f32 %v1992, 0.1
    %v2010 = vsel %vm1994, %v1814, %v2002
    %v2011 = vsel %vm1995, %v1816, %v2003
    %v2012 = vsel %vm1996, %v1986, %v2004
    %v2013 = vsel %vm1997, %v1988, %v2005
    %v2014 = vsel %vm1998, %v1818, %v2006
    %v2015 = vsel %vm1999, %v1820, %v2007
    %v2016 = vsel %vm2000, %v1990, %v2008
    %v2017 = vsel %vm2001, %v1992, %v2009
    %v2018 = vpack.c.bf16 %v2014, %v2010
    %v2019 = vpack.c.bf16 %v2015, %v2011
    %v2020 = vpack.c.bf16 %v2016, %v2012
    %v2021 = vpack.c.bf16 %v2017, %v2013
    %v2022 = vld [vmem:[#allocation7] sm:$0xff]
    %v2023 = vld [vmem:[#allocation7 + $0x8] sm:$0xff]
    %v2024 = vld [vmem:[#allocation7 + $0x10] sm:$0xff]
    %v2025 = vld [vmem:[#allocation7 + $0x18] sm:$0xff]
    %v2026 = vld [vmem:[#allocation7 + $0x20] sm:$0xff]
    %v2027 = vld [vmem:[#allocation7 + $0x28] sm:$0xff]
    %v2028 = vld [vmem:[#allocation7 + $0x30] sm:$0xff]
    %v2029 = vld [vmem:[#allocation7 + $0x38] sm:$0xff]
    %v2030 = vld [vmem:[#allocation7 + $0x40] sm:$0xff]
    %v2031 = vld [vmem:[#allocation7 + $0x48] sm:$0xff]
    %v2032 = vld [vmem:[#allocation7 + $0x50] sm:$0xff]
    %v2033 = vld [vmem:[#allocation7 + $0x58] sm:$0xff]
    %v2034 = vld [vmem:[#allocation7 + $0x60] sm:$0xff]
    %v2035 = vld [vmem:[#allocation7 + $0x68] sm:$0xff]
    %v2036 = vld [vmem:[#allocation7 + $0x70] sm:$0xff]
    %v2037 = vld [vmem:[#allocation7 + $0x78] sm:$0xff]
    %v2038 = vld [vmem:[#allocation7 + $0x80] sm:$0xff]
    %v2039 = vld [vmem:[#allocation7 + $0x88] sm:$0xff]
    %v2040 = vld [vmem:[#allocation7 + $0x90] sm:$0xff]
    %v2041 = vld [vmem:[#allocation7 + $0x98] sm:$0xff]
    %v2042 = vld [vmem:[#allocation7 + $0xa0] sm:$0xff]
    %v2043 = vld [vmem:[#allocation7 + $0xa8] sm:$0xff]
    %v2044 = vld [vmem:[#allocation7 + $0xb0] sm:$0xff]
    %v2045 = vld [vmem:[#allocation7 + $0xb8] sm:$0xff]
    %v2046 = vld [vmem:[#allocation7 + $0xc0] sm:$0xff]
    %v2047 = vld [vmem:[#allocation7 + $0xc8] sm:$0xff]
    %v2048 = vld [vmem:[#allocation7 + $0xd0] sm:$0xff]
    %v2049 = vld [vmem:[#allocation7 + $0xd8] sm:$0xff]
    %v2050 = vld [vmem:[#allocation7 + $0xe0] sm:$0xff]
    %v2051 = vld [vmem:[#allocation7 + $0xe8] sm:$0xff]
    %v2052 = vld [vmem:[#allocation7 + $0xf0] sm:$0xff]
    %v2053 = vld [vmem:[#allocation7 + $0xf8] sm:$0xff]
    %v2054 = vld [vmem:[#allocation7 + $0x100] sm:$0xff]
    %v2055 = vld [vmem:[#allocation7 + $0x108] sm:$0xff]
    %v2056 = vld [vmem:[#allocation7 + $0x110] sm:$0xff]
    %v2057 = vld [vmem:[#allocation7 + $0x118] sm:$0xff]
    %v2058 = vld [vmem:[#allocation7 + $0x120] sm:$0xff]
    %v2059 = vld [vmem:[#allocation7 + $0x128] sm:$0xff]
    %v2060 = vld [vmem:[#allocation7 + $0x130] sm:$0xff]
    %v2061 = vld [vmem:[#allocation7 + $0x138] sm:$0xff]
    %v2062 = vld [vmem:[#allocation7 + $0x140] sm:$0xff]
    %v2063 = vld [vmem:[#allocation7 + $0x148] sm:$0xff]
    %v2064 = vld [vmem:[#allocation7 + $0x150] sm:$0xff]
    %v2065 = vld [vmem:[#allocation7 + $0x158] sm:$0xff]
    %v2066 = vld [vmem:[#allocation7 + $0x160] sm:$0xff]
    %v2067 = vld [vmem:[#allocation7 + $0x168] sm:$0xff]
    %v2068 = vld [vmem:[#allocation7 + $0x170] sm:$0xff]
    %v2069 = vld [vmem:[#allocation7 + $0x178] sm:$0xff]
    %v2070 = vld [vmem:[#allocation7 + $0x180] sm:$0xff]
    %v2071 = vld [vmem:[#allocation7 + $0x188] sm:$0xff]
    %v2072 = vld [vmem:[#allocation7 + $0x190] sm:$0xff]
    %v2073 = vld [vmem:[#allocation7 + $0x198] sm:$0xff]
    %v2074 = vld [vmem:[#allocation7 + $0x1a0] sm:$0xff]
    %v2075 = vld [vmem:[#allocation7 + $0x1a8] sm:$0xff]
    %v2076 = vld [vmem:[#allocation7 + $0x1b0] sm:$0xff]
    %v2077 = vld [vmem:[#allocation7 + $0x1b8] sm:$0xff]
    %v2078 = vld [vmem:[#allocation7 + $0x1c0] sm:$0xff]
    %v2079 = vld [vmem:[#allocation7 + $0x1c8] sm:$0xff]
    %v2080 = vld [vmem:[#allocation7 + $0x1d0] sm:$0xff]
    %v2081 = vld [vmem:[#allocation7 + $0x1d8] sm:$0xff]
    %v2082 = vld [vmem:[#allocation7 + $0x1e0] sm:$0xff]
    %v2083 = vld [vmem:[#allocation7 + $0x1e8] sm:$0xff]
    %v2084 = vld [vmem:[#allocation7 + $0x1f0] sm:$0xff]
    %v2085 = vld [vmem:[#allocation7 + $0x1f8] sm:$0xff]
    %v2086 = vld [vmem:[%s4] sm:$0x3]
    %v2088 = vlaneseq
    %v2089 = vshrl.u32 %v2088, 7
    %v2090 = vsub.s32 0, %v2089
    %v2091 = vrot.slane %v2086, %v2090
    %v2092 = vlaneseq
    %v2093 = vshrl.u32 %v2092, 7
    %v2094 = vsub.s32 1, %v2093
    %v2095 = vrot.slane %v2086, %v2094
    %v2162 = vunpack.c.l.b16 %v2022
    %v2163 = vunpack.c.h.b16 %v2022
    %v2164 = vunpack.c.l.b16 %v2023
    %v2165 = vunpack.c.h.b16 %v2023
    %v2166 = vunpack.c.l.b16 %v2024
    %v2167 = vunpack.c.h.b16 %v2024
    %v2168 = vunpack.c.l.b16 %v2025
    %v2169 = vunpack.c.h.b16 %v2025
    %v2170 = vunpack.c.l.b16 %v2026
    %v2171 = vunpack.c.h.b16 %v2026
    %v2172 = vunpack.c.l.b16 %v2027
    %v2173 = vunpack.c.h.b16 %v2027
    %v2174 = vunpack.c.l.b16 %v2028
    %v2175 = vunpack.c.h.b16 %v2028
    %v2176 = vunpack.c.l.b16 %v2029
    %v2177 = vunpack.c.h.b16 %v2029
    %v2178 = vunpack.c.l.b16 %v2030
    %v2179 = vunpack.c.h.b16 %v2030
    %v2180 = vunpack.c.l.b16 %v2031
    %v2181 = vunpack.c.h.b16 %v2031
    %v2182 = vunpack.c.l.b16 %v2032
    %v2183 = vunpack.c.h.b16 %v2032
    %v2184 = vunpack.c.l.b16 %v2033
    %v2185 = vunpack.c.h.b16 %v2033
    %v2186 = vunpack.c.l.b16 %v2034
    %v2187 = vunpack.c.h.b16 %v2034
    %v2188 = vunpack.c.l.b16 %v2035
    %v2189 = vunpack.c.h.b16 %v2035
    %v2190 = vunpack.c.l.b16 %v2036
    %v2191 = vunpack.c.h.b16 %v2036
    %v2192 = vunpack.c.l.b16 %v2037
    %v2193 = vunpack.c.h.b16 %v2037
    %v2194 = vunpack.c.l.b16 %v2038
    %v2195 = vunpack.c.h.b16 %v2038
    %v2196 = vunpack.c.l.b16 %v2039
    %v2197 = vunpack.c.h.b16 %v2039
    %v2198 = vunpack.c.l.b16 %v2040
    %v2199 = vunpack.c.h.b16 %v2040
    %v2200 = vunpack.c.l.b16 %v2041
    %v2201 = vunpack.c.h.b16 %v2041
    %v2202 = vunpack.c.l.b16 %v2042
    %v2203 = vunpack.c.h.b16 %v2042
    %v2204 = vunpack.c.l.b16 %v2043
    %v2205 = vunpack.c.h.b16 %v2043
    %v2206 = vunpack.c.l.b16 %v2044
    %v2207 = vunpack.c.h.b16 %v2044
    %v2208 = vunpack.c.l.b16 %v2045
    %v2209 = vunpack.c.h.b16 %v2045
    %v2210 = vunpack.c.l.b16 %v2046
    %v2211 = vunpack.c.h.b16 %v2046
    %v2212 = vunpack.c.l.b16 %v2047
    %v2213 = vunpack.c.h.b16 %v2047
    %v2214 = vunpack.c.l.b16 %v2048
    %v2215 = vunpack.c.h.b16 %v2048
    %v2216 = vunpack.c.l.b16 %v2049
    %v2217 = vunpack.c.h.b16 %v2049
    %v2218 = vunpack.c.l.b16 %v2050
    %v2219 = vunpack.c.h.b16 %v2050
    %v2220 = vunpack.c.l.b16 %v2051
    %v2221 = vunpack.c.h.b16 %v2051
    %v2222 = vunpack.c.l.b16 %v2052
    %v2223 = vunpack.c.h.b16 %v2052
    %v2224 = vunpack.c.l.b16 %v2053
    %v2225 = vunpack.c.h.b16 %v2053
    %v2226 = vunpack.c.l.b16 %v2054
    %v2227 = vunpack.c.h.b16 %v2054
    %v2228 = vunpack.c.l.b16 %v2055
    %v2229 = vunpack.c.h.b16 %v2055
    %v2230 = vunpack.c.l.b16 %v2056
    %v2231 = vunpack.c.h.b16 %v2056
    %v2232 = vunpack.c.l.b16 %v2057
    %v2233 = vunpack.c.h.b16 %v2057
    %v2234 = vunpack.c.l.b16 %v2058
    %v2235 = vunpack.c.h.b16 %v2058
    %v2236 = vunpack.c.l.b16 %v2059
    %v2237 = vunpack.c.h.b16 %v2059
    %v2238 = vunpack.c.l.b16 %v2060
    %v2239 = vunpack.c.h.b16 %v2060
    %v2240 = vunpack.c.l.b16 %v2061
    %v2241 = vunpack.c.h.b16 %v2061
    %v2242 = vunpack.c.l.b16 %v2062
    %v2243 = vunpack.c.h.b16 %v2062
    %v2244 = vunpack.c.l.b16 %v2063
    %v2245 = vunpack.c.h.b16 %v2063
    %v2246 = vunpack.c.l.b16 %v2064
    %v2247 = vunpack.c.h.b16 %v2064
    %v2248 = vunpack.c.l.b16 %v2065
    %v2249 = vunpack.c.h.b16 %v2065
    %v2250 = vunpack.c.l.b16 %v2066
    %v2251 = vunpack.c.h.b16 %v2066
    %v2252 = vunpack.c.l.b16 %v2067
    %v2253 = vunpack.c.h.b16 %v2067
    %v2254 = vunpack.c.l.b16 %v2068
    %v2255 = vunpack.c.h.b16 %v2068
    %v2256 = vunpack.c.l.b16 %v2069
    %v2257 = vunpack.c.h.b16 %v2069
    %v2258 = vunpack.c.l.b16 %v2070
    %v2259 = vunpack.c.h.b16 %v2070
    %v2260 = vunpack.c.l.b16 %v2071
    %v2261 = vunpack.c.h.b16 %v2071
    %v2262 = vunpack.c.l.b16 %v2072
    %v2263 = vunpack.c.h.b16 %v2072
    %v2264 = vunpack.c.l.b16 %v2073
    %v2265 = vunpack.c.h.b16 %v2073
    %v2266 = vunpack.c.l.b16 %v2074
    %v2267 = vunpack.c.h.b16 %v2074
    %v2268 = vunpack.c.l.b16 %v2075
    %v2269 = vunpack.c.h.b16 %v2075
    %v2270 = vunpack.c.l.b16 %v2076
    %v2271 = vunpack.c.h.b16 %v2076
    %v2272 = vunpack.c.l.b16 %v2077
    %v2273 = vunpack.c.h.b16 %v2077
    %v2274 = vunpack.c.l.b16 %v2078
    %v2275 = vunpack.c.h.b16 %v2078
    %v2276 = vunpack.c.l.b16 %v2079
    %v2277 = vunpack.c.h.b16 %v2079
    %v2278 = vunpack.c.l.b16 %v2080
    %v2279 = vunpack.c.h.b16 %v2080
    %v2280 = vunpack.c.l.b16 %v2081
    %v2281 = vunpack.c.h.b16 %v2081
    %v2282 = vunpack.c.l.b16 %v2082
    %v2283 = vunpack.c.h.b16 %v2082
    %v2284 = vunpack.c.l.b16 %v2083
    %v2285 = vunpack.c.h.b16 %v2083
    %v2286 = vunpack.c.l.b16 %v2084
    %v2287 = vunpack.c.h.b16 %v2084
    %v2288 = vunpack.c.l.b16 %v2085
    %v2289 = vunpack.c.h.b16 %v2085
    %v2290 = vpack.c.b16 %v2164, %v2162
    %v2291 = vpack.c.b16 %v2165, %v2163
    %v2292 = vpack.c.b16 %v2168, %v2166
    %v2293 = vpack.c.b16 %v2169, %v2167
    %v2294 = vpack.c.b16 %v2172, %v2170
    %v2295 = vpack.c.b16 %v2173, %v2171
    %v2296 = vpack.c.b16 %v2176, %v2174
    %v2297 = vpack.c.b16 %v2177, %v2175
    %v2298 = vpack.c.b16 %v2180, %v2178
    %v2299 = vpack.c.b16 %v2181, %v2179
    %v2300 = vpack.c.b16 %v2184, %v2182
    %v2301 = vpack.c.b16 %v2185, %v2183
    %v2302 = vpack.c.b16 %v2188, %v2186
    %v2303 = vpack.c.b16 %v2189, %v2187
    %v2304 = vpack.c.b16 %v2192, %v2190
    %v2305 = vpack.c.b16 %v2193, %v2191
    %v2306 = vpack.c.b16 %v2196, %v2194
    %v2307 = vpack.c.b16 %v2197, %v2195
    %v2308 = vpack.c.b16 %v2200, %v2198
    %v2309 = vpack.c.b16 %v2201, %v2199
    %v2310 = vpack.c.b16 %v2204, %v2202
    %v2311 = vpack.c.b16 %v2205, %v2203
    %v2312 = vpack.c.b16 %v2208, %v2206
    %v2313 = vpack.c.b16 %v2209, %v2207
    %v2314 = vpack.c.b16 %v2212, %v2210
    %v2315 = vpack.c.b16 %v2213, %v2211
    %v2316 = vpack.c.b16 %v2216, %v2214
    %v2317 = vpack.c.b16 %v2217, %v2215
    %v2318 = vpack.c.b16 %v2220, %v2218
    %v2319 = vpack.c.b16 %v2221, %v2219
    %v2320 = vpack.c.b16 %v2224, %v2222
    %v2321 = vpack.c.b16 %v2225, %v2223
    %v2322 = vpack.c.b16 %v2228, %v2226
    %v2323 = vpack.c.b16 %v2229, %v2227
    %v2324 = vpack.c.b16 %v2232, %v2230
    %v2325 = vpack.c.b16 %v2233, %v2231
    %v2326 = vpack.c.b16 %v2236, %v2234
    %v2327 = vpack.c.b16 %v2237, %v2235
    %v2328 = vpack.c.b16 %v2240, %v2238
    %v2329 = vpack.c.b16 %v2241, %v2239
    %v2330 = vpack.c.b16 %v2244, %v2242
    %v2331 = vpack.c.b16 %v2245, %v2243
    %v2332 = vpack.c.b16 %v2248, %v2246
    %v2333 = vpack.c.b16 %v2249, %v2247
    %v2334 = vpack.c.b16 %v2252, %v2250
    %v2335 = vpack.c.b16 %v2253, %v2251
    %v2336 = vpack.c.b16 %v2256, %v2254
    %v2337 = vpack.c.b16 %v2257, %v2255
    %v2338 = vpack.c.b16 %v2260, %v2258
    %v2339 = vpack.c.b16 %v2261, %v2259
    %v2340 = vpack.c.b16 %v2264, %v2262
    %v2341 = vpack.c.b16 %v2265, %v2263
    %v2342 = vpack.c.b16 %v2268, %v2266
    %v2343 = vpack.c.b16 %v2269, %v2267
    %v2344 = vpack.c.b16 %v2272, %v2270
    %v2345 = vpack.c.b16 %v2273, %v2271
    %v2346 = vpack.c.b16 %v2276, %v2274
    %v2347 = vpack.c.b16 %v2277, %v2275
    %v2348 = vpack.c.b16 %v2280, %v2278
    %v2349 = vpack.c.b16 %v2281, %v2279
    %v2350 = vpack.c.b16 %v2284, %v2282
    %v2351 = vpack.c.b16 %v2285, %v2283
    %v2352 = vpack.c.b16 %v2288, %v2286
    %v2353 = vpack.c.b16 %v2289, %v2287
    %2418 = vmatprep.subr.bf16.mxu0 %v2291
    %2419 = vmatpush1.bf16.msra.mxu0 %v2290
    %2420 = vmatprep.subr.bf16.mxu0 %v2293
    %2421 = vmatpush1.bf16.msra.mxu0 %v2292
    %2422 = vmatprep.subr.bf16.mxu0 %v2295
    %2423 = vmatpush1.bf16.msra.mxu0 %v2294
    %2424 = vmatprep.subr.bf16.mxu0 %v2297
    %2425 = vmatpush1.bf16.msra.mxu0 %v2296
    %2426 = vmatprep.subr.bf16.mxu0 %v2299
    %2427 = vmatpush1.bf16.msra.mxu0 %v2298
    %2428 = vmatprep.subr.bf16.mxu0 %v2301
    %2429 = vmatpush1.bf16.msra.mxu0 %v2300
    %2430 = vmatprep.subr.bf16.mxu0 %v2303
    %2431 = vmatpush1.bf16.msra.mxu0 %v2302
    %2432 = vmatprep.subr.bf16.mxu0 %v2305
    %2433 = vmatpush1.bf16.msra.mxu0 %v2304
    %2434 = vmatprep.subr.bf16.mxu0 %v2307
    %2435 = vmatpush1.bf16.msra.mxu0 %v2306
    %2436 = vmatprep.subr.bf16.mxu0 %v2309
    %2437 = vmatpush1.bf16.msra.mxu0 %v2308
    %2438 = vmatprep.subr.bf16.mxu0 %v2311
    %2439 = vmatpush1.bf16.msra.mxu0 %v2310
    %2440 = vmatprep.subr.bf16.mxu0 %v2313
    %2441 = vmatpush1.bf16.msra.mxu0 %v2312
    %2442 = vmatprep.subr.bf16.mxu0 %v2315
    %2443 = vmatpush1.bf16.msra.mxu0 %v2314
    %2444 = vmatprep.subr.bf16.mxu0 %v2317
    %2445 = vmatpush1.bf16.msra.mxu0 %v2316
    %2446 = vmatprep.subr.bf16.mxu0 %v2319
    %2447 = vmatpush1.bf16.msra.mxu0 %v2318
    %2448 = vmatprep.subr.bf16.mxu0 %v2321
    %2449 = vmatpush1.bf16.msra.mxu0 %v2320
    %2450 = vmatprep.mubr.bf16.mxu0 %v2019
    %2451 = vmatmul.mubr.bf16.gmra.mrb[0].mxu0 %v2018
    %v2452 = vpop.f32.mrb[0].mxu0
    %v2453 = vadd.f32 %v2091, %v2452
    %v2454 = vpop.f32.mrb[0].mxu0
    %v2455 = vadd.f32 %v2095, %v2454
    %v2456 = vpop.f32.mrb[0].mxu0
    %v2457 = vadd.f32 %v2091, %v2456
    %v2458 = vpop.f32.mrb[0].mxu0
    %v2459 = vadd.f32 %v2095, %v2458
    %2460 = vdwg.mxu0
    %2461 = vmatprep.subr.bf16.mxu0 %v2323
    %2462 = vmatpush1.bf16.msra.mxu0 %v2322
    %2463 = vmatprep.subr.bf16.mxu0 %v2325
    %2464 = vmatpush1.bf16.msra.mxu0 %v2324
    %2465 = vmatprep.subr.bf16.mxu0 %v2327
    %2466 = vmatpush1.bf16.msra.mxu0 %v2326
    %2467 = vmatprep.subr.bf16.mxu0 %v2329
    %2468 = vmatpush1.bf16.msra.mxu0 %v2328
    %2469 = vmatprep.subr.bf16.mxu0 %v2331
    %2470 = vmatpush1.bf16.msra.mxu0 %v2330
    %2471 = vmatprep.subr.bf16.mxu0 %v2333
    %2472 = vmatpush1.bf16.msra.mxu0 %v2332
    %2473 = vmatprep.subr.bf16.mxu0 %v2335
    %2474 = vmatpush1.bf16.msra.mxu0 %v2334
    %2475 = vmatprep.subr.bf16.mxu0 %v2337
    %2476 = vmatpush1.bf16.msra.mxu0 %v2336
    %2477 = vmatprep.subr.bf16.mxu0 %v2339
    %2478 = vmatpush1.bf16.msra.mxu0 %v2338
    %2479 = vmatprep.subr.bf16.mxu0 %v2341
    %2480 = vmatpush1.bf16.msra.mxu0 %v2340
    %2481 = vmatprep.subr.bf16.mxu0 %v2343
    %2482 = vmatpush1.bf16.msra.mxu0 %v2342
    %2483 = vmatprep.subr.bf16.mxu0 %v2345
    %2484 = vmatpush1.bf16.msra.mxu0 %v2344
    %2485 = vmatprep.subr.bf16.mxu0 %v2347
    %2486 = vmatpush1.bf16.msra.mxu0 %v2346
    %2487 = vmatprep.subr.bf16.mxu0 %v2349
    %2488 = vmatpush1.bf16.msra.mxu0 %v2348
    %2489 = vmatprep.subr.bf16.mxu0 %v2351
    %2490 = vmatpush1.bf16.msra.mxu0 %v2350
    %2491 = vmatprep.subr.bf16.mxu0 %v2353
    %2492 = vmatpush1.bf16.msra.mxu0 %v2352
    %2493 = vmatprep.mubr.bf16.mxu0 %v2021
    %2494 = vmatmul.mubr.bf16.gmra.mrb[0].mxu0 %v2020
    %v2495 = vpop.f32.mrb[0].mxu0
    %v2496 = vadd.f32 %v2453, %v2495
    %v2497 = vpop.f32.mrb[0].mxu0
    %v2498 = vadd.f32 %v2455, %v2497
    %v2499 = vpop.f32.mrb[0].mxu0
    %v2500 = vadd.f32 %v2457, %v2499
    %v2501 = vpop.f32.mrb[0].mxu0
    %v2502 = vadd.f32 %v2459, %v2501
    %2503 = vdwg.mxu0
    %vm2504 = vcmp.gt.f32.partialorder %v2496, 0.0
    %vm2505 = vcmp.gt.f32.partialorder %v2498, 0.0
    %vm2506 = vcmp.gt.f32.partialorder %v2500, 0.0
    %vm2507 = vcmp.gt.f32.partialorder %v2502, 0.0
    %v2508 = vmul.f32 %v2496, 0.1
    %v2509 = vmul.f32 %v2498, 0.1
    %v2510 = vmul.f32 %v2500, 0.1
    %v2511 = vmul.f32 %v2502, 0.1
    %v2512 = vsel %vm2504, %v2496, %v2508
    %v2513 = vsel %vm2505, %v2498, %v2509
    %v2514 = vsel %vm2506, %v2500, %v2510
    %v2515 = vsel %vm2507, %v2502, %v2511
    %v2516 = vld [vmem:[%s5] sm:$0x3]
    %v2518 = vlaneseq
    %v2519 = vshrl.u32 %v2518, 7
    %v2520 = vsub.s32 0, %v2519
    %v2521 = vrot.slane %v2516, %v2520
    %v2522 = vlaneseq
    %v2523 = vshrl.u32 %v2522, 7
    %v2524 = vsub.s32 1, %v2523
    %v2525 = vrot.slane %v2516, %v2524
    %v2528 = vmul.f32 %v2512, %v2521
    %v2529 = vmul.f32 %v2513, %v2525
    %v2530 = vmul.f32 %v2514, %v2521
    %v2531 = vmul.f32 %v2515, %v2525
    %v2532 = vadd.f32 %v2528, %v2529
    %2533 = vadd.xlane.f32.xlu0 %v2532
    %v2534 = vpop.xlane.xlu0 %2533
    %v2535 = vadd.f32 %v2530, %v2531
    %2536 = vadd.xlane.f32.xlu0 %v2535
    %v2537 = vpop.xlane.xlu0 %2536
    %s2538 = sld [smem:[#allocation2]]
    %v2539 = vstv %s2538
    %v2540 = vadd.f32 %v2534, %v2539
    %v2541 = vadd.f32 %v2537, %v2539
    %v2542 = vand.u32 2147483647, %v2540
    %v2543 = vand.u32 2147483647, %v2541
    %v2544 = vsub.f32 0.0, %v2542
    %v2545 = vsub.f32 0.0, %v2543
    %v2546 = vmul.f32 %v2544, 1.442695
    %v2547 = vpow.pop %v2546
    %v2548 = vmul.f32 %v2545, 1.442695
    %v2549 = vpow.pop %v2548
    %vm2550 = vcmp.ge.f32.partialorder %v2540, 0.0
    %vm2551 = vcmp.ge.f32.partialorder %v2541, 0.0
    %v2552 = vsel %vm2550, 1.0, %v2547
    %v2553 = vsel %vm2551, 1.0, %v2549
    %v2554 = vadd.f32 %v2547, 1.0
    %v2555 = vadd.f32 %v2549, 1.0
    %v2556 = vrcp.pop %v2554
    %v2557 = vmul.f32 %v2552, %v2556
    %v2558 = vrcp.pop %v2555
    %v2559 = vmul.f32 %v2553, %v2558
    %v2560 = vmin.f32 %v2557, 1.0
    %v2561 = vmin.f32 %v2559, 1.0
    %vm2562 = vcmask 7168
    %2563 = vst.msk [vmem:[%s7] sm:$0xff] %vm2562, %v2560
    %2564 = vst.msk [vmem:[%s7 + $0x8] sm:$0xff] %vm2562, %v2561
    // Predicated region
    $region42: #{tpu_custom_call.1} parent=1 // pred_check
      _
    $region43: #{tpu_custom_call.1} parent=1 // pred_check_branch
      %2566 = sbr.rel (0) target = $region45
    $region44: #{tpu_custom_call.1} parent=1 // pred_region
      _
    $region45: #{tpu_custom_call.1} parent=1 // pred_fallthru
      _
    // Predicated region
    $region46: #{tpu_custom_call.1} parent=1 // pred_check
      _
    $region47: #{tpu_custom_call.1} parent=1 // pred_check_branch
      %2568 = sbr.rel (0) target = $region49
    $region48: #{tpu_custom_call.1} parent=1 // pred_region
      _
    $region49: #{tpu_custom_call.1} parent=1 // pred_fallthru
      _
    %2569 = vsyncpa [#allocation4], 1
    %2570 = vsyncpa [#allocation6], 1

</llo_original>
